<compile_context>
chip_gen: v7x
topology: tpu7x:2x2x1
jax: 0.10.0
libtpu: 0.0.40
codegen_flags: <defaults>
</compile_context>

<pallas_src>
import functools
import math

import jax
import jax.numpy as jnp
from jax.experimental import pallas as pl
from jax.experimental.pallas import tpu as pltpu


def _gaussian_weights_1d(kernel_size: int, sigma: float):
    """1-D Gaussian taps, normalized (same math as the PyTorch module)."""
    mean = float(kernel_size // 2)
    vals = [math.exp(-((i - mean) ** 2) / (2.0 * float(sigma) ** 2))
            for i in range(kernel_size)]
    s = sum(vals)
    return tuple(v / s for v in vals)


def _banded_matrix(n: int, w1d, pad: int, sign: int):
    """Banded matrix B with B[row, col] = w1d[sign*(col - row) + pad] (0 if the
    tap falls outside [0, K)).  Encodes the conv's zero padding at the edges."""
    K = len(w1d)
    wv = jnp.asarray(w1d, dtype=jnp.float32)
    idx = jnp.arange(n)
    d = sign * (idx[None, :] - idx[:, None]) + pad
    valid = (d >= 0) & (d < K)
    return jnp.where(valid, wv[jnp.clip(d, 0, K - 1)], 0.0).astype(jnp.float32)


def _blur_kernel(v_ref, c_ref, x_ref, o_ref, *, PB):
    """Blur PB planes:  y[b] = V @ (x[b] @ C)   (horizontal taps, then vertical).

    v_ref: (H, H) f32 banded vertical-tap matrix
    c_ref: (W, W) f32 banded horizontal-tap matrix
    x_ref: (PB, H, W) input planes
    o_ref: (PB, H, W) output planes
    """
    V = v_ref[...]
    C = c_ref[...]
    for b in range(PB):                      # PB is small & static (unrolled)
        xb = x_ref[b].astype(jnp.float32)    # (H, W)
        t = jnp.dot(xb, C,
                    preferred_element_type=jnp.float32,
                    precision=jax.lax.Precision.HIGHEST)   # horizontal pass
        y = jnp.dot(V, t,
                    preferred_element_type=jnp.float32,
                    precision=jax.lax.Precision.HIGHEST)   # vertical pass
        o_ref[b] = y.astype(o_ref.dtype)


def _choose_plane_block(P, H, W, itemsize, max_unroll=8,
                        vmem_budget=12 * 2 ** 20):
    """Planes per grid step: the largest divisor of P that
       (a) keeps double-buffered in+out blocks (plus the V/C matrices) within a
           conservative VMEM budget valid on v5e/v6e/v7x,
       (b) keeps the unrolled per-plane loop short,
       (c) leaves >= 2 grid steps whenever P >= 2 (v7x megacore / pipelining)."""
    mats = 2 * 4 * (H * H + W * W)            # double-buffered V and C (f32)
    per_plane = 4 * H * W * itemsize          # 2x in block + 2x out block
    avail = max(vmem_budget - mats, per_plane)
    cap = max(1, min(avail // per_plane, max_unroll))
    if P >= 2:
        cap = min(cap, max(1, P // 2))        # guarantee >= 2 grid steps
    cap = min(cap, P)
    pb = 1
    for d in range(1, int(cap) + 1):
        if P % d == 0:
            pb = d
    return pb


def lgaussian_blur(x, kernel_size: int, sigma: float):
    """x: (N, C, H, W).  Identical semantics to
    F.conv2d(x, gaussian_2d, padding=K//2, groups=C)."""
    N, Cch, H, W = x.shape
    K = kernel_size
    p = K // 2
    P = N * Cch

    w1d = _gaussian_weights_1d(K, sigma)
    Vmat = _banded_matrix(H, w1d, p, sign=+1)   # V[i, r] = w[r - i + p]
    Cmat = _banded_matrix(W, w1d, p, sign=-1)   # C[c, j] = w[c - j + p]

    PB = _choose_plane_block(P, H, W, jnp.dtype(x.dtype).itemsize)
    xr = x.reshape(P, H, W)                     # free view, no HBM copy

    out = pl.pallas_call(
        functools.partial(_blur_kernel, PB=PB),
        out_shape=jax.ShapeDtypeStruct((P, H, W), x.dtype),
        grid=(P // PB,),
        in_specs=[
            pl.BlockSpec((H, H), lambda i: (0, 0)),        # V (resident)
            pl.BlockSpec((W, W), lambda i: (0, 0)),        # C (resident)
            pl.BlockSpec((PB, H, W), lambda i: (i, 0, 0)),
        ],
        out_specs=pl.BlockSpec((PB, H, W), lambda i: (i, 0, 0)),
        compiler_params=pltpu.CompilerParams(
            dimension_semantics=("parallel",),
            vmem_limit_bytes=48 * 2 ** 20),
    )(Vmat, Cmat, xr)

    return out.reshape(N, Cch, H, W)


def _reference(x, kernel_size: int, sigma: float):
    """Pure-JAX reference: depthwise conv identical to F.conv2d(groups=C)."""
    N, C, H, W = x.shape
    w1 = jnp.asarray(_gaussian_weights_1d(kernel_size, sigma), dtype=jnp.float32)
    k2d = jnp.outer(w1, w1).astype(x.dtype)
    kern = jnp.broadcast_to(k2d, (C, 1, kernel_size, kernel_size))
    return jax.lax.conv_general_dilated(
        x, kern,
        window_strides=(1, 1),
        padding=[(kernel_size // 2, kernel_size // 2)] * 2,
        dimension_numbers=("NCHW", "OIHW", "NCHW"),
        feature_group_count=C,
    )


if __name__ == "__main__":
    # Deterministic setup consistent with LGaussianBlur(channels=4, kernel_size=5, sigma=1.5)
    channels = 4
    kernel_size = 5
    sigma = 1.5

    key = jax.random.PRNGKey(0)
    x = jax.random.normal(key, (2, channels, 16, 16), dtype=jnp.float32)

    y = jax.block_until_ready(lgaussian_blur(x, kernel_size, sigma))

    y_ref = _reference(x, kernel_size, sigma)
    assert y.shape == x.shape
    assert jnp.allclose(y, y_ref, atol=1e-4, rtol=1e-4), "mismatch vs reference conv"

    print("KERNEL_OK")
</pallas_src>

<mosaic_0001>
module attributes {stable_mosaic.version = 11 : i64} {
  func.func @_blur_kernel(%arg0: i32, %arg1: memref<16x16xf32, #tpu.memory_space<vmem>>, %arg2: memref<16x16xf32, #tpu.memory_space<vmem>>, %arg3: memref<4x16x16xf32, #tpu.memory_space<vmem>>, %arg4: memref<4x16x16xf32, #tpu.memory_space<vmem>>) attributes {dimension_semantics = [#tpu.dimension_semantics<parallel>], iteration_bounds = array<i64: 2>, scalar_prefetch = 0 : i64, scratch_operands = 0 : i64, tpu.core_type = #tpu.core_type<tc>, window_params = [{pipeline_mode = #tpu.pipeline_mode<synchronous>, transform_indices = @transform_0, window_bounds = array<i64: 16, 16>}, {pipeline_mode = #tpu.pipeline_mode<synchronous>, transform_indices = @transform_1, window_bounds = array<i64: 16, 16>}, {transform_indices = @transform_2, window_bounds = array<i64: 4, 16, 16>}, {transform_indices = @transform_3, window_bounds = array<i64: 4, 16, 16>}]} {
    %c0 = arith.constant 0 : index
    %c0_0 = arith.constant 0 : index
    %0 = vector.load %arg1[%c0, %c0_0] : memref<16x16xf32, #tpu.memory_space<vmem>>, vector<16x16xf32>
    %c0_1 = arith.constant 0 : index
    %c0_2 = arith.constant 0 : index
    %1 = vector.load %arg2[%c0_1, %c0_2] : memref<16x16xf32, #tpu.memory_space<vmem>>, vector<16x16xf32>
    %c0_3 = arith.constant 0 : index
    %c0_4 = arith.constant 0 : index
    %c0_5 = arith.constant 0 : index
    %2 = vector.load %arg3[%c0_3, %c0_4, %c0_5] : memref<4x16x16xf32, #tpu.memory_space<vmem>>, vector<1x16x16xf32>
    %3 = vector.shape_cast %2 : vector<1x16x16xf32> to vector<16x16xf32>
    %cst = arith.constant dense<0.000000e+00> : vector<16x16xf32>
    %4 = tpu.matmul %3, %1, %cst {dimension_numbers = #tpu.dot_dimension_numbers<[1], [0], [0], [1], [0, 0, 1, 1], [], []>, precision = #tpu.contract_precision<fp32>} : vector<16x16xf32>, vector<16x16xf32>, vector<16x16xf32> -> vector<16x16xf32>
    %cst_6 = arith.constant dense<0.000000e+00> : vector<16x16xf32>
    %5 = tpu.matmul %0, %4, %cst_6 {dimension_numbers = #tpu.dot_dimension_numbers<[1], [0], [0], [1], [0, 0, 1, 1], [], []>, precision = #tpu.contract_precision<fp32>} : vector<16x16xf32>, vector<16x16xf32>, vector<16x16xf32> -> vector<16x16xf32>
    %c0_7 = arith.constant 0 : index
    %c0_8 = arith.constant 0 : index
    %c0_9 = arith.constant 0 : index
    %6 = vector.load %arg4[%c0_7, %c0_8, %c0_9] : memref<4x16x16xf32, #tpu.memory_space<vmem>>, vector<1x16x16xf32>
    %7 = vector.shape_cast %6 : vector<1x16x16xf32> to vector<16x16xf32>
    %8 = vector.shape_cast %5 : vector<16x16xf32> to vector<1x16x16xf32>
    tpu.vector_store %arg4[%c0_7, %c0_8, %c0_9], %8 {strides = array<i32>} : memref<4x16x16xf32, #tpu.memory_space<vmem>>, vector<1x16x16xf32>,
    %c1 = arith.constant 1 : index
    %c0_10 = arith.constant 0 : index
    %c0_11 = arith.constant 0 : index
    %9 = vector.load %arg3[%c1, %c0_10, %c0_11] : memref<4x16x16xf32, #tpu.memory_space<vmem>>, vector<1x16x16xf32>
    %10 = vector.shape_cast %9 : vector<1x16x16xf32> to vector<16x16xf32>
    %cst_12 = arith.constant dense<0.000000e+00> : vector<16x16xf32>
    %11 = tpu.matmul %10, %1, %cst_12 {dimension_numbers = #tpu.dot_dimension_numbers<[1], [0], [0], [1], [0, 0, 1, 1], [], []>, precision = #tpu.contract_precision<fp32>} : vector<16x16xf32>, vector<16x16xf32>, vector<16x16xf32> -> vector<16x16xf32>
    %cst_13 = arith.constant dense<0.000000e+00> : vector<16x16xf32>
    %12 = tpu.matmul %0, %11, %cst_13 {dimension_numbers = #tpu.dot_dimension_numbers<[1], [0], [0], [1], [0, 0, 1, 1], [], []>, precision = #tpu.contract_precision<fp32>} : vector<16x16xf32>, vector<16x16xf32>, vector<16x16xf32> -> vector<16x16xf32>
    %c1_14 = arith.constant 1 : index
    %c0_15 = arith.constant 0 : index
    %c0_16 = arith.constant 0 : index
    %13 = vector.load %arg4[%c1_14, %c0_15, %c0_16] : memref<4x16x16xf32, #tpu.memory_space<vmem>>, vector<1x16x16xf32>
    %14 = vector.shape_cast %13 : vector<1x16x16xf32> to vector<16x16xf32>
    %15 = vector.shape_cast %12 : vector<16x16xf32> to vector<1x16x16xf32>
    tpu.vector_store %arg4[%c1_14, %c0_15, %c0_16], %15 {strides = array<i32>} : memref<4x16x16xf32, #tpu.memory_space<vmem>>, vector<1x16x16xf32>,
    %c2 = arith.constant 2 : index
    %c0_17 = arith.constant 0 : index
    %c0_18 = arith.constant 0 : index
    %16 = vector.load %arg3[%c2, %c0_17, %c0_18] : memref<4x16x16xf32, #tpu.memory_space<vmem>>, vector<1x16x16xf32>
    %17 = vector.shape_cast %16 : vector<1x16x16xf32> to vector<16x16xf32>
    %cst_19 = arith.constant dense<0.000000e+00> : vector<16x16xf32>
    %18 = tpu.matmul %17, %1, %cst_19 {dimension_numbers = #tpu.dot_dimension_numbers<[1], [0], [0], [1], [0, 0, 1, 1], [], []>, precision = #tpu.contract_precision<fp32>} : vector<16x16xf32>, vector<16x16xf32>, vector<16x16xf32> -> vector<16x16xf32>
    %cst_20 = arith.constant dense<0.000000e+00> : vector<16x16xf32>
    %19 = tpu.matmul %0, %18, %cst_20 {dimension_numbers = #tpu.dot_dimension_numbers<[1], [0], [0], [1], [0, 0, 1, 1], [], []>, precision = #tpu.contract_precision<fp32>} : vector<16x16xf32>, vector<16x16xf32>, vector<16x16xf32> -> vector<16x16xf32>
    %c2_21 = arith.constant 2 : index
    %c0_22 = arith.constant 0 : index
    %c0_23 = arith.constant 0 : index
    %20 = vector.load %arg4[%c2_21, %c0_22, %c0_23] : memref<4x16x16xf32, #tpu.memory_space<vmem>>, vector<1x16x16xf32>
    %21 = vector.shape_cast %20 : vector<1x16x16xf32> to vector<16x16xf32>
    %22 = vector.shape_cast %19 : vector<16x16xf32> to vector<1x16x16xf32>
    tpu.vector_store %arg4[%c2_21, %c0_22, %c0_23], %22 {strides = array<i32>} : memref<4x16x16xf32, #tpu.memory_space<vmem>>, vector<1x16x16xf32>,
    %c3 = arith.constant 3 : index
    %c0_24 = arith.constant 0 : index
    %c0_25 = arith.constant 0 : index
    %23 = vector.load %arg3[%c3, %c0_24, %c0_25] : memref<4x16x16xf32, #tpu.memory_space<vmem>>, vector<1x16x16xf32>
    %24 = vector.shape_cast %23 : vector<1x16x16xf32> to vector<16x16xf32>
    %cst_26 = arith.constant dense<0.000000e+00> : vector<16x16xf32>
    %25 = tpu.matmul %24, %1, %cst_26 {dimension_numbers = #tpu.dot_dimension_numbers<[1], [0], [0], [1], [0, 0, 1, 1], [], []>, precision = #tpu.contract_precision<fp32>} : vector<16x16xf32>, vector<16x16xf32>, vector<16x16xf32> -> vector<16x16xf32>
    %cst_27 = arith.constant dense<0.000000e+00> : vector<16x16xf32>
    %26 = tpu.matmul %0, %25, %cst_27 {dimension_numbers = #tpu.dot_dimension_numbers<[1], [0], [0], [1], [0, 0, 1, 1], [], []>, precision = #tpu.contract_precision<fp32>} : vector<16x16xf32>, vector<16x16xf32>, vector<16x16xf32> -> vector<16x16xf32>
    %c3_28 = arith.constant 3 : index
    %c0_29 = arith.constant 0 : index
    %c0_30 = arith.constant 0 : index
    %27 = vector.load %arg4[%c3_28, %c0_29, %c0_30] : memref<4x16x16xf32, #tpu.memory_space<vmem>>, vector<1x16x16xf32>
    %28 = vector.shape_cast %27 : vector<1x16x16xf32> to vector<16x16xf32>
    %29 = vector.shape_cast %26 : vector<16x16xf32> to vector<1x16x16xf32>
    tpu.vector_store %arg4[%c3_28, %c0_29, %c0_30], %29 {strides = array<i32>} : memref<4x16x16xf32, #tpu.memory_space<vmem>>, vector<1x16x16xf32>,
    return
  }
  func.func @transform_0(%arg0: i32) -> (i32, i32) {
    %c0_i32 = arith.constant 0 : i32
    %c0_i32_0 = arith.constant 0 : i32
    %c0_i32_1 = arith.constant 0 : i32
    return %c0_i32, %c0_i32_0 : i32, i32
  }
  func.func @transform_1(%arg0: i32) -> (i32, i32) {
    %c0_i32 = arith.constant 0 : i32
    %c0_i32_0 = arith.constant 0 : i32
    %c0_i32_1 = arith.constant 0 : i32
    return %c0_i32, %c0_i32_0 : i32, i32
  }
  func.func @transform_2(%arg0: i32) -> (i32, i32, i32) {
    %c0_i32 = arith.constant 0 : i32
    %c0_i32_0 = arith.constant 0 : i32
    %c0_i32_1 = arith.constant 0 : i32
    return %arg0, %c0_i32, %c0_i32_0 : i32, i32, i32
  }
  func.func @transform_3(%arg0: i32) -> (i32, i32, i32) {
    %c0_i32 = arith.constant 0 : i32
    %c0_i32_0 = arith.constant 0 : i32
    %c0_i32_1 = arith.constant 0 : i32
    return %arg0, %c0_i32, %c0_i32_0 : i32, i32, i32
  }
}

</mosaic_0001>

<llo_original>
// kernel: tpu_custom_call.1
$region0: #{tpu_custom_call.1}
  #allocation0 [shape = 'u32[]', space=smem, size = 0x4, offset = 0x4, fixed_abs, tag = 'smem constant byte address 0x4 - core index']
  #allocation1 [shape = 'u32[144,128]{1,0:T(1,128)}', space=vmem, size = 0x12000, scoped, tag = 'internal scratch']
  %s0 = inlined_call_operand.hbm [shape: f32[16,16], index: 0, kind: input, shape index: {}]
  %s1 = inlined_call_operand.hbm [shape: f32[16,16], index: 1, kind: input, shape index: {}]
  %s2 = inlined_call_operand.hbm [shape: f32[8,16,16], index: 2, kind: input, shape index: {}]
  %s3 = inlined_call_operand.hbm [shape: f32[8,16,16], index: 3, kind: output, shape index: {}]
  %s4 = sld [smem:[#allocation0]]
  $region57: #{tpu_custom_call.1} parent=0
    _
  %s6 = ssub.s32 1, %s4
  %s7 = scalar_select 0, %s6, %s4
  $region1: #{tpu_custom_call.1} parent=0
    #allocation2 [shape = 'u8[8192]{0}', space=vmem, size = 0x2000, scoped, tag = 'input window, operand 0, single buffered']
    #allocation3 [shape = 's32[2]{0}', space=sflag, size = 0x8, scoped, tag = 'scoped memory for tpu_custom_call.1']
    #allocation4 [shape = 's32[2]{0}', space=sflag, size = 0x8, scoped, tag = 'scoped memory for tpu_custom_call.1']
    #allocation5 [shape = 'u8[8192]{0}', space=vmem, size = 0x2000, scoped, tag = 'input window, operand 1, single buffered']
    #allocation6 [shape = 's32[1]{0}', space=sflag, size = 0x4, scoped, tag = 'scoped memory for tpu_custom_call.1']
    #allocation7 [shape = 'u8[65536]{0}', space=vmem, size = 0x10000, scoped, tag = 'input window, operand 2']
    #allocation8 [shape = 'u8[65536]{0}', space=vmem, size = 0x10000, scoped, tag = 'output window, operand 0']
    %8 = vsyncpa [#allocation3], 0
    %9 = vsyncpa [#allocation6], 0
    %10 = vsyncpa [#allocation4], 0
    %s11 = scalar_lea.sflag [#allocation4], 1
    %12 = vsyncpa %s11, 0
    loop: start=0, step=1, limit=4
    $region2: #{tpu_custom_call.1} parent=1 // loop_pre_header
      _
    $region3: #{tpu_custom_call.1} parent=1 // loop_header
      %s14 = sphi 0, %s18
      %p15 = scmp.ge.s32.totalorder %s14, 4
      %s22 = sphi 0, %s22
      %s24 = sphi 0, %s22
      %s25 = sphi 0, %s24
      %s39 = sphi 0, %s25
      %s43 = sphi 0, %s43
      %s45 = sphi 0, %s43
      %s46 = sphi 0, %s45
      %s60 = sphi 0, %s46
      %s66 = sphi 0, %s68
      %s69 = sphi 0, %s66
      %s70 = sphi 0, %s69
      %s86 = sphi 0, %s70
      %s92 = sphi 0, %s94
      %s95 = sphi 0, %s92
      %s96 = sphi 0, %s95
      %s112 = sphi 0, %s96
    $region4: #{tpu_custom_call.1} parent=1 // loop_header_branch
      %17 = sbr.rel (%p15) target = $region8
    $region5: #{tpu_custom_call.1} parent=1 // loop_body
      %s19 = ssub.s32 %s14, 1
      %s20 = ssub.s32 %s14, 2
      %s21 = sadd.s32 %s14, 1
      %s23 = sadd.s32 %s22, 1
      %p26 = scmp.eq.s32.totalorder %s14, 1
      %p27 = scmp.ne.s32.totalorder %s22, %s24
      %p28 = scmp.eq.s32.totalorder %s14, 0
      %p29 = por %p27, %p28
      %p30 = scmp.ne.s32.totalorder %s22, %s24
      %p31 = scmp.eq.s32.totalorder %s19, 1
      %p32 = por %p30, %p31
      %p33 = scmp.ne.s32.totalorder %s24, %s25
      %p34 = scmp.eq.s32.totalorder %s19, 0
      %p35 = por %p33, %p34
      %p36 = scmp.ne.s32.totalorder %s24, %s25
      %p37 = scmp.eq.s32.totalorder %s20, 1
      %p38 = por %p36, %p37
      %p40 = scmp.ne.s32.totalorder %s25, %s39
      %p41 = scmp.eq.s32.totalorder %s20, 0
      %p42 = por %p40, %p41
      %s44 = sadd.s32 %s43, 1
      %p47 = scmp.eq.s32.totalorder %s14, 1
      %p48 = scmp.ne.s32.totalorder %s43, %s45
      %p49 = scmp.eq.s32.totalorder %s14, 0
      %p50 = por %p48, %p49
      %p51 = scmp.ne.s32.totalorder %s43, %s45
      %p52 = scmp.eq.s32.totalorder %s19, 1
      %p53 = por %p51, %p52
      %p54 = scmp.ne.s32.totalorder %s45, %s46
      %p55 = scmp.eq.s32.totalorder %s19, 0
      %p56 = por %p54, %p55
      %p57 = scmp.ne.s32.totalorder %s45, %s46
      %p58 = scmp.eq.s32.totalorder %s20, 1
      %p59 = por %p57, %p58
      %p61 = scmp.ne.s32.totalorder %s46, %s60
      %p62 = scmp.eq.s32.totalorder %s20, 0
      %p63 = por %p61, %p62
      %s64 = ssub.s32 %s14, %s21
      %p65 = scmp.eq.s32.totalorder %s64, 0
      %s67 = sadd.s32 %s66, 1
      %s68 = scalar_select %p65, %s66, %s67
      %p71 = pneg %p65
      %p72 = scmp.eq.s32.totalorder %s14, 1
      %p73 = por %p71, %p72
      %p74 = scmp.ne.s32.totalorder %s66, %s69
      %p75 = scmp.eq.s32.totalorder %s14, 0
      %p76 = por %p74, %p75
      %p77 = scmp.ne.s32.totalorder %s66, %s69
      %p78 = scmp.eq.s32.totalorder %s19, 1
      %p79 = por %p77, %p78
      %p80 = scmp.ne.s32.totalorder %s69, %s70
      %p81 = scmp.eq.s32.totalorder %s19, 0
      %p82 = por %p80, %p81
      %p83 = scmp.ne.s32.totalorder %s69, %s70
      %p84 = scmp.eq.s32.totalorder %s20, 1
      %p85 = por %p83, %p84
      %p87 = scmp.ne.s32.totalorder %s70, %s86
      %p88 = scmp.eq.s32.totalorder %s20, 0
      %p89 = por %p87, %p88
      %s90 = ssub.s32 %s14, %s21
      %p91 = scmp.eq.s32.totalorder %s90, 0
      %s93 = sadd.s32 %s92, 1
      %s94 = scalar_select %p91, %s92, %s93
      %p97 = pneg %p91
      %p98 = scmp.eq.s32.totalorder %s14, 1
      %p99 = por %p97, %p98
      %p100 = scmp.ne.s32.totalorder %s92, %s95
      %p101 = scmp.eq.s32.totalorder %s14, 0
      %p102 = por %p100, %p101
      %p103 = scmp.ne.s32.totalorder %s92, %s95
      %p104 = scmp.eq.s32.totalorder %s19, 1
      %p105 = por %p103, %p104
      %p106 = scmp.ne.s32.totalorder %s95, %s96
      %p107 = scmp.eq.s32.totalorder %s19, 0
      %p108 = por %p106, %p107
      %p109 = scmp.ne.s32.totalorder %s95, %s96
      %p110 = scmp.eq.s32.totalorder %s20, 1
      %p111 = por %p109, %p110
      %p113 = scmp.ne.s32.totalorder %s96, %s112
      %p114 = scmp.eq.s32.totalorder %s20, 0
      %p115 = por %p113, %p114
      %p116 = scmp.le.s32.totalorder 1, %s14
      %p117 = scmp.lt.s32.totalorder %s14, 3
      %p118 = pnand %p116, %p117
      %p119 = pneg %p118
      // Predicated region
      $region9: #{tpu_custom_call.1} parent=5 // pred_check
        _
      $region10: #{tpu_custom_call.1} parent=5 // pred_check_branch
        %121 = sbr.rel (%p118) target = $region12
      $region11: #{tpu_custom_call.1} parent=5 // pred_region
        %s122 = ssub.s32 %s14, 1
        // Predicated region
        $region13: #{tpu_custom_call.1} parent=11 // pred_check
          %p123 = pneg %p35
        $region14: #{tpu_custom_call.1} parent=11 // pred_check_branch
          %125 = sbr.rel (%p123) target = $region16
        $region15: #{tpu_custom_call.1} parent=11 // pred_region
          %s127 = ssub.s32 256, 256
          %128 = vsyncadd [#allocation3], %s127
          %s129 = sshll.u32 [#allocation2], 4
          %s130 = int_to_ptr.vmem [resolvable:$true] %s129
          %135 = dma.hbm_to_vmem [thread:$0]  %s0, 256, %s130, [#allocation3], 128, 128, 8
        $region16: #{tpu_custom_call.1} parent=11 // pred_fallthru
          _
        // Predicated region
        $region17: #{tpu_custom_call.1} parent=11 // pred_check
          %p136 = pneg %p56
        $region18: #{tpu_custom_call.1} parent=11 // pred_check_branch
          %138 = sbr.rel (%p136) target = $region20
        $region19: #{tpu_custom_call.1} parent=11 // pred_region
          %s140 = ssub.s32 256, 256
          %141 = vsyncadd [#allocation6], %s140
          %s142 = sshll.u32 [#allocation5], 4
          %s143 = int_to_ptr.vmem [resolvable:$true] %s142
          %148 = dma.hbm_to_vmem [thread:$0]  %s1, 256, %s143, [#allocation6], 128, 128, 8
        $region20: #{tpu_custom_call.1} parent=11 // pred_fallthru
          _
      $region12: #{tpu_custom_call.1} parent=5 // pred_fallthru
        _
      %p149 = scmp.lt.s32.totalorder %s14, 2
      // Predicated region
      $region21: #{tpu_custom_call.1} parent=5 // pred_check
        %p150 = pneg %p149
      $region22: #{tpu_custom_call.1} parent=5 // pred_check_branch
        %152 = sbr.rel (%p150) target = $region24
      $region23: #{tpu_custom_call.1} parent=5 // pred_region
        // Predicated region
        $region25: #{tpu_custom_call.1} parent=23 // pred_check
          %p153 = pneg %p76
        $region26: #{tpu_custom_call.1} parent=23 // pred_check_branch
          %155 = sbr.rel (%p153) target = $region28
        $region27: #{tpu_custom_call.1} parent=23 // pred_region
          %s156 = sand.u32 %s14, 1
          %s157 = scalar_lea.sflag [#allocation3], %s156
          %s158 = sand.u32 %s66, 1
          %s159 = smul.addr %s158, 64
          %s160 = scalar_lea.vmem [#allocation7], %s159
          %s161 = smul.u32 4, %s14
          %s163 = ssub.s32 1024, 1024
          %164 = vsyncadd %s157, %s163
          %s165 = smul.addr %s161, 2
          %s166 = smul.addr %s165, 128
          %s167 = scalar_lea.hbm %s2, %s166
          %s168 = sshll.u32 %s160, 4
          %s169 = int_to_ptr.vmem [resolvable:$true] %s168
          %174 = dma.hbm_to_vmem [thread:$0]  %s167, 1024, %s169, %s157, 128, 128, 8
        $region28: #{tpu_custom_call.1} parent=23 // pred_fallthru
          _
      $region24: #{tpu_custom_call.1} parent=5 // pred_fallthru
        _
      %p175 = scmp.le.s32.totalorder 1, %s14
      %p176 = scmp.lt.s32.totalorder %s14, 3
      %p177 = pnand %p175, %p176
      %p178 = pneg %p177
      // Predicated region
      $region29: #{tpu_custom_call.1} parent=5 // pred_check
        _
      $region30: #{tpu_custom_call.1} parent=5 // pred_check_branch
        %180 = sbr.rel (%p177) target = $region32
      $region31: #{tpu_custom_call.1} parent=5 // pred_region
        %s181 = ssub.s32 %s14, 1
        // Predicated region
        $region33: #{tpu_custom_call.1} parent=31 // pred_check
          %p182 = pneg %p35
        $region34: #{tpu_custom_call.1} parent=31 // pred_check_branch
          %184 = sbr.rel (%p182) target = $region36
        $region35: #{tpu_custom_call.1} parent=31 // pred_region
          %185 = dma.done [#allocation3], 256
        $region36: #{tpu_custom_call.1} parent=31 // pred_fallthru
          _
        // Predicated region
        $region37: #{tpu_custom_call.1} parent=31 // pred_check
          %p186 = pneg %p56
        $region38: #{tpu_custom_call.1} parent=31 // pred_check_branch
          %188 = sbr.rel (%p186) target = $region40
        $region39: #{tpu_custom_call.1} parent=31 // pred_region
          %189 = dma.done [#allocation6], 256
        $region40: #{tpu_custom_call.1} parent=31 // pred_fallthru
          _
        %s190 = sand.u32 %s19, 1
        %s191 = scalar_lea.sflag [#allocation3], %s190
        %s192 = sand.u32 %s69, 1
        %s193 = smul.addr %s192, 64
        %s194 = scalar_lea.vmem [#allocation7], %s193
        // Predicated region
        $region41: #{tpu_custom_call.1} parent=31 // pred_check
          %p195 = pneg %p82
        $region42: #{tpu_custom_call.1} parent=31 // pred_check_branch
          %197 = sbr.rel (%p195) target = $region44
        $region43: #{tpu_custom_call.1} parent=31 // pred_region
          %198 = dma.done %s191, 1024
        $region44: #{tpu_custom_call.1} parent=31 // pred_fallthru
          _
        %p199 = pneg %p35
        %p200 = pneg %p32
        %p201 = pneg %p56
        %p202 = pneg %p53
        %s203 = sand.u32 %s19, 1
        %s204 = scalar_lea.sflag [#allocation3], %s203
        %s205 = sand.u32 %s69, 1
        %s206 = smul.addr %s205, 64
        %s207 = scalar_lea.vmem [#allocation7], %s206
        %p208 = pneg %p82
        %p209 = pneg %p79
        %p210 = pneg %p108
        %p211 = pneg %p105
        %s212 = sand.u32 %s95, 1
        %s213 = scalar_lea.sflag [#allocation4], %s212
        %s214 = sand.u32 %s95, 1
        %s215 = smul.addr %s214, 64
        %s216 = scalar_lea.vmem [#allocation8], %s215
        %s217 = smul.u32 4, %s19
        %s218 = smul.u32 4, %s19
        %v219 = vld [vmem:[#allocation2] sm:$0xff]
        %v220 = vld [vmem:[#allocation2 + $0x8] sm:$0xff]
        %v221 = vld [vmem:[#allocation5] sm:$0xff]
        %v222 = vld [vmem:[#allocation5 + $0x8] sm:$0xff]
        %v223 = vld [vmem:[%s194] sm:$0xff]
        %v224 = vld [vmem:[%s194 + $0x8] sm:$0xff]
        %vm225 = vcmask 130048
        %v227 = vsel %vm225, %v223, 0
        %v230 = vsel %vm225, %v224, 0
        %232 = vmatprep.subr.mxu0 0.0
        %v233 = vand.u32 %v221, 4294901760
        %234 = vmatpush1.msra.mxu0 %v233
        %235 = vmatprep.subr.mxu0 0.0
        %v236 = vand.u32 %v222, 4294901760
        %237 = vmatpush1.msra.mxu0 %v236
        %238 = vmatprep.subr.mxu0 0.0
        %239 = vmatpush1.msra.mxu0 0.0
        %240 = vmatprep.subr.mxu0 0.0
        %241 = vmatpush1.msra.mxu0 0.0
        %242 = vmatprep.subr.mxu0 0.0
        %243 = vmatpush1.msra.mxu0 0.0
        %244 = vmatprep.subr.mxu0 0.0
        %245 = vmatpush1.msra.mxu0 0.0
        %246 = vmatprep.subr.mxu0 0.0
        %247 = vmatpush1.msra.mxu0 0.0
        %248 = vmatprep.subr.mxu0 0.0
        %249 = vmatpush1.msra.mxu0 0.0
        %250 = vmatprep.subr.mxu0 0.0
        %251 = vmatpush1.msra.mxu0 0.0
        %252 = vmatprep.subr.mxu0 0.0
        %253 = vmatpush1.msra.mxu0 0.0
        %254 = vmatprep.subr.mxu0 0.0
        %255 = vmatpush1.msra.mxu0 0.0
        %256 = vmatprep.subr.mxu0 0.0
        %257 = vmatpush1.msra.mxu0 0.0
        %258 = vmatprep.subr.mxu0 0.0
        %259 = vmatpush1.msra.mxu0 0.0
        %260 = vmatprep.subr.mxu0 0.0
        %261 = vmatpush1.msra.mxu0 0.0
        %262 = vmatprep.subr.mxu0 0.0
        %263 = vmatpush1.msra.mxu0 0.0
        %264 = vmatprep.subr.mxu0 0.0
        %265 = vmatpush1.msra.mxu0 0.0
        %266 = vmatprep.subr.mxu0 0.0
        %267 = vmatpush1.msra.mxu0 0.0
        %268 = vmatprep.subr.mxu0 0.0
        %269 = vmatpush1.msra.mxu0 0.0
        %270 = vmatprep.subr.mxu0 0.0
        %271 = vmatpush1.msra.mxu0 0.0
        %272 = vmatprep.subr.mxu0 0.0
        %273 = vmatpush1.msra.mxu0 0.0
        %274 = vmatprep.subr.mxu0 0.0
        %275 = vmatpush1.msra.mxu0 0.0
        %276 = vmatprep.subr.mxu0 0.0
        %277 = vmatpush1.msra.mxu0 0.0
        %278 = vmatprep.subr.mxu0 0.0
        %279 = vmatpush1.msra.mxu0 0.0
        %280 = vmatprep.subr.mxu0 0.0
        %281 = vmatpush1.msra.mxu0 0.0
        %282 = vmatprep.subr.mxu0 0.0
        %283 = vmatpush1.msra.mxu0 0.0
        %284 = vmatprep.subr.mxu0 0.0
        %285 = vmatpush1.msra.mxu0 0.0
        %286 = vmatprep.subr.mxu0 0.0
        %287 = vmatpush1.msra.mxu0 0.0
        %288 = vmatprep.subr.mxu0 0.0
        %289 = vmatpush1.msra.mxu0 0.0
        %290 = vmatprep.subr.mxu0 0.0
        %291 = vmatpush1.msra.mxu0 0.0
        %292 = vmatprep.subr.mxu0 0.0
        %293 = vmatpush1.msra.mxu0 0.0
        %294 = vmatprep.subr.mxu0 0.0
        %295 = vmatpush1.msra.mxu0 0.0
        %296 = vmatprep.subr.mxu0 0.0
        %297 = vmatpush1.msra.mxu0 0.0
        %298 = vmatprep.mubr.f32.mxu0 0.0
        %v299 = vand.u32 %v227, 4294901760
        %v300 = vsub.f32 %v227, %v299
        %v301 = vand.u32 %v300, 4294901760
        %v302 = vsub.f32 %v300, %v301
        %v303 = vand.u32 %v302, 4294901760
        %304 = vmatmul.mubr.f32.gmra.mrb[0].mxu0 %v303
        %v305 = vpop.f32.mrb[0].mxu0
        %v306 = vadd.f32 0.0, %v305
        %v307 = vpop.f32.mrb[0].mxu0
        %308 = vmatprep.mubr.f32.mxu0 0.0
        %v309 = vand.u32 %v230, 4294901760
        %v310 = vsub.f32 %v230, %v309
        %v311 = vand.u32 %v310, 4294901760
        %v312 = vsub.f32 %v310, %v311
        %v313 = vand.u32 %v312, 4294901760
        %314 = vmatmul.mubr.f32.gmra.mrb[0].mxu0 %v313
        %v315 = vpop.f32.mrb[0].mxu0
        %v316 = vadd.f32 0.0, %v315
        %v317 = vpop.f32.mrb[0].mxu0
        %318 = vdwg.mxu0
        %319 = vmatprep.subr.mxu0 0.0
        %v320 = vand.u32 %v221, 4294901760
        %v321 = vsub.f32 %v221, %v320
        %v322 = vand.u32 %v321, 4294901760
        %v323 = vsub.f32 %v321, %v322
        %v324 = vand.u32 %v323, 4294901760
        %325 = vmatpush1.msra.mxu0 %v324
        %326 = vmatprep.subr.mxu0 0.0
        %v327 = vand.u32 %v222, 4294901760
        %v328 = vsub.f32 %v222, %v327
        %v329 = vand.u32 %v328, 4294901760
        %v330 = vsub.f32 %v328, %v329
        %v331 = vand.u32 %v330, 4294901760
        %332 = vmatpush1.msra.mxu0 %v331
        %333 = vmatprep.subr.mxu0 0.0
        %334 = vmatpush1.msra.mxu0 0.0
        %335 = vmatprep.subr.mxu0 0.0
        %336 = vmatpush1.msra.mxu0 0.0
        %337 = vmatprep.subr.mxu0 0.0
        %338 = vmatpush1.msra.mxu0 0.0
        %339 = vmatprep.subr.mxu0 0.0
        %340 = vmatpush1.msra.mxu0 0.0
        %341 = vmatprep.subr.mxu0 0.0
        %342 = vmatpush1.msra.mxu0 0.0
        %343 = vmatprep.subr.mxu0 0.0
        %344 = vmatpush1.msra.mxu0 0.0
        %345 = vmatprep.subr.mxu0 0.0
        %346 = vmatpush1.msra.mxu0 0.0
        %347 = vmatprep.subr.mxu0 0.0
        %348 = vmatpush1.msra.mxu0 0.0
        %349 = vmatprep.subr.mxu0 0.0
        %350 = vmatpush1.msra.mxu0 0.0
        %351 = vmatprep.subr.mxu0 0.0
        %352 = vmatpush1.msra.mxu0 0.0
        %353 = vmatprep.subr.mxu0 0.0
        %354 = vmatpush1.msra.mxu0 0.0
        %355 = vmatprep.subr.mxu0 0.0
        %356 = vmatpush1.msra.mxu0 0.0
        %357 = vmatprep.subr.mxu0 0.0
        %358 = vmatpush1.msra.mxu0 0.0
        %359 = vmatprep.subr.mxu0 0.0
        %360 = vmatpush1.msra.mxu0 0.0
        %361 = vmatprep.subr.mxu0 0.0
        %362 = vmatpush1.msra.mxu0 0.0
        %363 = vmatprep.subr.mxu0 0.0
        %364 = vmatpush1.msra.mxu0 0.0
        %365 = vmatprep.subr.mxu0 0.0
        %366 = vmatpush1.msra.mxu0 0.0
        %367 = vmatprep.subr.mxu0 0.0
        %368 = vmatpush1.msra.mxu0 0.0
        %369 = vmatprep.subr.mxu0 0.0
        %370 = vmatpush1.msra.mxu0 0.0
        %371 = vmatprep.subr.mxu0 0.0
        %372 = vmatpush1.msra.mxu0 0.0
        %373 = vmatprep.subr.mxu0 0.0
        %374 = vmatpush1.msra.mxu0 0.0
        %375 = vmatprep.subr.mxu0 0.0
        %376 = vmatpush1.msra.mxu0 0.0
        %377 = vmatprep.subr.mxu0 0.0
        %378 = vmatpush1.msra.mxu0 0.0
        %379 = vmatprep.subr.mxu0 0.0
        %380 = vmatpush1.msra.mxu0 0.0
        %381 = vmatprep.subr.mxu0 0.0
        %382 = vmatpush1.msra.mxu0 0.0
        %383 = vmatprep.subr.mxu0 0.0
        %384 = vmatpush1.msra.mxu0 0.0
        %385 = vmatprep.subr.mxu0 0.0
        %386 = vmatpush1.msra.mxu0 0.0
        %387 = vmatprep.subr.mxu0 0.0
        %388 = vmatpush1.msra.mxu0 0.0
        %389 = vmatprep.subr.mxu0 0.0
        %390 = vmatpush1.msra.mxu0 0.0
        %391 = vmatprep.subr.mxu0 0.0
        %392 = vmatpush1.msra.mxu0 0.0
        %393 = vmatprep.mubr.f32.mxu0 0.0
        %v394 = vand.u32 %v227, 4294901760
        %395 = vmatmul.mubr.f32.gmra.mrb[0].mxu0 %v394
        %v396 = vpop.f32.mrb[0].mxu0
        %v397 = vadd.f32 %v306, %v396
        %v398 = vpop.f32.mrb[0].mxu0
        %399 = vmatprep.mubr.f32.mxu0 0.0
        %v400 = vand.u32 %v230, 4294901760
        %401 = vmatmul.mubr.f32.gmra.mrb[0].mxu0 %v400
        %v402 = vpop.f32.mrb[0].mxu0
        %v403 = vadd.f32 %v316, %v402
        %v404 = vpop.f32.mrb[0].mxu0
        %405 = vdwg.mxu0
        %406 = vmatprep.subr.mxu0 0.0
        %v407 = vand.u32 %v221, 4294901760
        %v408 = vsub.f32 %v221, %v407
        %409 = vmatpush1.msra.mxu0 %v408
        %410 = vmatprep.subr.mxu0 0.0
        %v411 = vand.u32 %v222, 4294901760
        %v412 = vsub.f32 %v222, %v411
        %413 = vmatpush1.msra.mxu0 %v412
        %414 = vmatprep.subr.mxu0 0.0
        %415 = vmatpush1.msra.mxu0 0.0
        %416 = vmatprep.subr.mxu0 0.0
        %417 = vmatpush1.msra.mxu0 0.0
        %418 = vmatprep.subr.mxu0 0.0
        %419 = vmatpush1.msra.mxu0 0.0
        %420 = vmatprep.subr.mxu0 0.0
        %421 = vmatpush1.msra.mxu0 0.0
        %422 = vmatprep.subr.mxu0 0.0
        %423 = vmatpush1.msra.mxu0 0.0
        %424 = vmatprep.subr.mxu0 0.0
        %425 = vmatpush1.msra.mxu0 0.0
        %426 = vmatprep.subr.mxu0 0.0
        %427 = vmatpush1.msra.mxu0 0.0
        %428 = vmatprep.subr.mxu0 0.0
        %429 = vmatpush1.msra.mxu0 0.0
        %430 = vmatprep.subr.mxu0 0.0
        %431 = vmatpush1.msra.mxu0 0.0
        %432 = vmatprep.subr.mxu0 0.0
        %433 = vmatpush1.msra.mxu0 0.0
        %434 = vmatprep.subr.mxu0 0.0
        %435 = vmatpush1.msra.mxu0 0.0
        %436 = vmatprep.subr.mxu0 0.0
        %437 = vmatpush1.msra.mxu0 0.0
        %438 = vmatprep.subr.mxu0 0.0
        %439 = vmatpush1.msra.mxu0 0.0
        %440 = vmatprep.subr.mxu0 0.0
        %441 = vmatpush1.msra.mxu0 0.0
        %442 = vmatprep.subr.mxu0 0.0
        %443 = vmatpush1.msra.mxu0 0.0
        %444 = vmatprep.subr.mxu0 0.0
        %445 = vmatpush1.msra.mxu0 0.0
        %446 = vmatprep.subr.mxu0 0.0
        %447 = vmatpush1.msra.mxu0 0.0
        %448 = vmatprep.subr.mxu0 0.0
        %449 = vmatpush1.msra.mxu0 0.0
        %450 = vmatprep.subr.mxu0 0.0
        %451 = vmatpush1.msra.mxu0 0.0
        %452 = vmatprep.subr.mxu0 0.0
        %453 = vmatpush1.msra.mxu0 0.0
        %454 = vmatprep.subr.mxu0 0.0
        %455 = vmatpush1.msra.mxu0 0.0
        %456 = vmatprep.subr.mxu0 0.0
        %457 = vmatpush1.msra.mxu0 0.0
        %458 = vmatprep.subr.mxu0 0.0
        %459 = vmatpush1.msra.mxu0 0.0
        %460 = vmatprep.subr.mxu0 0.0
        %461 = vmatpush1.msra.mxu0 0.0
        %462 = vmatprep.subr.mxu0 0.0
        %463 = vmatpush1.msra.mxu0 0.0
        %464 = vmatprep.subr.mxu0 0.0
        %465 = vmatpush1.msra.mxu0 0.0
        %466 = vmatprep.subr.mxu0 0.0
        %467 = vmatpush1.msra.mxu0 0.0
        %468 = vmatprep.subr.mxu0 0.0
        %469 = vmatpush1.msra.mxu0 0.0
        %470 = vmatprep.subr.mxu0 0.0
        %471 = vmatpush1.msra.mxu0 0.0
        %472 = vmatprep.subr.mxu0 0.0
        %473 = vmatpush1.msra.mxu0 0.0
        %474 = vmatprep.mubr.f32.mxu0 0.0
        %v475 = vand.u32 %v227, 4294901760
        %v476 = vsub.f32 %v227, %v475
        %477 = vmatmul.mubr.f32.gmra.mrb[0].mxu0 %v476
        %v478 = vpop.f32.mrb[0].mxu0
        %v479 = vadd.f32 %v397, %v478
        %v480 = vpop.f32.mrb[0].mxu0
        %481 = vmatprep.mubr.f32.mxu0 0.0
        %v482 = vand.u32 %v230, 4294901760
        %v483 = vsub.f32 %v230, %v482
        %484 = vmatmul.mubr.f32.gmra.mrb[0].mxu0 %v483
        %v485 = vpop.f32.mrb[0].mxu0
        %v486 = vadd.f32 %v403, %v485
        %v487 = vpop.f32.mrb[0].mxu0
        %488 = vdwg.mxu0
        %489 = vmatprep.subr.mxu0 0.0
        %v490 = vand.u32 %v221, 4294901760
        %491 = vmatpush1.msra.mxu0 %v490
        %492 = vmatprep.subr.mxu0 0.0
        %v493 = vand.u32 %v222, 4294901760
        %494 = vmatpush1.msra.mxu0 %v493
        %495 = vmatprep.subr.mxu0 0.0
        %496 = vmatpush1.msra.mxu0 0.0
        %497 = vmatprep.subr.mxu0 0.0
        %498 = vmatpush1.msra.mxu0 0.0
        %499 = vmatprep.subr.mxu0 0.0
        %500 = vmatpush1.msra.mxu0 0.0
        %501 = vmatprep.subr.mxu0 0.0
        %502 = vmatpush1.msra.mxu0 0.0
        %503 = vmatprep.subr.mxu0 0.0
        %504 = vmatpush1.msra.mxu0 0.0
        %505 = vmatprep.subr.mxu0 0.0
        %506 = vmatpush1.msra.mxu0 0.0
        %507 = vmatprep.subr.mxu0 0.0
        %508 = vmatpush1.msra.mxu0 0.0
        %509 = vmatprep.subr.mxu0 0.0
        %510 = vmatpush1.msra.mxu0 0.0
        %511 = vmatprep.subr.mxu0 0.0
        %512 = vmatpush1.msra.mxu0 0.0
        %513 = vmatprep.subr.mxu0 0.0
        %514 = vmatpush1.msra.mxu0 0.0
        %515 = vmatprep.subr.mxu0 0.0
        %516 = vmatpush1.msra.mxu0 0.0
        %517 = vmatprep.subr.mxu0 0.0
        %518 = vmatpush1.msra.mxu0 0.0
        %519 = vmatprep.subr.mxu0 0.0
        %520 = vmatpush1.msra.mxu0 0.0
        %521 = vmatprep.subr.mxu0 0.0
        %522 = vmatpush1.msra.mxu0 0.0
        %523 = vmatprep.subr.mxu0 0.0
        %524 = vmatpush1.msra.mxu0 0.0
        %525 = vmatprep.subr.mxu0 0.0
        %526 = vmatpush1.msra.mxu0 0.0
        %527 = vmatprep.subr.mxu0 0.0
        %528 = vmatpush1.msra.mxu0 0.0
        %529 = vmatprep.subr.mxu0 0.0
        %530 = vmatpush1.msra.mxu0 0.0
        %531 = vmatprep.subr.mxu0 0.0
        %532 = vmatpush1.msra.mxu0 0.0
        %533 = vmatprep.subr.mxu0 0.0
        %534 = vmatpush1.msra.mxu0 0.0
        %535 = vmatprep.subr.mxu0 0.0
        %536 = vmatpush1.msra.mxu0 0.0
        %537 = vmatprep.subr.mxu0 0.0
        %538 = vmatpush1.msra.mxu0 0.0
        %539 = vmatprep.subr.mxu0 0.0
        %540 = vmatpush1.msra.mxu0 0.0
        %541 = vmatprep.subr.mxu0 0.0
        %542 = vmatpush1.msra.mxu0 0.0
        %543 = vmatprep.subr.mxu0 0.0
        %544 = vmatpush1.msra.mxu0 0.0
        %545 = vmatprep.subr.mxu0 0.0
        %546 = vmatpush1.msra.mxu0 0.0
        %547 = vmatprep.subr.mxu0 0.0
        %548 = vmatpush1.msra.mxu0 0.0
        %549 = vmatprep.subr.mxu0 0.0
        %550 = vmatpush1.msra.mxu0 0.0
        %551 = vmatprep.subr.mxu0 0.0
        %552 = vmatpush1.msra.mxu0 0.0
        %553 = vmatprep.subr.mxu0 0.0
        %554 = vmatpush1.msra.mxu0 0.0
        %555 = vmatprep.mubr.f32.mxu0 0.0
        %v556 = vand.u32 %v227, 4294901760
        %v557 = vsub.f32 %v227, %v556
        %v558 = vand.u32 %v557, 4294901760
        %559 = vmatmul.mubr.f32.gmra.mrb[0].mxu0 %v558
        %v560 = vpop.f32.mrb[0].mxu0
        %v561 = vadd.f32 %v479, %v560
        %v562 = vpop.f32.mrb[0].mxu0
        %563 = vmatprep.mubr.f32.mxu0 0.0
        %v564 = vand.u32 %v230, 4294901760
        %v565 = vsub.f32 %v230, %v564
        %v566 = vand.u32 %v565, 4294901760
        %567 = vmatmul.mubr.f32.gmra.mrb[0].mxu0 %v566
        %v568 = vpop.f32.mrb[0].mxu0
        %v569 = vadd.f32 %v486, %v568
        %v570 = vpop.f32.mrb[0].mxu0
        %571 = vdwg.mxu0
        %572 = vmatprep.subr.mxu0 0.0
        %v573 = vand.u32 %v221, 4294901760
        %v574 = vsub.f32 %v221, %v573
        %v575 = vand.u32 %v574, 4294901760
        %576 = vmatpush1.msra.mxu0 %v575
        %577 = vmatprep.subr.mxu0 0.0
        %v578 = vand.u32 %v222, 4294901760
        %v579 = vsub.f32 %v222, %v578
        %v580 = vand.u32 %v579, 4294901760
        %581 = vmatpush1.msra.mxu0 %v580
        %582 = vmatprep.subr.mxu0 0.0
        %583 = vmatpush1.msra.mxu0 0.0
        %584 = vmatprep.subr.mxu0 0.0
        %585 = vmatpush1.msra.mxu0 0.0
        %586 = vmatprep.subr.mxu0 0.0
        %587 = vmatpush1.msra.mxu0 0.0
        %588 = vmatprep.subr.mxu0 0.0
        %589 = vmatpush1.msra.mxu0 0.0
        %590 = vmatprep.subr.mxu0 0.0
        %591 = vmatpush1.msra.mxu0 0.0
        %592 = vmatprep.subr.mxu0 0.0
        %593 = vmatpush1.msra.mxu0 0.0
        %594 = vmatprep.subr.mxu0 0.0
        %595 = vmatpush1.msra.mxu0 0.0
        %596 = vmatprep.subr.mxu0 0.0
        %597 = vmatpush1.msra.mxu0 0.0
        %598 = vmatprep.subr.mxu0 0.0
        %599 = vmatpush1.msra.mxu0 0.0
        %600 = vmatprep.subr.mxu0 0.0
        %601 = vmatpush1.msra.mxu0 0.0
        %602 = vmatprep.subr.mxu0 0.0
        %603 = vmatpush1.msra.mxu0 0.0
        %604 = vmatprep.subr.mxu0 0.0
        %605 = vmatpush1.msra.mxu0 0.0
        %606 = vmatprep.subr.mxu0 0.0
        %607 = vmatpush1.msra.mxu0 0.0
        %608 = vmatprep.subr.mxu0 0.0
        %609 = vmatpush1.msra.mxu0 0.0
        %610 = vmatprep.subr.mxu0 0.0
        %611 = vmatpush1.msra.mxu0 0.0
        %612 = vmatprep.subr.mxu0 0.0
        %613 = vmatpush1.msra.mxu0 0.0
        %614 = vmatprep.subr.mxu0 0.0
        %615 = vmatpush1.msra.mxu0 0.0
        %616 = vmatprep.subr.mxu0 0.0
        %617 = vmatpush1.msra.mxu0 0.0
        %618 = vmatprep.subr.mxu0 0.0
        %619 = vmatpush1.msra.mxu0 0.0
        %620 = vmatprep.subr.mxu0 0.0
        %621 = vmatpush1.msra.mxu0 0.0
        %622 = vmatprep.subr.mxu0 0.0
        %623 = vmatpush1.msra.mxu0 0.0
        %624 = vmatprep.subr.mxu0 0.0
        %625 = vmatpush1.msra.mxu0 0.0
        %626 = vmatprep.subr.mxu0 0.0
        %627 = vmatpush1.msra.mxu0 0.0
        %628 = vmatprep.subr.mxu0 0.0
        %629 = vmatpush1.msra.mxu0 0.0
        %630 = vmatprep.subr.mxu0 0.0
        %631 = vmatpush1.msra.mxu0 0.0
        %632 = vmatprep.subr.mxu0 0.0
        %633 = vmatpush1.msra.mxu0 0.0
        %634 = vmatprep.subr.mxu0 0.0
        %635 = vmatpush1.msra.mxu0 0.0
        %636 = vmatprep.subr.mxu0 0.0
        %637 = vmatpush1.msra.mxu0 0.0
        %638 = vmatprep.subr.mxu0 0.0
        %639 = vmatpush1.msra.mxu0 0.0
        %640 = vmatprep.subr.mxu0 0.0
        %641 = vmatpush1.msra.mxu0 0.0
        %642 = vmatprep.mubr.f32.mxu0 0.0
        %v643 = vand.u32 %v227, 4294901760
        %644 = vmatmul.mubr.f32.gmra.mrb[0].mxu0 %v643
        %v645 = vpop.f32.mrb[0].mxu0
        %v646 = vadd.f32 %v561, %v645
        %v647 = vpop.f32.mrb[0].mxu0
        %648 = vmatprep.mubr.f32.mxu0 0.0
        %v649 = vand.u32 %v230, 4294901760
        %650 = vmatmul.mubr.f32.gmra.mrb[0].mxu0 %v649
        %v651 = vpop.f32.mrb[0].mxu0
        %v652 = vadd.f32 %v569, %v651
        %v653 = vpop.f32.mrb[0].mxu0
        %654 = vdwg.mxu0
        %655 = vmatprep.subr.mxu0 0.0
        %v656 = vand.u32 %v221, 4294901760
        %657 = vmatpush1.msra.mxu0 %v656
        %658 = vmatprep.subr.mxu0 0.0
        %v659 = vand.u32 %v222, 4294901760
        %660 = vmatpush1.msra.mxu0 %v659
        %661 = vmatprep.subr.mxu0 0.0
        %662 = vmatpush1.msra.mxu0 0.0
        %663 = vmatprep.subr.mxu0 0.0
        %664 = vmatpush1.msra.mxu0 0.0
        %665 = vmatprep.subr.mxu0 0.0
        %666 = vmatpush1.msra.mxu0 0.0
        %667 = vmatprep.subr.mxu0 0.0
        %668 = vmatpush1.msra.mxu0 0.0
        %669 = vmatprep.subr.mxu0 0.0
        %670 = vmatpush1.msra.mxu0 0.0
        %671 = vmatprep.subr.mxu0 0.0
        %672 = vmatpush1.msra.mxu0 0.0
        %673 = vmatprep.subr.mxu0 0.0
        %674 = vmatpush1.msra.mxu0 0.0
        %675 = vmatprep.subr.mxu0 0.0
        %676 = vmatpush1.msra.mxu0 0.0
        %677 = vmatprep.subr.mxu0 0.0
        %678 = vmatpush1.msra.mxu0 0.0
        %679 = vmatprep.subr.mxu0 0.0
        %680 = vmatpush1.msra.mxu0 0.0
        %681 = vmatprep.subr.mxu0 0.0
        %682 = vmatpush1.msra.mxu0 0.0
        %683 = vmatprep.subr.mxu0 0.0
        %684 = vmatpush1.msra.mxu0 0.0
        %685 = vmatprep.subr.mxu0 0.0
        %686 = vmatpush1.msra.mxu0 0.0
        %687 = vmatprep.subr.mxu0 0.0
        %688 = vmatpush1.msra.mxu0 0.0
        %689 = vmatprep.subr.mxu0 0.0
        %690 = vmatpush1.msra.mxu0 0.0
        %691 = vmatprep.subr.mxu0 0.0
        %692 = vmatpush1.msra.mxu0 0.0
        %693 = vmatprep.subr.mxu0 0.0
        %694 = vmatpush1.msra.mxu0 0.0
        %695 = vmatprep.subr.mxu0 0.0
        %696 = vmatpush1.msra.mxu0 0.0
        %697 = vmatprep.subr.mxu0 0.0
        %698 = vmatpush1.msra.mxu0 0.0
        %699 = vmatprep.subr.mxu0 0.0
        %700 = vmatpush1.msra.mxu0 0.0
        %701 = vmatprep.subr.mxu0 0.0
        %702 = vmatpush1.msra.mxu0 0.0
        %703 = vmatprep.subr.mxu0 0.0
        %704 = vmatpush1.msra.mxu0 0.0
        %705 = vmatprep.subr.mxu0 0.0
        %706 = vmatpush1.msra.mxu0 0.0
        %707 = vmatprep.subr.mxu0 0.0
        %708 = vmatpush1.msra.mxu0 0.0
        %709 = vmatprep.subr.mxu0 0.0
        %710 = vmatpush1.msra.mxu0 0.0
        %711 = vmatprep.subr.mxu0 0.0
        %712 = vmatpush1.msra.mxu0 0.0
        %713 = vmatprep.subr.mxu0 0.0
        %714 = vmatpush1.msra.mxu0 0.0
        %715 = vmatprep.subr.mxu0 0.0
        %716 = vmatpush1.msra.mxu0 0.0
        %717 = vmatprep.subr.mxu0 0.0
        %718 = vmatpush1.msra.mxu0 0.0
        %719 = vmatprep.subr.mxu0 0.0
        %720 = vmatpush1.msra.mxu0 0.0
        %721 = vmatprep.mubr.f32.mxu0 0.0
        %v722 = vand.u32 %v227, 4294901760
        %723 = vmatmul.mubr.f32.gmra.mrb[0].mxu0 %v722
        %v724 = vpop.f32.mrb[0].mxu0
        %v725 = vadd.f32 %v646, %v724
        %v726 = vpop.f32.mrb[0].mxu0
        %727 = vmatprep.mubr.f32.mxu0 0.0
        %v728 = vand.u32 %v230, 4294901760
        %729 = vmatmul.mubr.f32.gmra.mrb[0].mxu0 %v728
        %v730 = vpop.f32.mrb[0].mxu0
        %v731 = vadd.f32 %v652, %v730
        %v732 = vpop.f32.mrb[0].mxu0
        %733 = vdwg.mxu0
        %v735 = vsel %vm225, %v219, 0
        %v738 = vsel %vm225, %v220, 0
        %740 = vmatprep.subr.mxu0 0.0
        %v741 = vand.u32 %v725, 4294901760
        %742 = vmatpush1.msra.mxu0 %v741
        %743 = vmatprep.subr.mxu0 0.0
        %v744 = vand.u32 %v731, 4294901760
        %745 = vmatpush1.msra.mxu0 %v744
        %746 = vmatprep.subr.mxu0 0.0
        %747 = vmatpush1.msra.mxu0 0.0
        %748 = vmatprep.subr.mxu0 0.0
        %749 = vmatpush1.msra.mxu0 0.0
        %750 = vmatprep.subr.mxu0 0.0
        %751 = vmatpush1.msra.mxu0 0.0
        %752 = vmatprep.subr.mxu0 0.0
        %753 = vmatpush1.msra.mxu0 0.0
        %754 = vmatprep.subr.mxu0 0.0
        %755 = vmatpush1.msra.mxu0 0.0
        %756 = vmatprep.subr.mxu0 0.0
        %757 = vmatpush1.msra.mxu0 0.0
        %758 = vmatprep.subr.mxu0 0.0
        %759 = vmatpush1.msra.mxu0 0.0
        %760 = vmatprep.subr.mxu0 0.0
        %761 = vmatpush1.msra.mxu0 0.0
        %762 = vmatprep.subr.mxu0 0.0
        %763 = vmatpush1.msra.mxu0 0.0
        %764 = vmatprep.subr.mxu0 0.0
        %765 = vmatpush1.msra.mxu0 0.0
        %766 = vmatprep.subr.mxu0 0.0
        %767 = vmatpush1.msra.mxu0 0.0
        %768 = vmatprep.subr.mxu0 0.0
        %769 = vmatpush1.msra.mxu0 0.0
        %770 = vmatprep.subr.mxu0 0.0
        %771 = vmatpush1.msra.mxu0 0.0
        %772 = vmatprep.subr.mxu0 0.0
        %773 = vmatpush1.msra.mxu0 0.0
        %774 = vmatprep.subr.mxu0 0.0
        %775 = vmatpush1.msra.mxu0 0.0
        %776 = vmatprep.subr.mxu0 0.0
        %777 = vmatpush1.msra.mxu0 0.0
        %778 = vmatprep.subr.mxu0 0.0
        %779 = vmatpush1.msra.mxu0 0.0
        %780 = vmatprep.subr.mxu0 0.0
        %781 = vmatpush1.msra.mxu0 0.0
        %782 = vmatprep.subr.mxu0 0.0
        %783 = vmatpush1.msra.mxu0 0.0
        %784 = vmatprep.subr.mxu0 0.0
        %785 = vmatpush1.msra.mxu0 0.0
        %786 = vmatprep.subr.mxu0 0.0
        %787 = vmatpush1.msra.mxu0 0.0
        %788 = vmatprep.subr.mxu0 0.0
        %789 = vmatpush1.msra.mxu0 0.0
        %790 = vmatprep.subr.mxu0 0.0
        %791 = vmatpush1.msra.mxu0 0.0
        %792 = vmatprep.subr.mxu0 0.0
        %793 = vmatpush1.msra.mxu0 0.0
        %794 = vmatprep.subr.mxu0 0.0
        %795 = vmatpush1.msra.mxu0 0.0
        %796 = vmatprep.subr.mxu0 0.0
        %797 = vmatpush1.msra.mxu0 0.0
        %798 = vmatprep.subr.mxu0 0.0
        %799 = vmatpush1.msra.mxu0 0.0
        %800 = vmatprep.subr.mxu0 0.0
        %801 = vmatpush1.msra.mxu0 0.0
        %802 = vmatprep.subr.mxu0 0.0
        %803 = vmatpush1.msra.mxu0 0.0
        %804 = vmatprep.subr.mxu0 0.0
        %805 = vmatpush1.msra.mxu0 0.0
        %806 = vmatprep.mubr.f32.mxu0 0.0
        %v807 = vand.u32 %v735, 4294901760
        %v808 = vsub.f32 %v735, %v807
        %v809 = vand.u32 %v808, 4294901760
        %v810 = vsub.f32 %v808, %v809
        %v811 = vand.u32 %v810, 4294901760
        %812 = vmatmul.mubr.f32.gmra.mrb[0].mxu0 %v811
        %v813 = vpop.f32.mrb[0].mxu0
        %v814 = vadd.f32 0.0, %v813
        %v815 = vpop.f32.mrb[0].mxu0
        %816 = vmatprep.mubr.f32.mxu0 0.0
        %v817 = vand.u32 %v738, 4294901760
        %v818 = vsub.f32 %v738, %v817
        %v819 = vand.u32 %v818, 4294901760
        %v820 = vsub.f32 %v818, %v819
        %v821 = vand.u32 %v820, 4294901760
        %822 = vmatmul.mubr.f32.gmra.mrb[0].mxu0 %v821
        %v823 = vpop.f32.mrb[0].mxu0
        %v824 = vadd.f32 0.0, %v823
        %v825 = vpop.f32.mrb[0].mxu0
        %826 = vdwg.mxu0
        %827 = vmatprep.subr.mxu0 0.0
        %v828 = vand.u32 %v725, 4294901760
        %v829 = vsub.f32 %v725, %v828
        %v830 = vand.u32 %v829, 4294901760
        %v831 = vsub.f32 %v829, %v830
        %v832 = vand.u32 %v831, 4294901760
        %833 = vmatpush1.msra.mxu0 %v832
        %834 = vmatprep.subr.mxu0 0.0
        %v835 = vand.u32 %v731, 4294901760
        %v836 = vsub.f32 %v731, %v835
        %v837 = vand.u32 %v836, 4294901760
        %v838 = vsub.f32 %v836, %v837
        %v839 = vand.u32 %v838, 4294901760
        %840 = vmatpush1.msra.mxu0 %v839
        %841 = vmatprep.subr.mxu0 0.0
        %842 = vmatpush1.msra.mxu0 0.0
        %843 = vmatprep.subr.mxu0 0.0
        %844 = vmatpush1.msra.mxu0 0.0
        %845 = vmatprep.subr.mxu0 0.0
        %846 = vmatpush1.msra.mxu0 0.0
        %847 = vmatprep.subr.mxu0 0.0
        %848 = vmatpush1.msra.mxu0 0.0
        %849 = vmatprep.subr.mxu0 0.0
        %850 = vmatpush1.msra.mxu0 0.0
        %851 = vmatprep.subr.mxu0 0.0
        %852 = vmatpush1.msra.mxu0 0.0
        %853 = vmatprep.subr.mxu0 0.0
        %854 = vmatpush1.msra.mxu0 0.0
        %855 = vmatprep.subr.mxu0 0.0
        %856 = vmatpush1.msra.mxu0 0.0
        %857 = vmatprep.subr.mxu0 0.0
        %858 = vmatpush1.msra.mxu0 0.0
        %859 = vmatprep.subr.mxu0 0.0
        %860 = vmatpush1.msra.mxu0 0.0
        %861 = vmatprep.subr.mxu0 0.0
        %862 = vmatpush1.msra.mxu0 0.0
        %863 = vmatprep.subr.mxu0 0.0
        %864 = vmatpush1.msra.mxu0 0.0
        %865 = vmatprep.subr.mxu0 0.0
        %866 = vmatpush1.msra.mxu0 0.0
        %867 = vmatprep.subr.mxu0 0.0
        %868 = vmatpush1.msra.mxu0 0.0
        %869 = vmatprep.subr.mxu0 0.0
        %870 = vmatpush1.msra.mxu0 0.0
        %871 = vmatprep.subr.mxu0 0.0
        %872 = vmatpush1.msra.mxu0 0.0
        %873 = vmatprep.subr.mxu0 0.0
        %874 = vmatpush1.msra.mxu0 0.0
        %875 = vmatprep.subr.mxu0 0.0
        %876 = vmatpush1.msra.mxu0 0.0
        %877 = vmatprep.subr.mxu0 0.0
        %878 = vmatpush1.msra.mxu0 0.0
        %879 = vmatprep.subr.mxu0 0.0
        %880 = vmatpush1.msra.mxu0 0.0
        %881 = vmatprep.subr.mxu0 0.0
        %882 = vmatpush1.msra.mxu0 0.0
        %883 = vmatprep.subr.mxu0 0.0
        %884 = vmatpush1.msra.mxu0 0.0
        %885 = vmatprep.subr.mxu0 0.0
        %886 = vmatpush1.msra.mxu0 0.0
        %887 = vmatprep.subr.mxu0 0.0
        %888 = vmatpush1.msra.mxu0 0.0
        %889 = vmatprep.subr.mxu0 0.0
        %890 = vmatpush1.msra.mxu0 0.0
        %891 = vmatprep.subr.mxu0 0.0
        %892 = vmatpush1.msra.mxu0 0.0
        %893 = vmatprep.subr.mxu0 0.0
        %894 = vmatpush1.msra.mxu0 0.0
        %895 = vmatprep.subr.mxu0 0.0
        %896 = vmatpush1.msra.mxu0 0.0
        %897 = vmatprep.subr.mxu0 0.0
        %898 = vmatpush1.msra.mxu0 0.0
        %899 = vmatprep.subr.mxu0 0.0
        %900 = vmatpush1.msra.mxu0 0.0
        %901 = vmatprep.mubr.f32.mxu0 0.0
        %v902 = vand.u32 %v735, 4294901760
        %903 = vmatmul.mubr.f32.gmra.mrb[0].mxu0 %v902
        %v904 = vpop.f32.mrb[0].mxu0
        %v905 = vadd.f32 %v814, %v904
        %v906 = vpop.f32.mrb[0].mxu0
        %907 = vmatprep.mubr.f32.mxu0 0.0
        %v908 = vand.u32 %v738, 4294901760
        %909 = vmatmul.mubr.f32.gmra.mrb[0].mxu0 %v908
        %v910 = vpop.f32.mrb[0].mxu0
        %v911 = vadd.f32 %v824, %v910
        %v912 = vpop.f32.mrb[0].mxu0
        %913 = vdwg.mxu0
        %914 = vmatprep.subr.mxu0 0.0
        %v915 = vand.u32 %v725, 4294901760
        %v916 = vsub.f32 %v725, %v915
        %917 = vmatpush1.msra.mxu0 %v916
        %918 = vmatprep.subr.mxu0 0.0
        %v919 = vand.u32 %v731, 4294901760
        %v920 = vsub.f32 %v731, %v919
        %921 = vmatpush1.msra.mxu0 %v920
        %922 = vmatprep.subr.mxu0 0.0
        %923 = vmatpush1.msra.mxu0 0.0
        %924 = vmatprep.subr.mxu0 0.0
        %925 = vmatpush1.msra.mxu0 0.0
        %926 = vmatprep.subr.mxu0 0.0
        %927 = vmatpush1.msra.mxu0 0.0
        %928 = vmatprep.subr.mxu0 0.0
        %929 = vmatpush1.msra.mxu0 0.0
        %930 = vmatprep.subr.mxu0 0.0
        %931 = vmatpush1.msra.mxu0 0.0
        %932 = vmatprep.subr.mxu0 0.0
        %933 = vmatpush1.msra.mxu0 0.0
        %934 = vmatprep.subr.mxu0 0.0
        %935 = vmatpush1.msra.mxu0 0.0
        %936 = vmatprep.subr.mxu0 0.0
        %937 = vmatpush1.msra.mxu0 0.0
        %938 = vmatprep.subr.mxu0 0.0
        %939 = vmatpush1.msra.mxu0 0.0
        %940 = vmatprep.subr.mxu0 0.0
        %941 = vmatpush1.msra.mxu0 0.0
        %942 = vmatprep.subr.mxu0 0.0
        %943 = vmatpush1.msra.mxu0 0.0
        %944 = vmatprep.subr.mxu0 0.0
        %945 = vmatpush1.msra.mxu0 0.0
        %946 = vmatprep.subr.mxu0 0.0
        %947 = vmatpush1.msra.mxu0 0.0
        %948 = vmatprep.subr.mxu0 0.0
        %949 = vmatpush1.msra.mxu0 0.0
        %950 = vmatprep.subr.mxu0 0.0
        %951 = vmatpush1.msra.mxu0 0.0
        %952 = vmatprep.subr.mxu0 0.0
        %953 = vmatpush1.msra.mxu0 0.0
        %954 = vmatprep.subr.mxu0 0.0
        %955 = vmatpush1.msra.mxu0 0.0
        %956 = vmatprep.subr.mxu0 0.0
        %957 = vmatpush1.msra.mxu0 0.0
        %958 = vmatprep.subr.mxu0 0.0
        %959 = vmatpush1.msra.mxu0 0.0
        %960 = vmatprep.subr.mxu0 0.0
        %961 = vmatpush1.msra.mxu0 0.0
        %962 = vmatprep.subr.mxu0 0.0
        %963 = vmatpush1.msra.mxu0 0.0
        %964 = vmatprep.subr.mxu0 0.0
        %965 = vmatpush1.msra.mxu0 0.0
        %966 = vmatprep.subr.mxu0 0.0
        %967 = vmatpush1.msra.mxu0 0.0
        %968 = vmatprep.subr.mxu0 0.0
        %969 = vmatpush1.msra.mxu0 0.0
        %970 = vmatprep.subr.mxu0 0.0
        %971 = vmatpush1.msra.mxu0 0.0
        %972 = vmatprep.subr.mxu0 0.0
        %973 = vmatpush1.msra.mxu0 0.0
        %974 = vmatprep.subr.mxu0 0.0
        %975 = vmatpush1.msra.mxu0 0.0
        %976 = vmatprep.subr.mxu0 0.0
        %977 = vmatpush1.msra.mxu0 0.0
        %978 = vmatprep.subr.mxu0 0.0
        %979 = vmatpush1.msra.mxu0 0.0
        %980 = vmatprep.subr.mxu0 0.0
        %981 = vmatpush1.msra.mxu0 0.0
        %982 = vmatprep.mubr.f32.mxu0 0.0
        %v983 = vand.u32 %v735, 4294901760
        %v984 = vsub.f32 %v735, %v983
        %985 = vmatmul.mubr.f32.gmra.mrb[0].mxu0 %v984
        %v986 = vpop.f32.mrb[0].mxu0
        %v987 = vadd.f32 %v905, %v986
        %v988 = vpop.f32.mrb[0].mxu0
        %989 = vmatprep.mubr.f32.mxu0 0.0
        %v990 = vand.u32 %v738, 4294901760
        %v991 = vsub.f32 %v738, %v990
        %992 = vmatmul.mubr.f32.gmra.mrb[0].mxu0 %v991
        %v993 = vpop.f32.mrb[0].mxu0
        %v994 = vadd.f32 %v911, %v993
        %v995 = vpop.f32.mrb[0].mxu0
        %996 = vdwg.mxu0
        %997 = vmatprep.subr.mxu0 0.0
        %v998 = vand.u32 %v725, 4294901760
        %999 = vmatpush1.msra.mxu0 %v998
        %1000 = vmatprep.subr.mxu0 0.0
        %v1001 = vand.u32 %v731, 4294901760
        %1002 = vmatpush1.msra.mxu0 %v1001
        %1003 = vmatprep.subr.mxu0 0.0
        %1004 = vmatpush1.msra.mxu0 0.0
        %1005 = vmatprep.subr.mxu0 0.0
        %1006 = vmatpush1.msra.mxu0 0.0
        %1007 = vmatprep.subr.mxu0 0.0
        %1008 = vmatpush1.msra.mxu0 0.0
        %1009 = vmatprep.subr.mxu0 0.0
        %1010 = vmatpush1.msra.mxu0 0.0
        %1011 = vmatprep.subr.mxu0 0.0
        %1012 = vmatpush1.msra.mxu0 0.0
        %1013 = vmatprep.subr.mxu0 0.0
        %1014 = vmatpush1.msra.mxu0 0.0
        %1015 = vmatprep.subr.mxu0 0.0
        %1016 = vmatpush1.msra.mxu0 0.0
        %1017 = vmatprep.subr.mxu0 0.0
        %1018 = vmatpush1.msra.mxu0 0.0
        %1019 = vmatprep.subr.mxu0 0.0
        %1020 = vmatpush1.msra.mxu0 0.0
        %1021 = vmatprep.subr.mxu0 0.0
        %1022 = vmatpush1.msra.mxu0 0.0
        %1023 = vmatprep.subr.mxu0 0.0
        %1024 = vmatpush1.msra.mxu0 0.0
        %1025 = vmatprep.subr.mxu0 0.0
        %1026 = vmatpush1.msra.mxu0 0.0
        %1027 = vmatprep.subr.mxu0 0.0
        %1028 = vmatpush1.msra.mxu0 0.0
        %1029 = vmatprep.subr.mxu0 0.0
        %1030 = vmatpush1.msra.mxu0 0.0
        %1031 = vmatprep.subr.mxu0 0.0
        %1032 = vmatpush1.msra.mxu0 0.0
        %1033 = vmatprep.subr.mxu0 0.0
        %1034 = vmatpush1.msra.mxu0 0.0
        %1035 = vmatprep.subr.mxu0 0.0
        %1036 = vmatpush1.msra.mxu0 0.0
        %1037 = vmatprep.subr.mxu0 0.0
        %1038 = vmatpush1.msra.mxu0 0.0
        %1039 = vmatprep.subr.mxu0 0.0
        %1040 = vmatpush1.msra.mxu0 0.0
        %1041 = vmatprep.subr.mxu0 0.0
        %1042 = vmatpush1.msra.mxu0 0.0
        %1043 = vmatprep.subr.mxu0 0.0
        %1044 = vmatpush1.msra.mxu0 0.0
        %1045 = vmatprep.subr.mxu0 0.0
        %1046 = vmatpush1.msra.mxu0 0.0
        %1047 = vmatprep.subr.mxu0 0.0
        %1048 = vmatpush1.msra.mxu0 0.0
        %1049 = vmatprep.subr.mxu0 0.0
        %1050 = vmatpush1.msra.mxu0 0.0
        %1051 = vmatprep.subr.mxu0 0.0
        %1052 = vmatpush1.msra.mxu0 0.0
        %1053 = vmatprep.subr.mxu0 0.0
        %1054 = vmatpush1.msra.mxu0 0.0
        %1055 = vmatprep.subr.mxu0 0.0
        %1056 = vmatpush1.msra.mxu0 0.0
        %1057 = vmatprep.subr.mxu0 0.0
        %1058 = vmatpush1.msra.mxu0 0.0
        %1059 = vmatprep.subr.mxu0 0.0
        %1060 = vmatpush1.msra.mxu0 0.0
        %1061 = vmatprep.subr.mxu0 0.0
        %1062 = vmatpush1.msra.mxu0 0.0
        %1063 = vmatprep.mubr.f32.mxu0 0.0
        %v1064 = vand.u32 %v735, 4294901760
        %v1065 = vsub.f32 %v735, %v1064
        %v1066 = vand.u32 %v1065, 4294901760
        %1067 = vmatmul.mubr.f32.gmra.mrb[0].mxu0 %v1066
        %v1068 = vpop.f32.mrb[0].mxu0
        %v1069 = vadd.f32 %v987, %v1068
        %v1070 = vpop.f32.mrb[0].mxu0
        %1071 = vmatprep.mubr.f32.mxu0 0.0
        %v1072 = vand.u32 %v738, 4294901760
        %v1073 = vsub.f32 %v738, %v1072
        %v1074 = vand.u32 %v1073, 4294901760
        %1075 = vmatmul.mubr.f32.gmra.mrb[0].mxu0 %v1074
        %v1076 = vpop.f32.mrb[0].mxu0
        %v1077 = vadd.f32 %v994, %v1076
        %v1078 = vpop.f32.mrb[0].mxu0
        %1079 = vdwg.mxu0
        %1080 = vmatprep.subr.mxu0 0.0
        %v1081 = vand.u32 %v725, 4294901760
        %v1082 = vsub.f32 %v725, %v1081
        %v1083 = vand.u32 %v1082, 4294901760
        %1084 = vmatpush1.msra.mxu0 %v1083
        %1085 = vmatprep.subr.mxu0 0.0
        %v1086 = vand.u32 %v731, 4294901760
        %v1087 = vsub.f32 %v731, %v1086
        %v1088 = vand.u32 %v1087, 4294901760
        %1089 = vmatpush1.msra.mxu0 %v1088
        %1090 = vmatprep.subr.mxu0 0.0
        %1091 = vmatpush1.msra.mxu0 0.0
        %1092 = vmatprep.subr.mxu0 0.0
        %1093 = vmatpush1.msra.mxu0 0.0
        %1094 = vmatprep.subr.mxu0 0.0
        %1095 = vmatpush1.msra.mxu0 0.0
        %1096 = vmatprep.subr.mxu0 0.0
        %1097 = vmatpush1.msra.mxu0 0.0
        %1098 = vmatprep.subr.mxu0 0.0
        %1099 = vmatpush1.msra.mxu0 0.0
        %1100 = vmatprep.subr.mxu0 0.0
        %1101 = vmatpush1.msra.mxu0 0.0
        %1102 = vmatprep.subr.mxu0 0.0
        %1103 = vmatpush1.msra.mxu0 0.0
        %1104 = vmatprep.subr.mxu0 0.0
        %1105 = vmatpush1.msra.mxu0 0.0
        %1106 = vmatprep.subr.mxu0 0.0
        %1107 = vmatpush1.msra.mxu0 0.0
        %1108 = vmatprep.subr.mxu0 0.0
        %1109 = vmatpush1.msra.mxu0 0.0
        %1110 = vmatprep.subr.mxu0 0.0
        %1111 = vmatpush1.msra.mxu0 0.0
        %1112 = vmatprep.subr.mxu0 0.0
        %1113 = vmatpush1.msra.mxu0 0.0
        %1114 = vmatprep.subr.mxu0 0.0
        %1115 = vmatpush1.msra.mxu0 0.0
        %1116 = vmatprep.subr.mxu0 0.0
        %1117 = vmatpush1.msra.mxu0 0.0
        %1118 = vmatprep.subr.mxu0 0.0
        %1119 = vmatpush1.msra.mxu0 0.0
        %1120 = vmatprep.subr.mxu0 0.0
        %1121 = vmatpush1.msra.mxu0 0.0
        %1122 = vmatprep.subr.mxu0 0.0
        %1123 = vmatpush1.msra.mxu0 0.0
        %1124 = vmatprep.subr.mxu0 0.0
        %1125 = vmatpush1.msra.mxu0 0.0
        %1126 = vmatprep.subr.mxu0 0.0
        %1127 = vmatpush1.msra.mxu0 0.0
        %1128 = vmatprep.subr.mxu0 0.0
        %1129 = vmatpush1.msra.mxu0 0.0
        %1130 = vmatprep.subr.mxu0 0.0
        %1131 = vmatpush1.msra.mxu0 0.0
        %1132 = vmatprep.subr.mxu0 0.0
        %1133 = vmatpush1.msra.mxu0 0.0
        %1134 = vmatprep.subr.mxu0 0.0
        %1135 = vmatpush1.msra.mxu0 0.0
        %1136 = vmatprep.subr.mxu0 0.0
        %1137 = vmatpush1.msra.mxu0 0.0
        %1138 = vmatprep.subr.mxu0 0.0
        %1139 = vmatpush1.msra.mxu0 0.0
        %1140 = vmatprep.subr.mxu0 0.0
        %1141 = vmatpush1.msra.mxu0 0.0
        %1142 = vmatprep.subr.mxu0 0.0
        %1143 = vmatpush1.msra.mxu0 0.0
        %1144 = vmatprep.subr.mxu0 0.0
        %1145 = vmatpush1.msra.mxu0 0.0
        %1146 = vmatprep.subr.mxu0 0.0
        %1147 = vmatpush1.msra.mxu0 0.0
        %1148 = vmatprep.subr.mxu0 0.0
        %1149 = vmatpush1.msra.mxu0 0.0
        %1150 = vmatprep.mubr.f32.mxu0 0.0
        %v1151 = vand.u32 %v735, 4294901760
        %1152 = vmatmul.mubr.f32.gmra.mrb[0].mxu0 %v1151
        %v1153 = vpop.f32.mrb[0].mxu0
        %v1154 = vadd.f32 %v1069, %v1153
        %v1155 = vpop.f32.mrb[0].mxu0
        %1156 = vmatprep.mubr.f32.mxu0 0.0
        %v1157 = vand.u32 %v738, 4294901760
        %1158 = vmatmul.mubr.f32.gmra.mrb[0].mxu0 %v1157
        %v1159 = vpop.f32.mrb[0].mxu0
        %v1160 = vadd.f32 %v1077, %v1159
        %v1161 = vpop.f32.mrb[0].mxu0
        %1162 = vdwg.mxu0
        %1163 = vmatprep.subr.mxu0 0.0
        %v1164 = vand.u32 %v725, 4294901760
        %1165 = vmatpush1.msra.mxu0 %v1164
        %1166 = vmatprep.subr.mxu0 0.0
        %v1167 = vand.u32 %v731, 4294901760
        %1168 = vmatpush1.msra.mxu0 %v1167
        %1169 = vmatprep.subr.mxu0 0.0
        %1170 = vmatpush1.msra.mxu0 0.0
        %1171 = vmatprep.subr.mxu0 0.0
        %1172 = vmatpush1.msra.mxu0 0.0
        %1173 = vmatprep.subr.mxu0 0.0
        %1174 = vmatpush1.msra.mxu0 0.0
        %1175 = vmatprep.subr.mxu0 0.0
        %1176 = vmatpush1.msra.mxu0 0.0
        %1177 = vmatprep.subr.mxu0 0.0
        %1178 = vmatpush1.msra.mxu0 0.0
        %1179 = vmatprep.subr.mxu0 0.0
        %1180 = vmatpush1.msra.mxu0 0.0
        %1181 = vmatprep.subr.mxu0 0.0
        %1182 = vmatpush1.msra.mxu0 0.0
        %1183 = vmatprep.subr.mxu0 0.0
        %1184 = vmatpush1.msra.mxu0 0.0
        %1185 = vmatprep.subr.mxu0 0.0
        %1186 = vmatpush1.msra.mxu0 0.0
        %1187 = vmatprep.subr.mxu0 0.0
        %1188 = vmatpush1.msra.mxu0 0.0
        %1189 = vmatprep.subr.mxu0 0.0
        %1190 = vmatpush1.msra.mxu0 0.0
        %1191 = vmatprep.subr.mxu0 0.0
        %1192 = vmatpush1.msra.mxu0 0.0
        %1193 = vmatprep.subr.mxu0 0.0
        %1194 = vmatpush1.msra.mxu0 0.0
        %1195 = vmatprep.subr.mxu0 0.0
        %1196 = vmatpush1.msra.mxu0 0.0
        %1197 = vmatprep.subr.mxu0 0.0
        %1198 = vmatpush1.msra.mxu0 0.0
        %1199 = vmatprep.subr.mxu0 0.0
        %1200 = vmatpush1.msra.mxu0 0.0
        %1201 = vmatprep.subr.mxu0 0.0
        %1202 = vmatpush1.msra.mxu0 0.0
        %1203 = vmatprep.subr.mxu0 0.0
        %1204 = vmatpush1.msra.mxu0 0.0
        %1205 = vmatprep.subr.mxu0 0.0
        %1206 = vmatpush1.msra.mxu0 0.0
        %1207 = vmatprep.subr.mxu0 0.0
        %1208 = vmatpush1.msra.mxu0 0.0
        %1209 = vmatprep.subr.mxu0 0.0
        %1210 = vmatpush1.msra.mxu0 0.0
        %1211 = vmatprep.subr.mxu0 0.0
        %1212 = vmatpush1.msra.mxu0 0.0
        %1213 = vmatprep.subr.mxu0 0.0
        %1214 = vmatpush1.msra.mxu0 0.0
        %1215 = vmatprep.subr.mxu0 0.0
        %1216 = vmatpush1.msra.mxu0 0.0
        %1217 = vmatprep.subr.mxu0 0.0
        %1218 = vmatpush1.msra.mxu0 0.0
        %1219 = vmatprep.subr.mxu0 0.0
        %1220 = vmatpush1.msra.mxu0 0.0
        %1221 = vmatprep.subr.mxu0 0.0
        %1222 = vmatpush1.msra.mxu0 0.0
        %1223 = vmatprep.subr.mxu0 0.0
        %1224 = vmatpush1.msra.mxu0 0.0
        %1225 = vmatprep.subr.mxu0 0.0
        %1226 = vmatpush1.msra.mxu0 0.0
        %1227 = vmatprep.subr.mxu0 0.0
        %1228 = vmatpush1.msra.mxu0 0.0
        %1229 = vmatprep.mubr.f32.mxu0 0.0
        %v1230 = vand.u32 %v735, 4294901760
        %1231 = vmatmul.mubr.f32.gmra.mrb[0].mxu0 %v1230
        %v1232 = vpop.f32.mrb[0].mxu0
        %v1233 = vadd.f32 %v1154, %v1232
        %v1234 = vpop.f32.mrb[0].mxu0
        %1235 = vmatprep.mubr.f32.mxu0 0.0
        %v1236 = vand.u32 %v738, 4294901760
        %1237 = vmatmul.mubr.f32.gmra.mrb[0].mxu0 %v1236
        %v1238 = vpop.f32.mrb[0].mxu0
        %v1239 = vadd.f32 %v1160, %v1238
        %v1240 = vpop.f32.mrb[0].mxu0
        %1241 = vdwg.mxu0
        %1242 = vst.msk [vmem:[%s216] sm:$0xff] %vm225, %v1233
        %1243 = vst.msk [vmem:[%s216 + $0x8] sm:$0xff] %vm225, %v1239
        %s1244 = scalar_lea.vmem %s194, 16 [#allocation7]
        %v1245 = vld [vmem:[%s1244] sm:$0xff]
        %v1246 = vld [vmem:[%s1244 + $0x8] sm:$0xff]
        %v1248 = vsel %vm225, %v1245, 0
        %v1251 = vsel %vm225, %v1246, 0
        %1253 = vmatprep.subr.mxu0 0.0
        %v1254 = vand.u32 %v221, 4294901760
        %1255 = vmatpush1.msra.mxu0 %v1254
        %1256 = vmatprep.subr.mxu0 0.0
        %v1257 = vand.u32 %v222, 4294901760
        %1258 = vmatpush1.msra.mxu0 %v1257
        %1259 = vmatprep.subr.mxu0 0.0
        %1260 = vmatpush1.msra.mxu0 0.0
        %1261 = vmatprep.subr.mxu0 0.0
        %1262 = vmatpush1.msra.mxu0 0.0
        %1263 = vmatprep.subr.mxu0 0.0
        %1264 = vmatpush1.msra.mxu0 0.0
        %1265 = vmatprep.subr.mxu0 0.0
        %1266 = vmatpush1.msra.mxu0 0.0
        %1267 = vmatprep.subr.mxu0 0.0
        %1268 = vmatpush1.msra.mxu0 0.0
        %1269 = vmatprep.subr.mxu0 0.0
        %1270 = vmatpush1.msra.mxu0 0.0
        %1271 = vmatprep.subr.mxu0 0.0
        %1272 = vmatpush1.msra.mxu0 0.0
        %1273 = vmatprep.subr.mxu0 0.0
        %1274 = vmatpush1.msra.mxu0 0.0
        %1275 = vmatprep.subr.mxu0 0.0
        %1276 = vmatpush1.msra.mxu0 0.0
        %1277 = vmatprep.subr.mxu0 0.0
        %1278 = vmatpush1.msra.mxu0 0.0
        %1279 = vmatprep.subr.mxu0 0.0
        %1280 = vmatpush1.msra.mxu0 0.0
        %1281 = vmatprep.subr.mxu0 0.0
        %1282 = vmatpush1.msra.mxu0 0.0
        %1283 = vmatprep.subr.mxu0 0.0
        %1284 = vmatpush1.msra.mxu0 0.0
        %1285 = vmatprep.subr.mxu0 0.0
        %1286 = vmatpush1.msra.mxu0 0.0
        %1287 = vmatprep.subr.mxu0 0.0
        %1288 = vmatpush1.msra.mxu0 0.0
        %1289 = vmatprep.subr.mxu0 0.0
        %1290 = vmatpush1.msra.mxu0 0.0
        %1291 = vmatprep.subr.mxu0 0.0
        %1292 = vmatpush1.msra.mxu0 0.0
        %1293 = vmatprep.subr.mxu0 0.0
        %1294 = vmatpush1.msra.mxu0 0.0
        %1295 = vmatprep.subr.mxu0 0.0
        %1296 = vmatpush1.msra.mxu0 0.0
        %1297 = vmatprep.subr.mxu0 0.0
        %1298 = vmatpush1.msra.mxu0 0.0
        %1299 = vmatprep.subr.mxu0 0.0
        %1300 = vmatpush1.msra.mxu0 0.0
        %1301 = vmatprep.subr.mxu0 0.0
        %1302 = vmatpush1.msra.mxu0 0.0
        %1303 = vmatprep.subr.mxu0 0.0
        %1304 = vmatpush1.msra.mxu0 0.0
        %1305 = vmatprep.subr.mxu0 0.0
        %1306 = vmatpush1.msra.mxu0 0.0
        %1307 = vmatprep.subr.mxu0 0.0
        %1308 = vmatpush1.msra.mxu0 0.0
        %1309 = vmatprep.subr.mxu0 0.0
        %1310 = vmatpush1.msra.mxu0 0.0
        %1311 = vmatprep.subr.mxu0 0.0
        %1312 = vmatpush1.msra.mxu0 0.0
        %1313 = vmatprep.subr.mxu0 0.0
        %1314 = vmatpush1.msra.mxu0 0.0
        %1315 = vmatprep.subr.mxu0 0.0
        %1316 = vmatpush1.msra.mxu0 0.0
        %1317 = vmatprep.subr.mxu0 0.0
        %1318 = vmatpush1.msra.mxu0 0.0
        %1319 = vmatprep.mubr.f32.mxu0 0.0
        %v1320 = vand.u32 %v1248, 4294901760
        %v1321 = vsub.f32 %v1248, %v1320
        %v1322 = vand.u32 %v1321, 4294901760
        %v1323 = vsub.f32 %v1321, %v1322
        %v1324 = vand.u32 %v1323, 4294901760
        %1325 = vmatmul.mubr.f32.gmra.mrb[0].mxu0 %v1324
        %v1326 = vpop.f32.mrb[0].mxu0
        %v1327 = vadd.f32 0.0, %v1326
        %v1328 = vpop.f32.mrb[0].mxu0
        %1329 = vmatprep.mubr.f32.mxu0 0.0
        %v1330 = vand.u32 %v1251, 4294901760
        %v1331 = vsub.f32 %v1251, %v1330
        %v1332 = vand.u32 %v1331, 4294901760
        %v1333 = vsub.f32 %v1331, %v1332
        %v1334 = vand.u32 %v1333, 4294901760
        %1335 = vmatmul.mubr.f32.gmra.mrb[0].mxu0 %v1334
        %v1336 = vpop.f32.mrb[0].mxu0
        %v1337 = vadd.f32 0.0, %v1336
        %v1338 = vpop.f32.mrb[0].mxu0
        %1339 = vdwg.mxu0
        %1340 = vmatprep.subr.mxu0 0.0
        %v1341 = vand.u32 %v221, 4294901760
        %v1342 = vsub.f32 %v221, %v1341
        %v1343 = vand.u32 %v1342, 4294901760
        %v1344 = vsub.f32 %v1342, %v1343
        %v1345 = vand.u32 %v1344, 4294901760
        %1346 = vmatpush1.msra.mxu0 %v1345
        %1347 = vmatprep.subr.mxu0 0.0
        %v1348 = vand.u32 %v222, 4294901760
        %v1349 = vsub.f32 %v222, %v1348
        %v1350 = vand.u32 %v1349, 4294901760
        %v1351 = vsub.f32 %v1349, %v1350
        %v1352 = vand.u32 %v1351, 4294901760
        %1353 = vmatpush1.msra.mxu0 %v1352
        %1354 = vmatprep.subr.mxu0 0.0
        %1355 = vmatpush1.msra.mxu0 0.0
        %1356 = vmatprep.subr.mxu0 0.0
        %1357 = vmatpush1.msra.mxu0 0.0
        %1358 = vmatprep.subr.mxu0 0.0
        %1359 = vmatpush1.msra.mxu0 0.0
        %1360 = vmatprep.subr.mxu0 0.0
        %1361 = vmatpush1.msra.mxu0 0.0
        %1362 = vmatprep.subr.mxu0 0.0
        %1363 = vmatpush1.msra.mxu0 0.0
        %1364 = vmatprep.subr.mxu0 0.0
        %1365 = vmatpush1.msra.mxu0 0.0
        %1366 = vmatprep.subr.mxu0 0.0
        %1367 = vmatpush1.msra.mxu0 0.0
        %1368 = vmatprep.subr.mxu0 0.0
        %1369 = vmatpush1.msra.mxu0 0.0
        %1370 = vmatprep.subr.mxu0 0.0
        %1371 = vmatpush1.msra.mxu0 0.0
        %1372 = vmatprep.subr.mxu0 0.0
        %1373 = vmatpush1.msra.mxu0 0.0
        %1374 = vmatprep.subr.mxu0 0.0
        %1375 = vmatpush1.msra.mxu0 0.0
        %1376 = vmatprep.subr.mxu0 0.0
        %1377 = vmatpush1.msra.mxu0 0.0
        %1378 = vmatprep.subr.mxu0 0.0
        %1379 = vmatpush1.msra.mxu0 0.0
        %1380 = vmatprep.subr.mxu0 0.0
        %1381 = vmatpush1.msra.mxu0 0.0
        %1382 = vmatprep.subr.mxu0 0.0
        %1383 = vmatpush1.msra.mxu0 0.0
        %1384 = vmatprep.subr.mxu0 0.0
        %1385 = vmatpush1.msra.mxu0 0.0
        %1386 = vmatprep.subr.mxu0 0.0
        %1387 = vmatpush1.msra.mxu0 0.0
        %1388 = vmatprep.subr.mxu0 0.0
        %1389 = vmatpush1.msra.mxu0 0.0
        %1390 = vmatprep.subr.mxu0 0.0
        %1391 = vmatpush1.msra.mxu0 0.0
        %1392 = vmatprep.subr.mxu0 0.0
        %1393 = vmatpush1.msra.mxu0 0.0
        %1394 = vmatprep.subr.mxu0 0.0
        %1395 = vmatpush1.msra.mxu0 0.0
        %1396 = vmatprep.subr.mxu0 0.0
        %1397 = vmatpush1.msra.mxu0 0.0
        %1398 = vmatprep.subr.mxu0 0.0
        %1399 = vmatpush1.msra.mxu0 0.0
        %1400 = vmatprep.subr.mxu0 0.0
        %1401 = vmatpush1.msra.mxu0 0.0
        %1402 = vmatprep.subr.mxu0 0.0
        %1403 = vmatpush1.msra.mxu0 0.0
        %1404 = vmatprep.subr.mxu0 0.0
        %1405 = vmatpush1.msra.mxu0 0.0
        %1406 = vmatprep.subr.mxu0 0.0
        %1407 = vmatpush1.msra.mxu0 0.0
        %1408 = vmatprep.subr.mxu0 0.0
        %1409 = vmatpush1.msra.mxu0 0.0
        %1410 = vmatprep.subr.mxu0 0.0
        %1411 = vmatpush1.msra.mxu0 0.0
        %1412 = vmatprep.subr.mxu0 0.0
        %1413 = vmatpush1.msra.mxu0 0.0
        %1414 = vmatprep.mubr.f32.mxu0 0.0
        %v1415 = vand.u32 %v1248, 4294901760
        %1416 = vmatmul.mubr.f32.gmra.mrb[0].mxu0 %v1415
        %v1417 = vpop.f32.mrb[0].mxu0
        %v1418 = vadd.f32 %v1327, %v1417
        %v1419 = vpop.f32.mrb[0].mxu0
        %1420 = vmatprep.mubr.f32.mxu0 0.0
        %v1421 = vand.u32 %v1251, 4294901760
        %1422 = vmatmul.mubr.f32.gmra.mrb[0].mxu0 %v1421
        %v1423 = vpop.f32.mrb[0].mxu0
        %v1424 = vadd.f32 %v1337, %v1423
        %v1425 = vpop.f32.mrb[0].mxu0
        %1426 = vdwg.mxu0
        %1427 = vmatprep.subr.mxu0 0.0
        %v1428 = vand.u32 %v221, 4294901760
        %v1429 = vsub.f32 %v221, %v1428
        %1430 = vmatpush1.msra.mxu0 %v1429
        %1431 = vmatprep.subr.mxu0 0.0
        %v1432 = vand.u32 %v222, 4294901760
        %v1433 = vsub.f32 %v222, %v1432
        %1434 = vmatpush1.msra.mxu0 %v1433
        %1435 = vmatprep.subr.mxu0 0.0
        %1436 = vmatpush1.msra.mxu0 0.0
        %1437 = vmatprep.subr.mxu0 0.0
        %1438 = vmatpush1.msra.mxu0 0.0
        %1439 = vmatprep.subr.mxu0 0.0
        %1440 = vmatpush1.msra.mxu0 0.0
        %1441 = vmatprep.subr.mxu0 0.0
        %1442 = vmatpush1.msra.mxu0 0.0
        %1443 = vmatprep.subr.mxu0 0.0
        %1444 = vmatpush1.msra.mxu0 0.0
        %1445 = vmatprep.subr.mxu0 0.0
        %1446 = vmatpush1.msra.mxu0 0.0
        %1447 = vmatprep.subr.mxu0 0.0
        %1448 = vmatpush1.msra.mxu0 0.0
        %1449 = vmatprep.subr.mxu0 0.0
        %1450 = vmatpush1.msra.mxu0 0.0
        %1451 = vmatprep.subr.mxu0 0.0
        %1452 = vmatpush1.msra.mxu0 0.0
        %1453 = vmatprep.subr.mxu0 0.0
        %1454 = vmatpush1.msra.mxu0 0.0
        %1455 = vmatprep.subr.mxu0 0.0
        %1456 = vmatpush1.msra.mxu0 0.0
        %1457 = vmatprep.subr.mxu0 0.0
        %1458 = vmatpush1.msra.mxu0 0.0
        %1459 = vmatprep.subr.mxu0 0.0
        %1460 = vmatpush1.msra.mxu0 0.0
        %1461 = vmatprep.subr.mxu0 0.0
        %1462 = vmatpush1.msra.mxu0 0.0
        %1463 = vmatprep.subr.mxu0 0.0
        %1464 = vmatpush1.msra.mxu0 0.0
        %1465 = vmatprep.subr.mxu0 0.0
        %1466 = vmatpush1.msra.mxu0 0.0
        %1467 = vmatprep.subr.mxu0 0.0
        %1468 = vmatpush1.msra.mxu0 0.0
        %1469 = vmatprep.subr.mxu0 0.0
        %1470 = vmatpush1.msra.mxu0 0.0
        %1471 = vmatprep.subr.mxu0 0.0
        %1472 = vmatpush1.msra.mxu0 0.0
        %1473 = vmatprep.subr.mxu0 0.0
        %1474 = vmatpush1.msra.mxu0 0.0
        %1475 = vmatprep.subr.mxu0 0.0
        %1476 = vmatpush1.msra.mxu0 0.0
        %1477 = vmatprep.subr.mxu0 0.0
        %1478 = vmatpush1.msra.mxu0 0.0
        %1479 = vmatprep.subr.mxu0 0.0
        %1480 = vmatpush1.msra.mxu0 0.0
        %1481 = vmatprep.subr.mxu0 0.0
        %1482 = vmatpush1.msra.mxu0 0.0
        %1483 = vmatprep.subr.mxu0 0.0
        %1484 = vmatpush1.msra.mxu0 0.0
        %1485 = vmatprep.subr.mxu0 0.0
        %1486 = vmatpush1.msra.mxu0 0.0
        %1487 = vmatprep.subr.mxu0 0.0
        %1488 = vmatpush1.msra.mxu0 0.0
        %1489 = vmatprep.subr.mxu0 0.0
        %1490 = vmatpush1.msra.mxu0 0.0
        %1491 = vmatprep.subr.mxu0 0.0
        %1492 = vmatpush1.msra.mxu0 0.0
        %1493 = vmatprep.subr.mxu0 0.0
        %1494 = vmatpush1.msra.mxu0 0.0
        %1495 = vmatprep.mubr.f32.mxu0 0.0
        %v1496 = vand.u32 %v1248, 4294901760
        %v1497 = vsub.f32 %v1248, %v1496
        %1498 = vmatmul.mubr.f32.gmra.mrb[0].mxu0 %v1497
        %v1499 = vpop.f32.mrb[0].mxu0
        %v1500 = vadd.f32 %v1418, %v1499
        %v1501 = vpop.f32.mrb[0].mxu0
        %1502 = vmatprep.mubr.f32.mxu0 0.0
        %v1503 = vand.u32 %v1251, 4294901760
        %v1504 = vsub.f32 %v1251, %v1503
        %1505 = vmatmul.mubr.f32.gmra.mrb[0].mxu0 %v1504
        %v1506 = vpop.f32.mrb[0].mxu0
        %v1507 = vadd.f32 %v1424, %v1506
        %v1508 = vpop.f32.mrb[0].mxu0
        %1509 = vdwg.mxu0
        %1510 = vmatprep.subr.mxu0 0.0
        %v1511 = vand.u32 %v221, 4294901760
        %1512 = vmatpush1.msra.mxu0 %v1511
        %1513 = vmatprep.subr.mxu0 0.0
        %v1514 = vand.u32 %v222, 4294901760
        %1515 = vmatpush1.msra.mxu0 %v1514
        %1516 = vmatprep.subr.mxu0 0.0
        %1517 = vmatpush1.msra.mxu0 0.0
        %1518 = vmatprep.subr.mxu0 0.0
        %1519 = vmatpush1.msra.mxu0 0.0
        %1520 = vmatprep.subr.mxu0 0.0
        %1521 = vmatpush1.msra.mxu0 0.0
        %1522 = vmatprep.subr.mxu0 0.0
        %1523 = vmatpush1.msra.mxu0 0.0
        %1524 = vmatprep.subr.mxu0 0.0
        %1525 = vmatpush1.msra.mxu0 0.0
        %1526 = vmatprep.subr.mxu0 0.0
        %1527 = vmatpush1.msra.mxu0 0.0
        %1528 = vmatprep.subr.mxu0 0.0
        %1529 = vmatpush1.msra.mxu0 0.0
        %1530 = vmatprep.subr.mxu0 0.0
        %1531 = vmatpush1.msra.mxu0 0.0
        %1532 = vmatprep.subr.mxu0 0.0
        %1533 = vmatpush1.msra.mxu0 0.0
        %1534 = vmatprep.subr.mxu0 0.0
        %1535 = vmatpush1.msra.mxu0 0.0
        %1536 = vmatprep.subr.mxu0 0.0
        %1537 = vmatpush1.msra.mxu0 0.0
        %1538 = vmatprep.subr.mxu0 0.0
        %1539 = vmatpush1.msra.mxu0 0.0
        %1540 = vmatprep.subr.mxu0 0.0
        %1541 = vmatpush1.msra.mxu0 0.0
        %1542 = vmatprep.subr.mxu0 0.0
        %1543 = vmatpush1.msra.mxu0 0.0
        %1544 = vmatprep.subr.mxu0 0.0
        %1545 = vmatpush1.msra.mxu0 0.0
        %1546 = vmatprep.subr.mxu0 0.0
        %1547 = vmatpush1.msra.mxu0 0.0
        %1548 = vmatprep.subr.mxu0 0.0
        %1549 = vmatpush1.msra.mxu0 0.0
        %1550 = vmatprep.subr.mxu0 0.0
        %1551 = vmatpush1.msra.mxu0 0.0
        %1552 = vmatprep.subr.mxu0 0.0
        %1553 = vmatpush1.msra.mxu0 0.0
        %1554 = vmatprep.subr.mxu0 0.0
        %1555 = vmatpush1.msra.mxu0 0.0
        %1556 = vmatprep.subr.mxu0 0.0
        %1557 = vmatpush1.msra.mxu0 0.0
        %1558 = vmatprep.subr.mxu0 0.0
        %1559 = vmatpush1.msra.mxu0 0.0
        %1560 = vmatprep.subr.mxu0 0.0
        %1561 = vmatpush1.msra.mxu0 0.0
        %1562 = vmatprep.subr.mxu0 0.0
        %1563 = vmatpush1.msra.mxu0 0.0
        %1564 = vmatprep.subr.mxu0 0.0
        %1565 = vmatpush1.msra.mxu0 0.0
        %1566 = vmatprep.subr.mxu0 0.0
        %1567 = vmatpush1.msra.mxu0 0.0
        %1568 = vmatprep.subr.mxu0 0.0
        %1569 = vmatpush1.msra.mxu0 0.0
        %1570 = vmatprep.subr.mxu0 0.0
        %1571 = vmatpush1.msra.mxu0 0.0
        %1572 = vmatprep.subr.mxu0 0.0
        %1573 = vmatpush1.msra.mxu0 0.0
        %1574 = vmatprep.subr.mxu0 0.0
        %1575 = vmatpush1.msra.mxu0 0.0
        %1576 = vmatprep.mubr.f32.mxu0 0.0
        %v1577 = vand.u32 %v1248, 4294901760
        %v1578 = vsub.f32 %v1248, %v1577
        %v1579 = vand.u32 %v1578, 4294901760
        %1580 = vmatmul.mubr.f32.gmra.mrb[0].mxu0 %v1579
        %v1581 = vpop.f32.mrb[0].mxu0
        %v1582 = vadd.f32 %v1500, %v1581
        %v1583 = vpop.f32.mrb[0].mxu0
        %1584 = vmatprep.mubr.f32.mxu0 0.0
        %v1585 = vand.u32 %v1251, 4294901760
        %v1586 = vsub.f32 %v1251, %v1585
        %v1587 = vand.u32 %v1586, 4294901760
        %1588 = vmatmul.mubr.f32.gmra.mrb[0].mxu0 %v1587
        %v1589 = vpop.f32.mrb[0].mxu0
        %v1590 = vadd.f32 %v1507, %v1589
        %v1591 = vpop.f32.mrb[0].mxu0
        %1592 = vdwg.mxu0
        %1593 = vmatprep.subr.mxu0 0.0
        %v1594 = vand.u32 %v221, 4294901760
        %v1595 = vsub.f32 %v221, %v1594
        %v1596 = vand.u32 %v1595, 4294901760
        %1597 = vmatpush1.msra.mxu0 %v1596
        %1598 = vmatprep.subr.mxu0 0.0
        %v1599 = vand.u32 %v222, 4294901760
        %v1600 = vsub.f32 %v222, %v1599
        %v1601 = vand.u32 %v1600, 4294901760
        %1602 = vmatpush1.msra.mxu0 %v1601
        %1603 = vmatprep.subr.mxu0 0.0
        %1604 = vmatpush1.msra.mxu0 0.0
        %1605 = vmatprep.subr.mxu0 0.0
        %1606 = vmatpush1.msra.mxu0 0.0
        %1607 = vmatprep.subr.mxu0 0.0
        %1608 = vmatpush1.msra.mxu0 0.0
        %1609 = vmatprep.subr.mxu0 0.0
        %1610 = vmatpush1.msra.mxu0 0.0
        %1611 = vmatprep.subr.mxu0 0.0
        %1612 = vmatpush1.msra.mxu0 0.0
        %1613 = vmatprep.subr.mxu0 0.0
        %1614 = vmatpush1.msra.mxu0 0.0
        %1615 = vmatprep.subr.mxu0 0.0
        %1616 = vmatpush1.msra.mxu0 0.0
        %1617 = vmatprep.subr.mxu0 0.0
        %1618 = vmatpush1.msra.mxu0 0.0
        %1619 = vmatprep.subr.mxu0 0.0
        %1620 = vmatpush1.msra.mxu0 0.0
        %1621 = vmatprep.subr.mxu0 0.0
        %1622 = vmatpush1.msra.mxu0 0.0
        %1623 = vmatprep.subr.mxu0 0.0
        %1624 = vmatpush1.msra.mxu0 0.0
        %1625 = vmatprep.subr.mxu0 0.0
        %1626 = vmatpush1.msra.mxu0 0.0
        %1627 = vmatprep.subr.mxu0 0.0
        %1628 = vmatpush1.msra.mxu0 0.0
        %1629 = vmatprep.subr.mxu0 0.0
        %1630 = vmatpush1.msra.mxu0 0.0
        %1631 = vmatprep.subr.mxu0 0.0
        %1632 = vmatpush1.msra.mxu0 0.0
        %1633 = vmatprep.subr.mxu0 0.0
        %1634 = vmatpush1.msra.mxu0 0.0
        %1635 = vmatprep.subr.mxu0 0.0
        %1636 = vmatpush1.msra.mxu0 0.0
        %1637 = vmatprep.subr.mxu0 0.0
        %1638 = vmatpush1.msra.mxu0 0.0
        %1639 = vmatprep.subr.mxu0 0.0
        %1640 = vmatpush1.msra.mxu0 0.0
        %1641 = vmatprep.subr.mxu0 0.0
        %1642 = vmatpush1.msra.mxu0 0.0
        %1643 = vmatprep.subr.mxu0 0.0
        %1644 = vmatpush1.msra.mxu0 0.0
        %1645 = vmatprep.subr.mxu0 0.0
        %1646 = vmatpush1.msra.mxu0 0.0
        %1647 = vmatprep.subr.mxu0 0.0
        %1648 = vmatpush1.msra.mxu0 0.0
        %1649 = vmatprep.subr.mxu0 0.0
        %1650 = vmatpush1.msra.mxu0 0.0
        %1651 = vmatprep.subr.mxu0 0.0
        %1652 = vmatpush1.msra.mxu0 0.0
        %1653 = vmatprep.subr.mxu0 0.0
        %1654 = vmatpush1.msra.mxu0 0.0
        %1655 = vmatprep.subr.mxu0 0.0
        %1656 = vmatpush1.msra.mxu0 0.0
        %1657 = vmatprep.subr.mxu0 0.0
        %1658 = vmatpush1.msra.mxu0 0.0
        %1659 = vmatprep.subr.mxu0 0.0
        %1660 = vmatpush1.msra.mxu0 0.0
        %1661 = vmatprep.subr.mxu0 0.0
        %1662 = vmatpush1.msra.mxu0 0.0
        %1663 = vmatprep.mubr.f32.mxu0 0.0
        %v1664 = vand.u32 %v1248, 4294901760
        %1665 = vmatmul.mubr.f32.gmra.mrb[0].mxu0 %v1664
        %v1666 = vpop.f32.mrb[0].mxu0
        %v1667 = vadd.f32 %v1582, %v1666
        %v1668 = vpop.f32.mrb[0].mxu0
        %1669 = vmatprep.mubr.f32.mxu0 0.0
        %v1670 = vand.u32 %v1251, 4294901760
        %1671 = vmatmul.mubr.f32.gmra.mrb[0].mxu0 %v1670
        %v1672 = vpop.f32.mrb[0].mxu0
        %v1673 = vadd.f32 %v1590, %v1672
        %v1674 = vpop.f32.mrb[0].mxu0
        %1675 = vdwg.mxu0
        %1676 = vmatprep.subr.mxu0 0.0
        %v1677 = vand.u32 %v221, 4294901760
        %1678 = vmatpush1.msra.mxu0 %v1677
        %1679 = vmatprep.subr.mxu0 0.0
        %v1680 = vand.u32 %v222, 4294901760
        %1681 = vmatpush1.msra.mxu0 %v1680
        %1682 = vmatprep.subr.mxu0 0.0
        %1683 = vmatpush1.msra.mxu0 0.0
        %1684 = vmatprep.subr.mxu0 0.0
        %1685 = vmatpush1.msra.mxu0 0.0
        %1686 = vmatprep.subr.mxu0 0.0
        %1687 = vmatpush1.msra.mxu0 0.0
        %1688 = vmatprep.subr.mxu0 0.0
        %1689 = vmatpush1.msra.mxu0 0.0
        %1690 = vmatprep.subr.mxu0 0.0
        %1691 = vmatpush1.msra.mxu0 0.0
        %1692 = vmatprep.subr.mxu0 0.0
        %1693 = vmatpush1.msra.mxu0 0.0
        %1694 = vmatprep.subr.mxu0 0.0
        %1695 = vmatpush1.msra.mxu0 0.0
        %1696 = vmatprep.subr.mxu0 0.0
        %1697 = vmatpush1.msra.mxu0 0.0
        %1698 = vmatprep.subr.mxu0 0.0
        %1699 = vmatpush1.msra.mxu0 0.0
        %1700 = vmatprep.subr.mxu0 0.0
        %1701 = vmatpush1.msra.mxu0 0.0
        %1702 = vmatprep.subr.mxu0 0.0
        %1703 = vmatpush1.msra.mxu0 0.0
        %1704 = vmatprep.subr.mxu0 0.0
        %1705 = vmatpush1.msra.mxu0 0.0
        %1706 = vmatprep.subr.mxu0 0.0
        %1707 = vmatpush1.msra.mxu0 0.0
        %1708 = vmatprep.subr.mxu0 0.0
        %1709 = vmatpush1.msra.mxu0 0.0
        %1710 = vmatprep.subr.mxu0 0.0
        %1711 = vmatpush1.msra.mxu0 0.0
        %1712 = vmatprep.subr.mxu0 0.0
        %1713 = vmatpush1.msra.mxu0 0.0
        %1714 = vmatprep.subr.mxu0 0.0
        %1715 = vmatpush1.msra.mxu0 0.0
        %1716 = vmatprep.subr.mxu0 0.0
        %1717 = vmatpush1.msra.mxu0 0.0
        %1718 = vmatprep.subr.mxu0 0.0
        %1719 = vmatpush1.msra.mxu0 0.0
        %1720 = vmatprep.subr.mxu0 0.0
        %1721 = vmatpush1.msra.mxu0 0.0
        %1722 = vmatprep.subr.mxu0 0.0
        %1723 = vmatpush1.msra.mxu0 0.0
        %1724 = vmatprep.subr.mxu0 0.0
        %1725 = vmatpush1.msra.mxu0 0.0
        %1726 = vmatprep.subr.mxu0 0.0
        %1727 = vmatpush1.msra.mxu0 0.0
        %1728 = vmatprep.subr.mxu0 0.0
        %1729 = vmatpush1.msra.mxu0 0.0
        %1730 = vmatprep.subr.mxu0 0.0
        %1731 = vmatpush1.msra.mxu0 0.0
        %1732 = vmatprep.subr.mxu0 0.0
        %1733 = vmatpush1.msra.mxu0 0.0
        %1734 = vmatprep.subr.mxu0 0.0
        %1735 = vmatpush1.msra.mxu0 0.0
        %1736 = vmatprep.subr.mxu0 0.0
        %1737 = vmatpush1.msra.mxu0 0.0
        %1738 = vmatprep.subr.mxu0 0.0
        %1739 = vmatpush1.msra.mxu0 0.0
        %1740 = vmatprep.subr.mxu0 0.0
        %1741 = vmatpush1.msra.mxu0 0.0
        %1742 = vmatprep.mubr.f32.mxu0 0.0
        %v1743 = vand.u32 %v1248, 4294901760
        %1744 = vmatmul.mubr.f32.gmra.mrb[0].mxu0 %v1743
        %v1745 = vpop.f32.mrb[0].mxu0
        %v1746 = vadd.f32 %v1667, %v1745
        %v1747 = vpop.f32.mrb[0].mxu0
        %1748 = vmatprep.mubr.f32.mxu0 0.0
        %v1749 = vand.u32 %v1251, 4294901760
        %1750 = vmatmul.mubr.f32.gmra.mrb[0].mxu0 %v1749
        %v1751 = vpop.f32.mrb[0].mxu0
        %v1752 = vadd.f32 %v1673, %v1751
        %v1753 = vpop.f32.mrb[0].mxu0
        %1754 = vdwg.mxu0
        %1755 = vmatprep.subr.mxu0 0.0
        %v1756 = vand.u32 %v1746, 4294901760
        %1757 = vmatpush1.msra.mxu0 %v1756
        %1758 = vmatprep.subr.mxu0 0.0
        %v1759 = vand.u32 %v1752, 4294901760
        %1760 = vmatpush1.msra.mxu0 %v1759
        %1761 = vmatprep.subr.mxu0 0.0
        %1762 = vmatpush1.msra.mxu0 0.0
        %1763 = vmatprep.subr.mxu0 0.0
        %1764 = vmatpush1.msra.mxu0 0.0
        %1765 = vmatprep.subr.mxu0 0.0
        %1766 = vmatpush1.msra.mxu0 0.0
        %1767 = vmatprep.subr.mxu0 0.0
        %1768 = vmatpush1.msra.mxu0 0.0
        %1769 = vmatprep.subr.mxu0 0.0
        %1770 = vmatpush1.msra.mxu0 0.0
        %1771 = vmatprep.subr.mxu0 0.0
        %1772 = vmatpush1.msra.mxu0 0.0
        %1773 = vmatprep.subr.mxu0 0.0
        %1774 = vmatpush1.msra.mxu0 0.0
        %1775 = vmatprep.subr.mxu0 0.0
        %1776 = vmatpush1.msra.mxu0 0.0
        %1777 = vmatprep.subr.mxu0 0.0
        %1778 = vmatpush1.msra.mxu0 0.0
        %1779 = vmatprep.subr.mxu0 0.0
        %1780 = vmatpush1.msra.mxu0 0.0
        %1781 = vmatprep.subr.mxu0 0.0
        %1782 = vmatpush1.msra.mxu0 0.0
        %1783 = vmatprep.subr.mxu0 0.0
        %1784 = vmatpush1.msra.mxu0 0.0
        %1785 = vmatprep.subr.mxu0 0.0
        %1786 = vmatpush1.msra.mxu0 0.0
        %1787 = vmatprep.subr.mxu0 0.0
        %1788 = vmatpush1.msra.mxu0 0.0
        %1789 = vmatprep.subr.mxu0 0.0
        %1790 = vmatpush1.msra.mxu0 0.0
        %1791 = vmatprep.subr.mxu0 0.0
        %1792 = vmatpush1.msra.mxu0 0.0
        %1793 = vmatprep.subr.mxu0 0.0
        %1794 = vmatpush1.msra.mxu0 0.0
        %1795 = vmatprep.subr.mxu0 0.0
        %1796 = vmatpush1.msra.mxu0 0.0
        %1797 = vmatprep.subr.mxu0 0.0
        %1798 = vmatpush1.msra.mxu0 0.0
        %1799 = vmatprep.subr.mxu0 0.0
        %1800 = vmatpush1.msra.mxu0 0.0
        %1801 = vmatprep.subr.mxu0 0.0
        %1802 = vmatpush1.msra.mxu0 0.0
        %1803 = vmatprep.subr.mxu0 0.0
        %1804 = vmatpush1.msra.mxu0 0.0
        %1805 = vmatprep.subr.mxu0 0.0
        %1806 = vmatpush1.msra.mxu0 0.0
        %1807 = vmatprep.subr.mxu0 0.0
        %1808 = vmatpush1.msra.mxu0 0.0
        %1809 = vmatprep.subr.mxu0 0.0
        %1810 = vmatpush1.msra.mxu0 0.0
        %1811 = vmatprep.subr.mxu0 0.0
        %1812 = vmatpush1.msra.mxu0 0.0
        %1813 = vmatprep.subr.mxu0 0.0
        %1814 = vmatpush1.msra.mxu0 0.0
        %1815 = vmatprep.subr.mxu0 0.0
        %1816 = vmatpush1.msra.mxu0 0.0
        %1817 = vmatprep.subr.mxu0 0.0
        %1818 = vmatpush1.msra.mxu0 0.0
        %1819 = vmatprep.subr.mxu0 0.0
        %1820 = vmatpush1.msra.mxu0 0.0
        %1821 = vmatprep.mubr.f32.mxu0 0.0
        %v1822 = vand.u32 %v735, 4294901760
        %v1823 = vsub.f32 %v735, %v1822
        %v1824 = vand.u32 %v1823, 4294901760
        %v1825 = vsub.f32 %v1823, %v1824
        %v1826 = vand.u32 %v1825, 4294901760
        %1827 = vmatmul.mubr.f32.gmra.mrb[0].mxu0 %v1826
        %v1828 = vpop.f32.mrb[0].mxu0
        %v1829 = vadd.f32 0.0, %v1828
        %v1830 = vpop.f32.mrb[0].mxu0
        %1831 = vmatprep.mubr.f32.mxu0 0.0
        %v1832 = vand.u32 %v738, 4294901760
        %v1833 = vsub.f32 %v738, %v1832
        %v1834 = vand.u32 %v1833, 4294901760
        %v1835 = vsub.f32 %v1833, %v1834
        %v1836 = vand.u32 %v1835, 4294901760
        %1837 = vmatmul.mubr.f32.gmra.mrb[0].mxu0 %v1836
        %v1838 = vpop.f32.mrb[0].mxu0
        %v1839 = vadd.f32 0.0, %v1838
        %v1840 = vpop.f32.mrb[0].mxu0
        %1841 = vdwg.mxu0
        %1842 = vmatprep.subr.mxu0 0.0
        %v1843 = vand.u32 %v1746, 4294901760
        %v1844 = vsub.f32 %v1746, %v1843
        %v1845 = vand.u32 %v1844, 4294901760
        %v1846 = vsub.f32 %v1844, %v1845
        %v1847 = vand.u32 %v1846, 4294901760
        %1848 = vmatpush1.msra.mxu0 %v1847
        %1849 = vmatprep.subr.mxu0 0.0
        %v1850 = vand.u32 %v1752, 4294901760
        %v1851 = vsub.f32 %v1752, %v1850
        %v1852 = vand.u32 %v1851, 4294901760
        %v1853 = vsub.f32 %v1851, %v1852
        %v1854 = vand.u32 %v1853, 4294901760
        %1855 = vmatpush1.msra.mxu0 %v1854
        %1856 = vmatprep.subr.mxu0 0.0
        %1857 = vmatpush1.msra.mxu0 0.0
        %1858 = vmatprep.subr.mxu0 0.0
        %1859 = vmatpush1.msra.mxu0 0.0
        %1860 = vmatprep.subr.mxu0 0.0
        %1861 = vmatpush1.msra.mxu0 0.0
        %1862 = vmatprep.subr.mxu0 0.0
        %1863 = vmatpush1.msra.mxu0 0.0
        %1864 = vmatprep.subr.mxu0 0.0
        %1865 = vmatpush1.msra.mxu0 0.0
        %1866 = vmatprep.subr.mxu0 0.0
        %1867 = vmatpush1.msra.mxu0 0.0
        %1868 = vmatprep.subr.mxu0 0.0
        %1869 = vmatpush1.msra.mxu0 0.0
        %1870 = vmatprep.subr.mxu0 0.0
        %1871 = vmatpush1.msra.mxu0 0.0
        %1872 = vmatprep.subr.mxu0 0.0
        %1873 = vmatpush1.msra.mxu0 0.0
        %1874 = vmatprep.subr.mxu0 0.0
        %1875 = vmatpush1.msra.mxu0 0.0
        %1876 = vmatprep.subr.mxu0 0.0
        %1877 = vmatpush1.msra.mxu0 0.0
        %1878 = vmatprep.subr.mxu0 0.0
        %1879 = vmatpush1.msra.mxu0 0.0
        %1880 = vmatprep.subr.mxu0 0.0
        %1881 = vmatpush1.msra.mxu0 0.0
        %1882 = vmatprep.subr.mxu0 0.0
        %1883 = vmatpush1.msra.mxu0 0.0
        %1884 = vmatprep.subr.mxu0 0.0
        %1885 = vmatpush1.msra.mxu0 0.0
        %1886 = vmatprep.subr.mxu0 0.0
        %1887 = vmatpush1.msra.mxu0 0.0
        %1888 = vmatprep.subr.mxu0 0.0
        %1889 = vmatpush1.msra.mxu0 0.0
        %1890 = vmatprep.subr.mxu0 0.0
        %1891 = vmatpush1.msra.mxu0 0.0
        %1892 = vmatprep.subr.mxu0 0.0
        %1893 = vmatpush1.msra.mxu0 0.0
        %1894 = vmatprep.subr.mxu0 0.0
        %1895 = vmatpush1.msra.mxu0 0.0
        %1896 = vmatprep.subr.mxu0 0.0
        %1897 = vmatpush1.msra.mxu0 0.0
        %1898 = vmatprep.subr.mxu0 0.0
        %1899 = vmatpush1.msra.mxu0 0.0
        %1900 = vmatprep.subr.mxu0 0.0
        %1901 = vmatpush1.msra.mxu0 0.0
        %1902 = vmatprep.subr.mxu0 0.0
        %1903 = vmatpush1.msra.mxu0 0.0
        %1904 = vmatprep.subr.mxu0 0.0
        %1905 = vmatpush1.msra.mxu0 0.0
        %1906 = vmatprep.subr.mxu0 0.0
        %1907 = vmatpush1.msra.mxu0 0.0
        %1908 = vmatprep.subr.mxu0 0.0
        %1909 = vmatpush1.msra.mxu0 0.0
        %1910 = vmatprep.subr.mxu0 0.0
        %1911 = vmatpush1.msra.mxu0 0.0
        %1912 = vmatprep.subr.mxu0 0.0
        %1913 = vmatpush1.msra.mxu0 0.0
        %1914 = vmatprep.subr.mxu0 0.0
        %1915 = vmatpush1.msra.mxu0 0.0
        %1916 = vmatprep.mubr.f32.mxu0 0.0
        %v1917 = vand.u32 %v735, 4294901760
        %1918 = vmatmul.mubr.f32.gmra.mrb[0].mxu0 %v1917
        %v1919 = vpop.f32.mrb[0].mxu0
        %v1920 = vadd.f32 %v1829, %v1919
        %v1921 = vpop.f32.mrb[0].mxu0
        %1922 = vmatprep.mubr.f32.mxu0 0.0
        %v1923 = vand.u32 %v738, 4294901760
        %1924 = vmatmul.mubr.f32.gmra.mrb[0].mxu0 %v1923
        %v1925 = vpop.f32.mrb[0].mxu0
        %v1926 = vadd.f32 %v1839, %v1925
        %v1927 = vpop.f32.mrb[0].mxu0
        %1928 = vdwg.mxu0
        %1929 = vmatprep.subr.mxu0 0.0
        %v1930 = vand.u32 %v1746, 4294901760
        %v1931 = vsub.f32 %v1746, %v1930
        %1932 = vmatpush1.msra.mxu0 %v1931
        %1933 = vmatprep.subr.mxu0 0.0
        %v1934 = vand.u32 %v1752, 4294901760
        %v1935 = vsub.f32 %v1752, %v1934
        %1936 = vmatpush1.msra.mxu0 %v1935
        %1937 = vmatprep.subr.mxu0 0.0
        %1938 = vmatpush1.msra.mxu0 0.0
        %1939 = vmatprep.subr.mxu0 0.0
        %1940 = vmatpush1.msra.mxu0 0.0
        %1941 = vmatprep.subr.mxu0 0.0
        %1942 = vmatpush1.msra.mxu0 0.0
        %1943 = vmatprep.subr.mxu0 0.0
        %1944 = vmatpush1.msra.mxu0 0.0
        %1945 = vmatprep.subr.mxu0 0.0
        %1946 = vmatpush1.msra.mxu0 0.0
        %1947 = vmatprep.subr.mxu0 0.0
        %1948 = vmatpush1.msra.mxu0 0.0
        %1949 = vmatprep.subr.mxu0 0.0
        %1950 = vmatpush1.msra.mxu0 0.0
        %1951 = vmatprep.subr.mxu0 0.0
        %1952 = vmatpush1.msra.mxu0 0.0
        %1953 = vmatprep.subr.mxu0 0.0
        %1954 = vmatpush1.msra.mxu0 0.0
        %1955 = vmatprep.subr.mxu0 0.0
        %1956 = vmatpush1.msra.mxu0 0.0
        %1957 = vmatprep.subr.mxu0 0.0
        %1958 = vmatpush1.msra.mxu0 0.0
        %1959 = vmatprep.subr.mxu0 0.0
        %1960 = vmatpush1.msra.mxu0 0.0
        %1961 = vmatprep.subr.mxu0 0.0
        %1962 = vmatpush1.msra.mxu0 0.0
        %1963 = vmatprep.subr.mxu0 0.0
        %1964 = vmatpush1.msra.mxu0 0.0
        %1965 = vmatprep.subr.mxu0 0.0
        %1966 = vmatpush1.msra.mxu0 0.0
        %1967 = vmatprep.subr.mxu0 0.0
        %1968 = vmatpush1.msra.mxu0 0.0
        %1969 = vmatprep.subr.mxu0 0.0
        %1970 = vmatpush1.msra.mxu0 0.0
        %1971 = vmatprep.subr.mxu0 0.0
        %1972 = vmatpush1.msra.mxu0 0.0
        %1973 = vmatprep.subr.mxu0 0.0
        %1974 = vmatpush1.msra.mxu0 0.0
        %1975 = vmatprep.subr.mxu0 0.0
        %1976 = vmatpush1.msra.mxu0 0.0
        %1977 = vmatprep.subr.mxu0 0.0
        %1978 = vmatpush1.msra.mxu0 0.0
        %1979 = vmatprep.subr.mxu0 0.0
        %1980 = vmatpush1.msra.mxu0 0.0
        %1981 = vmatprep.subr.mxu0 0.0
        %1982 = vmatpush1.msra.mxu0 0.0
        %1983 = vmatprep.subr.mxu0 0.0
        %1984 = vmatpush1.msra.mxu0 0.0
        %1985 = vmatprep.subr.mxu0 0.0
        %1986 = vmatpush1.msra.mxu0 0.0
        %1987 = vmatprep.subr.mxu0 0.0
        %1988 = vmatpush1.msra.mxu0 0.0
        %1989 = vmatprep.subr.mxu0 0.0
        %1990 = vmatpush1.msra.mxu0 0.0
        %1991 = vmatprep.subr.mxu0 0.0
        %1992 = vmatpush1.msra.mxu0 0.0
        %1993 = vmatprep.subr.mxu0 0.0
        %1994 = vmatpush1.msra.mxu0 0.0
        %1995 = vmatprep.subr.mxu0 0.0
        %1996 = vmatpush1.msra.mxu0 0.0
        %1997 = vmatprep.mubr.f32.mxu0 0.0
        %v1998 = vand.u32 %v735, 4294901760
        %v1999 = vsub.f32 %v735, %v1998
        %2000 = vmatmul.mubr.f32.gmra.mrb[0].mxu0 %v1999
        %v2001 = vpop.f32.mrb[0].mxu0
        %v2002 = vadd.f32 %v1920, %v2001
        %v2003 = vpop.f32.mrb[0].mxu0
        %2004 = vmatprep.mubr.f32.mxu0 0.0
        %v2005 = vand.u32 %v738, 4294901760
        %v2006 = vsub.f32 %v738, %v2005
        %2007 = vmatmul.mubr.f32.gmra.mrb[0].mxu0 %v2006
        %v2008 = vpop.f32.mrb[0].mxu0
        %v2009 = vadd.f32 %v1926, %v2008
        %v2010 = vpop.f32.mrb[0].mxu0
        %2011 = vdwg.mxu0
        %2012 = vmatprep.subr.mxu0 0.0
        %v2013 = vand.u32 %v1746, 4294901760
        %2014 = vmatpush1.msra.mxu0 %v2013
        %2015 = vmatprep.subr.mxu0 0.0
        %v2016 = vand.u32 %v1752, 4294901760
        %2017 = vmatpush1.msra.mxu0 %v2016
        %2018 = vmatprep.subr.mxu0 0.0
        %2019 = vmatpush1.msra.mxu0 0.0
        %2020 = vmatprep.subr.mxu0 0.0
        %2021 = vmatpush1.msra.mxu0 0.0
        %2022 = vmatprep.subr.mxu0 0.0
        %2023 = vmatpush1.msra.mxu0 0.0
        %2024 = vmatprep.subr.mxu0 0.0
        %2025 = vmatpush1.msra.mxu0 0.0
        %2026 = vmatprep.subr.mxu0 0.0
        %2027 = vmatpush1.msra.mxu0 0.0
        %2028 = vmatprep.subr.mxu0 0.0
        %2029 = vmatpush1.msra.mxu0 0.0
        %2030 = vmatprep.subr.mxu0 0.0
        %2031 = vmatpush1.msra.mxu0 0.0
        %2032 = vmatprep.subr.mxu0 0.0
        %2033 = vmatpush1.msra.mxu0 0.0
        %2034 = vmatprep.subr.mxu0 0.0
        %2035 = vmatpush1.msra.mxu0 0.0
        %2036 = vmatprep.subr.mxu0 0.0
        %2037 = vmatpush1.msra.mxu0 0.0
        %2038 = vmatprep.subr.mxu0 0.0
        %2039 = vmatpush1.msra.mxu0 0.0
        %2040 = vmatprep.subr.mxu0 0.0
        %2041 = vmatpush1.msra.mxu0 0.0
        %2042 = vmatprep.subr.mxu0 0.0
        %2043 = vmatpush1.msra.mxu0 0.0
        %2044 = vmatprep.subr.mxu0 0.0
        %2045 = vmatpush1.msra.mxu0 0.0
        %2046 = vmatprep.subr.mxu0 0.0
        %2047 = vmatpush1.msra.mxu0 0.0
        %2048 = vmatprep.subr.mxu0 0.0
        %2049 = vmatpush1.msra.mxu0 0.0
        %2050 = vmatprep.subr.mxu0 0.0
        %2051 = vmatpush1.msra.mxu0 0.0
        %2052 = vmatprep.subr.mxu0 0.0
        %2053 = vmatpush1.msra.mxu0 0.0
        %2054 = vmatprep.subr.mxu0 0.0
        %2055 = vmatpush1.msra.mxu0 0.0
        %2056 = vmatprep.subr.mxu0 0.0
        %2057 = vmatpush1.msra.mxu0 0.0
        %2058 = vmatprep.subr.mxu0 0.0
        %2059 = vmatpush1.msra.mxu0 0.0
        %2060 = vmatprep.subr.mxu0 0.0
        %2061 = vmatpush1.msra.mxu0 0.0
        %2062 = vmatprep.subr.mxu0 0.0
        %2063 = vmatpush1.msra.mxu0 0.0
        %2064 = vmatprep.subr.mxu0 0.0
        %2065 = vmatpush1.msra.mxu0 0.0
        %2066 = vmatprep.subr.mxu0 0.0
        %2067 = vmatpush1.msra.mxu0 0.0
        %2068 = vmatprep.subr.mxu0 0.0
        %2069 = vmatpush1.msra.mxu0 0.0
        %2070 = vmatprep.subr.mxu0 0.0
        %2071 = vmatpush1.msra.mxu0 0.0
        %2072 = vmatprep.subr.mxu0 0.0
        %2073 = vmatpush1.msra.mxu0 0.0
        %2074 = vmatprep.subr.mxu0 0.0
        %2075 = vmatpush1.msra.mxu0 0.0
        %2076 = vmatprep.subr.mxu0 0.0
        %2077 = vmatpush1.msra.mxu0 0.0
        %2078 = vmatprep.mubr.f32.mxu0 0.0
        %v2079 = vand.u32 %v735, 4294901760
        %v2080 = vsub.f32 %v735, %v2079
        %v2081 = vand.u32 %v2080, 4294901760
        %2082 = vmatmul.mubr.f32.gmra.mrb[0].mxu0 %v2081
        %v2083 = vpop.f32.mrb[0].mxu0
        %v2084 = vadd.f32 %v2002, %v2083
        %v2085 = vpop.f32.mrb[0].mxu0
        %2086 = vmatprep.mubr.f32.mxu0 0.0
        %v2087 = vand.u32 %v738, 4294901760
        %v2088 = vsub.f32 %v738, %v2087
        %v2089 = vand.u32 %v2088, 4294901760
        %2090 = vmatmul.mubr.f32.gmra.mrb[0].mxu0 %v2089
        %v2091 = vpop.f32.mrb[0].mxu0
        %v2092 = vadd.f32 %v2009, %v2091
        %v2093 = vpop.f32.mrb[0].mxu0
        %2094 = vdwg.mxu0
        %2095 = vmatprep.subr.mxu0 0.0
        %v2096 = vand.u32 %v1746, 4294901760
        %v2097 = vsub.f32 %v1746, %v2096
        %v2098 = vand.u32 %v2097, 4294901760
        %2099 = vmatpush1.msra.mxu0 %v2098
        %2100 = vmatprep.subr.mxu0 0.0
        %v2101 = vand.u32 %v1752, 4294901760
        %v2102 = vsub.f32 %v1752, %v2101
        %v2103 = vand.u32 %v2102, 4294901760
        %2104 = vmatpush1.msra.mxu0 %v2103
        %2105 = vmatprep.subr.mxu0 0.0
        %2106 = vmatpush1.msra.mxu0 0.0
        %2107 = vmatprep.subr.mxu0 0.0
        %2108 = vmatpush1.msra.mxu0 0.0
        %2109 = vmatprep.subr.mxu0 0.0
        %2110 = vmatpush1.msra.mxu0 0.0
        %2111 = vmatprep.subr.mxu0 0.0
        %2112 = vmatpush1.msra.mxu0 0.0
        %2113 = vmatprep.subr.mxu0 0.0
        %2114 = vmatpush1.msra.mxu0 0.0
        %2115 = vmatprep.subr.mxu0 0.0
        %2116 = vmatpush1.msra.mxu0 0.0
        %2117 = vmatprep.subr.mxu0 0.0
        %2118 = vmatpush1.msra.mxu0 0.0
        %2119 = vmatprep.subr.mxu0 0.0
        %2120 = vmatpush1.msra.mxu0 0.0
        %2121 = vmatprep.subr.mxu0 0.0
        %2122 = vmatpush1.msra.mxu0 0.0
        %2123 = vmatprep.subr.mxu0 0.0
        %2124 = vmatpush1.msra.mxu0 0.0
        %2125 = vmatprep.subr.mxu0 0.0
        %2126 = vmatpush1.msra.mxu0 0.0
        %2127 = vmatprep.subr.mxu0 0.0
        %2128 = vmatpush1.msra.mxu0 0.0
        %2129 = vmatprep.subr.mxu0 0.0
        %2130 = vmatpush1.msra.mxu0 0.0
        %2131 = vmatprep.subr.mxu0 0.0
        %2132 = vmatpush1.msra.mxu0 0.0
        %2133 = vmatprep.subr.mxu0 0.0
        %2134 = vmatpush1.msra.mxu0 0.0
        %2135 = vmatprep.subr.mxu0 0.0
        %2136 = vmatpush1.msra.mxu0 0.0
        %2137 = vmatprep.subr.mxu0 0.0
        %2138 = vmatpush1.msra.mxu0 0.0
        %2139 = vmatprep.subr.mxu0 0.0
        %2140 = vmatpush1.msra.mxu0 0.0
        %2141 = vmatprep.subr.mxu0 0.0
        %2142 = vmatpush1.msra.mxu0 0.0
        %2143 = vmatprep.subr.mxu0 0.0
        %2144 = vmatpush1.msra.mxu0 0.0
        %2145 = vmatprep.subr.mxu0 0.0
        %2146 = vmatpush1.msra.mxu0 0.0
        %2147 = vmatprep.subr.mxu0 0.0
        %2148 = vmatpush1.msra.mxu0 0.0
        %2149 = vmatprep.subr.mxu0 0.0
        %2150 = vmatpush1.msra.mxu0 0.0
        %2151 = vmatprep.subr.mxu0 0.0
        %2152 = vmatpush1.msra.mxu0 0.0
        %2153 = vmatprep.subr.mxu0 0.0
        %2154 = vmatpush1.msra.mxu0 0.0
        %2155 = vmatprep.subr.mxu0 0.0
        %2156 = vmatpush1.msra.mxu0 0.0
        %2157 = vmatprep.subr.mxu0 0.0
        %2158 = vmatpush1.msra.mxu0 0.0
        %2159 = vmatprep.subr.mxu0 0.0
        %2160 = vmatpush1.msra.mxu0 0.0
        %2161 = vmatprep.subr.mxu0 0.0
        %2162 = vmatpush1.msra.mxu0 0.0
        %2163 = vmatprep.subr.mxu0 0.0
        %2164 = vmatpush1.msra.mxu0 0.0
        %2165 = vmatprep.mubr.f32.mxu0 0.0
        %v2166 = vand.u32 %v735, 4294901760
        %2167 = vmatmul.mubr.f32.gmra.mrb[0].mxu0 %v2166
        %v2168 = vpop.f32.mrb[0].mxu0
        %v2169 = vadd.f32 %v2084, %v2168
        %v2170 = vpop.f32.mrb[0].mxu0
        %2171 = vmatprep.mubr.f32.mxu0 0.0
        %v2172 = vand.u32 %v738, 4294901760
        %2173 = vmatmul.mubr.f32.gmra.mrb[0].mxu0 %v2172
        %v2174 = vpop.f32.mrb[0].mxu0
        %v2175 = vadd.f32 %v2092, %v2174
        %v2176 = vpop.f32.mrb[0].mxu0
        %2177 = vdwg.mxu0
        %2178 = vmatprep.subr.mxu0 0.0
        %v2179 = vand.u32 %v1746, 4294901760
        %2180 = vmatpush1.msra.mxu0 %v2179
        %2181 = vmatprep.subr.mxu0 0.0
        %v2182 = vand.u32 %v1752, 4294901760
        %2183 = vmatpush1.msra.mxu0 %v2182
        %2184 = vmatprep.subr.mxu0 0.0
        %2185 = vmatpush1.msra.mxu0 0.0
        %2186 = vmatprep.subr.mxu0 0.0
        %2187 = vmatpush1.msra.mxu0 0.0
        %2188 = vmatprep.subr.mxu0 0.0
        %2189 = vmatpush1.msra.mxu0 0.0
        %2190 = vmatprep.subr.mxu0 0.0
        %2191 = vmatpush1.msra.mxu0 0.0
        %2192 = vmatprep.subr.mxu0 0.0
        %2193 = vmatpush1.msra.mxu0 0.0
        %2194 = vmatprep.subr.mxu0 0.0
        %2195 = vmatpush1.msra.mxu0 0.0
        %2196 = vmatprep.subr.mxu0 0.0
        %2197 = vmatpush1.msra.mxu0 0.0
        %2198 = vmatprep.subr.mxu0 0.0
        %2199 = vmatpush1.msra.mxu0 0.0
        %2200 = vmatprep.subr.mxu0 0.0
        %2201 = vmatpush1.msra.mxu0 0.0
        %2202 = vmatprep.subr.mxu0 0.0
        %2203 = vmatpush1.msra.mxu0 0.0
        %2204 = vmatprep.subr.mxu0 0.0
        %2205 = vmatpush1.msra.mxu0 0.0
        %2206 = vmatprep.subr.mxu0 0.0
        %2207 = vmatpush1.msra.mxu0 0.0
        %2208 = vmatprep.subr.mxu0 0.0
        %2209 = vmatpush1.msra.mxu0 0.0
        %2210 = vmatprep.subr.mxu0 0.0
        %2211 = vmatpush1.msra.mxu0 0.0
        %2212 = vmatprep.subr.mxu0 0.0
        %2213 = vmatpush1.msra.mxu0 0.0
        %2214 = vmatprep.subr.mxu0 0.0
        %2215 = vmatpush1.msra.mxu0 0.0
        %2216 = vmatprep.subr.mxu0 0.0
        %2217 = vmatpush1.msra.mxu0 0.0
        %2218 = vmatprep.subr.mxu0 0.0
        %2219 = vmatpush1.msra.mxu0 0.0
        %2220 = vmatprep.subr.mxu0 0.0
        %2221 = vmatpush1.msra.mxu0 0.0
        %2222 = vmatprep.subr.mxu0 0.0
        %2223 = vmatpush1.msra.mxu0 0.0
        %2224 = vmatprep.subr.mxu0 0.0
        %2225 = vmatpush1.msra.mxu0 0.0
        %2226 = vmatprep.subr.mxu0 0.0
        %2227 = vmatpush1.msra.mxu0 0.0
        %2228 = vmatprep.subr.mxu0 0.0
        %2229 = vmatpush1.msra.mxu0 0.0
        %2230 = vmatprep.subr.mxu0 0.0
        %2231 = vmatpush1.msra.mxu0 0.0
        %2232 = vmatprep.subr.mxu0 0.0
        %2233 = vmatpush1.msra.mxu0 0.0
        %2234 = vmatprep.subr.mxu0 0.0
        %2235 = vmatpush1.msra.mxu0 0.0
        %2236 = vmatprep.subr.mxu0 0.0
        %2237 = vmatpush1.msra.mxu0 0.0
        %2238 = vmatprep.subr.mxu0 0.0
        %2239 = vmatpush1.msra.mxu0 0.0
        %2240 = vmatprep.subr.mxu0 0.0
        %2241 = vmatpush1.msra.mxu0 0.0
        %2242 = vmatprep.subr.mxu0 0.0
        %2243 = vmatpush1.msra.mxu0 0.0
        %2244 = vmatprep.mubr.f32.mxu0 0.0
        %v2245 = vand.u32 %v735, 4294901760
        %2246 = vmatmul.mubr.f32.gmra.mrb[0].mxu0 %v2245
        %v2247 = vpop.f32.mrb[0].mxu0
        %v2248 = vadd.f32 %v2169, %v2247
        %v2249 = vpop.f32.mrb[0].mxu0
        %2250 = vmatprep.mubr.f32.mxu0 0.0
        %v2251 = vand.u32 %v738, 4294901760
        %2252 = vmatmul.mubr.f32.gmra.mrb[0].mxu0 %v2251
        %v2253 = vpop.f32.mrb[0].mxu0
        %v2254 = vadd.f32 %v2175, %v2253
        %v2255 = vpop.f32.mrb[0].mxu0
        %2256 = vdwg.mxu0
        %s2257 = scalar_lea.vmem %s216, 16 [#allocation8]
        %2258 = vst.msk [vmem:[%s2257] sm:$0xff] %vm225, %v2248
        %2259 = vst.msk [vmem:[%s2257 + $0x8] sm:$0xff] %vm225, %v2254
        %s2260 = scalar_lea.vmem %s194, 32 [#allocation7]
        %v2261 = vld [vmem:[%s2260] sm:$0xff]
        %v2262 = vld [vmem:[%s2260 + $0x8] sm:$0xff]
        %v2264 = vsel %vm225, %v2261, 0
        %v2267 = vsel %vm225, %v2262, 0
        %2269 = vmatprep.subr.mxu0 0.0
        %v2270 = vand.u32 %v221, 4294901760
        %2271 = vmatpush1.msra.mxu0 %v2270
        %2272 = vmatprep.subr.mxu0 0.0
        %v2273 = vand.u32 %v222, 4294901760
        %2274 = vmatpush1.msra.mxu0 %v2273
        %2275 = vmatprep.subr.mxu0 0.0
        %2276 = vmatpush1.msra.mxu0 0.0
        %2277 = vmatprep.subr.mxu0 0.0
        %2278 = vmatpush1.msra.mxu0 0.0
        %2279 = vmatprep.subr.mxu0 0.0
        %2280 = vmatpush1.msra.mxu0 0.0
        %2281 = vmatprep.subr.mxu0 0.0
        %2282 = vmatpush1.msra.mxu0 0.0
        %2283 = vmatprep.subr.mxu0 0.0
        %2284 = vmatpush1.msra.mxu0 0.0
        %2285 = vmatprep.subr.mxu0 0.0
        %2286 = vmatpush1.msra.mxu0 0.0
        %2287 = vmatprep.subr.mxu0 0.0
        %2288 = vmatpush1.msra.mxu0 0.0
        %2289 = vmatprep.subr.mxu0 0.0
        %2290 = vmatpush1.msra.mxu0 0.0
        %2291 = vmatprep.subr.mxu0 0.0
        %2292 = vmatpush1.msra.mxu0 0.0
        %2293 = vmatprep.subr.mxu0 0.0
        %2294 = vmatpush1.msra.mxu0 0.0
        %2295 = vmatprep.subr.mxu0 0.0
        %2296 = vmatpush1.msra.mxu0 0.0
        %2297 = vmatprep.subr.mxu0 0.0
        %2298 = vmatpush1.msra.mxu0 0.0
        %2299 = vmatprep.subr.mxu0 0.0
        %2300 = vmatpush1.msra.mxu0 0.0
        %2301 = vmatprep.subr.mxu0 0.0
        %2302 = vmatpush1.msra.mxu0 0.0
        %2303 = vmatprep.subr.mxu0 0.0
        %2304 = vmatpush1.msra.mxu0 0.0
        %2305 = vmatprep.subr.mxu0 0.0
        %2306 = vmatpush1.msra.mxu0 0.0
        %2307 = vmatprep.subr.mxu0 0.0
        %2308 = vmatpush1.msra.mxu0 0.0
        %2309 = vmatprep.subr.mxu0 0.0
        %2310 = vmatpush1.msra.mxu0 0.0
        %2311 = vmatprep.subr.mxu0 0.0
        %2312 = vmatpush1.msra.mxu0 0.0
        %2313 = vmatprep.subr.mxu0 0.0
        %2314 = vmatpush1.msra.mxu0 0.0
        %2315 = vmatprep.subr.mxu0 0.0
        %2316 = vmatpush1.msra.mxu0 0.0
        %2317 = vmatprep.subr.mxu0 0.0
        %2318 = vmatpush1.msra.mxu0 0.0
        %2319 = vmatprep.subr.mxu0 0.0
        %2320 = vmatpush1.msra.mxu0 0.0
        %2321 = vmatprep.subr.mxu0 0.0
        %2322 = vmatpush1.msra.mxu0 0.0
        %2323 = vmatprep.subr.mxu0 0.0
        %2324 = vmatpush1.msra.mxu0 0.0
        %2325 = vmatprep.subr.mxu0 0.0
        %2326 = vmatpush1.msra.mxu0 0.0
        %2327 = vmatprep.subr.mxu0 0.0
        %2328 = vmatpush1.msra.mxu0 0.0
        %2329 = vmatprep.subr.mxu0 0.0
        %2330 = vmatpush1.msra.mxu0 0.0
        %2331 = vmatprep.subr.mxu0 0.0
        %2332 = vmatpush1.msra.mxu0 0.0
        %2333 = vmatprep.subr.mxu0 0.0
        %2334 = vmatpush1.msra.mxu0 0.0
        %2335 = vmatprep.mubr.f32.mxu0 0.0
        %v2336 = vand.u32 %v2264, 4294901760
        %v2337 = vsub.f32 %v2264, %v2336
        %v2338 = vand.u32 %v2337, 4294901760
        %v2339 = vsub.f32 %v2337, %v2338
        %v2340 = vand.u32 %v2339, 4294901760
        %2341 = vmatmul.mubr.f32.gmra.mrb[0].mxu0 %v2340
        %v2342 = vpop.f32.mrb[0].mxu0
        %v2343 = vadd.f32 0.0, %v2342
        %v2344 = vpop.f32.mrb[0].mxu0
        %2345 = vmatprep.mubr.f32.mxu0 0.0
        %v2346 = vand.u32 %v2267, 4294901760
        %v2347 = vsub.f32 %v2267, %v2346
        %v2348 = vand.u32 %v2347, 4294901760
        %v2349 = vsub.f32 %v2347, %v2348
        %v2350 = vand.u32 %v2349, 4294901760
        %2351 = vmatmul.mubr.f32.gmra.mrb[0].mxu0 %v2350
        %v2352 = vpop.f32.mrb[0].mxu0
        %v2353 = vadd.f32 0.0, %v2352
        %v2354 = vpop.f32.mrb[0].mxu0
        %2355 = vdwg.mxu0
        %2356 = vmatprep.subr.mxu0 0.0
        %v2357 = vand.u32 %v221, 4294901760
        %v2358 = vsub.f32 %v221, %v2357
        %v2359 = vand.u32 %v2358, 4294901760
        %v2360 = vsub.f32 %v2358, %v2359
        %v2361 = vand.u32 %v2360, 4294901760
        %2362 = vmatpush1.msra.mxu0 %v2361
        %2363 = vmatprep.subr.mxu0 0.0
        %v2364 = vand.u32 %v222, 4294901760
        %v2365 = vsub.f32 %v222, %v2364
        %v2366 = vand.u32 %v2365, 4294901760
        %v2367 = vsub.f32 %v2365, %v2366
        %v2368 = vand.u32 %v2367, 4294901760
        %2369 = vmatpush1.msra.mxu0 %v2368
        %2370 = vmatprep.subr.mxu0 0.0
        %2371 = vmatpush1.msra.mxu0 0.0
        %2372 = vmatprep.subr.mxu0 0.0
        %2373 = vmatpush1.msra.mxu0 0.0
        %2374 = vmatprep.subr.mxu0 0.0
        %2375 = vmatpush1.msra.mxu0 0.0
        %2376 = vmatprep.subr.mxu0 0.0
        %2377 = vmatpush1.msra.mxu0 0.0
        %2378 = vmatprep.subr.mxu0 0.0
        %2379 = vmatpush1.msra.mxu0 0.0
        %2380 = vmatprep.subr.mxu0 0.0
        %2381 = vmatpush1.msra.mxu0 0.0
        %2382 = vmatprep.subr.mxu0 0.0
        %2383 = vmatpush1.msra.mxu0 0.0
        %2384 = vmatprep.subr.mxu0 0.0
        %2385 = vmatpush1.msra.mxu0 0.0
        %2386 = vmatprep.subr.mxu0 0.0
        %2387 = vmatpush1.msra.mxu0 0.0
        %2388 = vmatprep.subr.mxu0 0.0
        %2389 = vmatpush1.msra.mxu0 0.0
        %2390 = vmatprep.subr.mxu0 0.0
        %2391 = vmatpush1.msra.mxu0 0.0
        %2392 = vmatprep.subr.mxu0 0.0
        %2393 = vmatpush1.msra.mxu0 0.0
        %2394 = vmatprep.subr.mxu0 0.0
        %2395 = vmatpush1.msra.mxu0 0.0
        %2396 = vmatprep.subr.mxu0 0.0
        %2397 = vmatpush1.msra.mxu0 0.0
        %2398 = vmatprep.subr.mxu0 0.0
        %2399 = vmatpush1.msra.mxu0 0.0
        %2400 = vmatprep.subr.mxu0 0.0
        %2401 = vmatpush1.msra.mxu0 0.0
        %2402 = vmatprep.subr.mxu0 0.0
        %2403 = vmatpush1.msra.mxu0 0.0
        %2404 = vmatprep.subr.mxu0 0.0
        %2405 = vmatpush1.msra.mxu0 0.0
        %2406 = vmatprep.subr.mxu0 0.0
        %2407 = vmatpush1.msra.mxu0 0.0
        %2408 = vmatprep.subr.mxu0 0.0
        %2409 = vmatpush1.msra.mxu0 0.0
        %2410 = vmatprep.subr.mxu0 0.0
        %2411 = vmatpush1.msra.mxu0 0.0
        %2412 = vmatprep.subr.mxu0 0.0
        %2413 = vmatpush1.msra.mxu0 0.0
        %2414 = vmatprep.subr.mxu0 0.0
        %2415 = vmatpush1.msra.mxu0 0.0
        %2416 = vmatprep.subr.mxu0 0.0
        %2417 = vmatpush1.msra.mxu0 0.0
        %2418 = vmatprep.subr.mxu0 0.0
        %2419 = vmatpush1.msra.mxu0 0.0
        %2420 = vmatprep.subr.mxu0 0.0
        %2421 = vmatpush1.msra.mxu0 0.0
        %2422 = vmatprep.subr.mxu0 0.0
        %2423 = vmatpush1.msra.mxu0 0.0
        %2424 = vmatprep.subr.mxu0 0.0
        %2425 = vmatpush1.msra.mxu0 0.0
        %2426 = vmatprep.subr.mxu0 0.0
        %2427 = vmatpush1.msra.mxu0 0.0
        %2428 = vmatprep.subr.mxu0 0.0
        %2429 = vmatpush1.msra.mxu0 0.0
        %2430 = vmatprep.mubr.f32.mxu0 0.0
        %v2431 = vand.u32 %v2264, 4294901760
        %2432 = vmatmul.mubr.f32.gmra.mrb[0].mxu0 %v2431
        %v2433 = vpop.f32.mrb[0].mxu0
        %v2434 = vadd.f32 %v2343, %v2433
        %v2435 = vpop.f32.mrb[0].mxu0
        %2436 = vmatprep.mubr.f32.mxu0 0.0
        %v2437 = vand.u32 %v2267, 4294901760
        %2438 = vmatmul.mubr.f32.gmra.mrb[0].mxu0 %v2437
        %v2439 = vpop.f32.mrb[0].mxu0
        %v2440 = vadd.f32 %v2353, %v2439
        %v2441 = vpop.f32.mrb[0].mxu0
        %2442 = vdwg.mxu0
        %2443 = vmatprep.subr.mxu0 0.0
        %v2444 = vand.u32 %v221, 4294901760
        %v2445 = vsub.f32 %v221, %v2444
        %2446 = vmatpush1.msra.mxu0 %v2445
        %2447 = vmatprep.subr.mxu0 0.0
        %v2448 = vand.u32 %v222, 4294901760
        %v2449 = vsub.f32 %v222, %v2448
        %2450 = vmatpush1.msra.mxu0 %v2449
        %2451 = vmatprep.subr.mxu0 0.0
        %2452 = vmatpush1.msra.mxu0 0.0
        %2453 = vmatprep.subr.mxu0 0.0
        %2454 = vmatpush1.msra.mxu0 0.0
        %2455 = vmatprep.subr.mxu0 0.0
        %2456 = vmatpush1.msra.mxu0 0.0
        %2457 = vmatprep.subr.mxu0 0.0
        %2458 = vmatpush1.msra.mxu0 0.0
        %2459 = vmatprep.subr.mxu0 0.0
        %2460 = vmatpush1.msra.mxu0 0.0
        %2461 = vmatprep.subr.mxu0 0.0
        %2462 = vmatpush1.msra.mxu0 0.0
        %2463 = vmatprep.subr.mxu0 0.0
        %2464 = vmatpush1.msra.mxu0 0.0
        %2465 = vmatprep.subr.mxu0 0.0
        %2466 = vmatpush1.msra.mxu0 0.0
        %2467 = vmatprep.subr.mxu0 0.0
        %2468 = vmatpush1.msra.mxu0 0.0
        %2469 = vmatprep.subr.mxu0 0.0
        %2470 = vmatpush1.msra.mxu0 0.0
        %2471 = vmatprep.subr.mxu0 0.0
        %2472 = vmatpush1.msra.mxu0 0.0
        %2473 = vmatprep.subr.mxu0 0.0
        %2474 = vmatpush1.msra.mxu0 0.0
        %2475 = vmatprep.subr.mxu0 0.0
        %2476 = vmatpush1.msra.mxu0 0.0
        %2477 = vmatprep.subr.mxu0 0.0
        %2478 = vmatpush1.msra.mxu0 0.0
        %2479 = vmatprep.subr.mxu0 0.0
        %2480 = vmatpush1.msra.mxu0 0.0
        %2481 = vmatprep.subr.mxu0 0.0
        %2482 = vmatpush1.msra.mxu0 0.0
        %2483 = vmatprep.subr.mxu0 0.0
        %2484 = vmatpush1.msra.mxu0 0.0
        %2485 = vmatprep.subr.mxu0 0.0
        %2486 = vmatpush1.msra.mxu0 0.0
        %2487 = vmatprep.subr.mxu0 0.0
        %2488 = vmatpush1.msra.mxu0 0.0
        %2489 = vmatprep.subr.mxu0 0.0
        %2490 = vmatpush1.msra.mxu0 0.0
        %2491 = vmatprep.subr.mxu0 0.0
        %2492 = vmatpush1.msra.mxu0 0.0
        %2493 = vmatprep.subr.mxu0 0.0
        %2494 = vmatpush1.msra.mxu0 0.0
        %2495 = vmatprep.subr.mxu0 0.0
        %2496 = vmatpush1.msra.mxu0 0.0
        %2497 = vmatprep.subr.mxu0 0.0
        %2498 = vmatpush1.msra.mxu0 0.0
        %2499 = vmatprep.subr.mxu0 0.0
        %2500 = vmatpush1.msra.mxu0 0.0
        %2501 = vmatprep.subr.mxu0 0.0
        %2502 = vmatpush1.msra.mxu0 0.0
        %2503 = vmatprep.subr.mxu0 0.0
        %2504 = vmatpush1.msra.mxu0 0.0
        %2505 = vmatprep.subr.mxu0 0.0
        %2506 = vmatpush1.msra.mxu0 0.0
        %2507 = vmatprep.subr.mxu0 0.0
        %2508 = vmatpush1.msra.mxu0 0.0
        %2509 = vmatprep.subr.mxu0 0.0
        %2510 = vmatpush1.msra.mxu0 0.0
        %2511 = vmatprep.mubr.f32.mxu0 0.0
        %v2512 = vand.u32 %v2264, 4294901760
        %v2513 = vsub.f32 %v2264, %v2512
        %2514 = vmatmul.mubr.f32.gmra.mrb[0].mxu0 %v2513
        %v2515 = vpop.f32.mrb[0].mxu0
        %v2516 = vadd.f32 %v2434, %v2515
        %v2517 = vpop.f32.mrb[0].mxu0
        %2518 = vmatprep.mubr.f32.mxu0 0.0
        %v2519 = vand.u32 %v2267, 4294901760
        %v2520 = vsub.f32 %v2267, %v2519
        %2521 = vmatmul.mubr.f32.gmra.mrb[0].mxu0 %v2520
        %v2522 = vpop.f32.mrb[0].mxu0
        %v2523 = vadd.f32 %v2440, %v2522
        %v2524 = vpop.f32.mrb[0].mxu0
        %2525 = vdwg.mxu0
        %2526 = vmatprep.subr.mxu0 0.0
        %v2527 = vand.u32 %v221, 4294901760
        %2528 = vmatpush1.msra.mxu0 %v2527
        %2529 = vmatprep.subr.mxu0 0.0
        %v2530 = vand.u32 %v222, 4294901760
        %2531 = vmatpush1.msra.mxu0 %v2530
        %2532 = vmatprep.subr.mxu0 0.0
        %2533 = vmatpush1.msra.mxu0 0.0
        %2534 = vmatprep.subr.mxu0 0.0
        %2535 = vmatpush1.msra.mxu0 0.0
        %2536 = vmatprep.subr.mxu0 0.0
        %2537 = vmatpush1.msra.mxu0 0.0
        %2538 = vmatprep.subr.mxu0 0.0
        %2539 = vmatpush1.msra.mxu0 0.0
        %2540 = vmatprep.subr.mxu0 0.0
        %2541 = vmatpush1.msra.mxu0 0.0
        %2542 = vmatprep.subr.mxu0 0.0
        %2543 = vmatpush1.msra.mxu0 0.0
        %2544 = vmatprep.subr.mxu0 0.0
        %2545 = vmatpush1.msra.mxu0 0.0
        %2546 = vmatprep.subr.mxu0 0.0
        %2547 = vmatpush1.msra.mxu0 0.0
        %2548 = vmatprep.subr.mxu0 0.0
        %2549 = vmatpush1.msra.mxu0 0.0
        %2550 = vmatprep.subr.mxu0 0.0
        %2551 = vmatpush1.msra.mxu0 0.0
        %2552 = vmatprep.subr.mxu0 0.0
        %2553 = vmatpush1.msra.mxu0 0.0
        %2554 = vmatprep.subr.mxu0 0.0
        %2555 = vmatpush1.msra.mxu0 0.0
        %2556 = vmatprep.subr.mxu0 0.0
        %2557 = vmatpush1.msra.mxu0 0.0
        %2558 = vmatprep.subr.mxu0 0.0
        %2559 = vmatpush1.msra.mxu0 0.0
        %2560 = vmatprep.subr.mxu0 0.0
        %2561 = vmatpush1.msra.mxu0 0.0
        %2562 = vmatprep.subr.mxu0 0.0
        %2563 = vmatpush1.msra.mxu0 0.0
        %2564 = vmatprep.subr.mxu0 0.0
        %2565 = vmatpush1.msra.mxu0 0.0
        %2566 = vmatprep.subr.mxu0 0.0
        %2567 = vmatpush1.msra.mxu0 0.0
        %2568 = vmatprep.subr.mxu0 0.0
        %2569 = vmatpush1.msra.mxu0 0.0
        %2570 = vmatprep.subr.mxu0 0.0
        %2571 = vmatpush1.msra.mxu0 0.0
        %2572 = vmatprep.subr.mxu0 0.0
        %2573 = vmatpush1.msra.mxu0 0.0
        %2574 = vmatprep.subr.mxu0 0.0
        %2575 = vmatpush1.msra.mxu0 0.0
        %2576 = vmatprep.subr.mxu0 0.0
        %2577 = vmatpush1.msra.mxu0 0.0
        %2578 = vmatprep.subr.mxu0 0.0
        %2579 = vmatpush1.msra.mxu0 0.0
        %2580 = vmatprep.subr.mxu0 0.0
        %2581 = vmatpush1.msra.mxu0 0.0
        %2582 = vmatprep.subr.mxu0 0.0
        %2583 = vmatpush1.msra.mxu0 0.0
        %2584 = vmatprep.subr.mxu0 0.0
        %2585 = vmatpush1.msra.mxu0 0.0
        %2586 = vmatprep.subr.mxu0 0.0
        %2587 = vmatpush1.msra.mxu0 0.0
        %2588 = vmatprep.subr.mxu0 0.0
        %2589 = vmatpush1.msra.mxu0 0.0
        %2590 = vmatprep.subr.mxu0 0.0
        %2591 = vmatpush1.msra.mxu0 0.0
        %2592 = vmatprep.mubr.f32.mxu0 0.0
        %v2593 = vand.u32 %v2264, 4294901760
        %v2594 = vsub.f32 %v2264, %v2593
        %v2595 = vand.u32 %v2594, 4294901760
        %2596 = vmatmul.mubr.f32.gmra.mrb[0].mxu0 %v2595
        %v2597 = vpop.f32.mrb[0].mxu0
        %v2598 = vadd.f32 %v2516, %v2597
        %v2599 = vpop.f32.mrb[0].mxu0
        %2600 = vmatprep.mubr.f32.mxu0 0.0
        %v2601 = vand.u32 %v2267, 4294901760
        %v2602 = vsub.f32 %v2267, %v2601
        %v2603 = vand.u32 %v2602, 4294901760
        %2604 = vmatmul.mubr.f32.gmra.mrb[0].mxu0 %v2603
        %v2605 = vpop.f32.mrb[0].mxu0
        %v2606 = vadd.f32 %v2523, %v2605
        %v2607 = vpop.f32.mrb[0].mxu0
        %2608 = vdwg.mxu0
        %2609 = vmatprep.subr.mxu0 0.0
        %v2610 = vand.u32 %v221, 4294901760
        %v2611 = vsub.f32 %v221, %v2610
        %v2612 = vand.u32 %v2611, 4294901760
        %2613 = vmatpush1.msra.mxu0 %v2612
        %2614 = vmatprep.subr.mxu0 0.0
        %v2615 = vand.u32 %v222, 4294901760
        %v2616 = vsub.f32 %v222, %v2615
        %v2617 = vand.u32 %v2616, 4294901760
        %2618 = vmatpush1.msra.mxu0 %v2617
        %2619 = vmatprep.subr.mxu0 0.0
        %2620 = vmatpush1.msra.mxu0 0.0
        %2621 = vmatprep.subr.mxu0 0.0
        %2622 = vmatpush1.msra.mxu0 0.0
        %2623 = vmatprep.subr.mxu0 0.0
        %2624 = vmatpush1.msra.mxu0 0.0
        %2625 = vmatprep.subr.mxu0 0.0
        %2626 = vmatpush1.msra.mxu0 0.0
        %2627 = vmatprep.subr.mxu0 0.0
        %2628 = vmatpush1.msra.mxu0 0.0
        %2629 = vmatprep.subr.mxu0 0.0
        %2630 = vmatpush1.msra.mxu0 0.0
        %2631 = vmatprep.subr.mxu0 0.0
        %2632 = vmatpush1.msra.mxu0 0.0
        %2633 = vmatprep.subr.mxu0 0.0
        %2634 = vmatpush1.msra.mxu0 0.0
        %2635 = vmatprep.subr.mxu0 0.0
        %2636 = vmatpush1.msra.mxu0 0.0
        %2637 = vmatprep.subr.mxu0 0.0
        %2638 = vmatpush1.msra.mxu0 0.0
        %2639 = vmatprep.subr.mxu0 0.0
        %2640 = vmatpush1.msra.mxu0 0.0
        %2641 = vmatprep.subr.mxu0 0.0
        %2642 = vmatpush1.msra.mxu0 0.0
        %2643 = vmatprep.subr.mxu0 0.0
        %2644 = vmatpush1.msra.mxu0 0.0
        %2645 = vmatprep.subr.mxu0 0.0
        %2646 = vmatpush1.msra.mxu0 0.0
        %2647 = vmatprep.subr.mxu0 0.0
        %2648 = vmatpush1.msra.mxu0 0.0
        %2649 = vmatprep.subr.mxu0 0.0
        %2650 = vmatpush1.msra.mxu0 0.0
        %2651 = vmatprep.subr.mxu0 0.0
        %2652 = vmatpush1.msra.mxu0 0.0
        %2653 = vmatprep.subr.mxu0 0.0
        %2654 = vmatpush1.msra.mxu0 0.0
        %2655 = vmatprep.subr.mxu0 0.0
        %2656 = vmatpush1.msra.mxu0 0.0
        %2657 = vmatprep.subr.mxu0 0.0
        %2658 = vmatpush1.msra.mxu0 0.0
        %2659 = vmatprep.subr.mxu0 0.0
        %2660 = vmatpush1.msra.mxu0 0.0
        %2661 = vmatprep.subr.mxu0 0.0
        %2662 = vmatpush1.msra.mxu0 0.0
        %2663 = vmatprep.subr.mxu0 0.0
        %2664 = vmatpush1.msra.mxu0 0.0
        %2665 = vmatprep.subr.mxu0 0.0
        %2666 = vmatpush1.msra.mxu0 0.0
        %2667 = vmatprep.subr.mxu0 0.0
        %2668 = vmatpush1.msra.mxu0 0.0
        %2669 = vmatprep.subr.mxu0 0.0
        %2670 = vmatpush1.msra.mxu0 0.0
        %2671 = vmatprep.subr.mxu0 0.0
        %2672 = vmatpush1.msra.mxu0 0.0
        %2673 = vmatprep.subr.mxu0 0.0
        %2674 = vmatpush1.msra.mxu0 0.0
        %2675 = vmatprep.subr.mxu0 0.0
        %2676 = vmatpush1.msra.mxu0 0.0
        %2677 = vmatprep.subr.mxu0 0.0
        %2678 = vmatpush1.msra.mxu0 0.0
        %2679 = vmatprep.mubr.f32.mxu0 0.0
        %v2680 = vand.u32 %v2264, 4294901760
        %2681 = vmatmul.mubr.f32.gmra.mrb[0].mxu0 %v2680
        %v2682 = vpop.f32.mrb[0].mxu0
        %v2683 = vadd.f32 %v2598, %v2682
        %v2684 = vpop.f32.mrb[0].mxu0
        %2685 = vmatprep.mubr.f32.mxu0 0.0
        %v2686 = vand.u32 %v2267, 4294901760
        %2687 = vmatmul.mubr.f32.gmra.mrb[0].mxu0 %v2686
        %v2688 = vpop.f32.mrb[0].mxu0
        %v2689 = vadd.f32 %v2606, %v2688
        %v2690 = vpop.f32.mrb[0].mxu0
        %2691 = vdwg.mxu0
        %2692 = vmatprep.subr.mxu0 0.0
        %v2693 = vand.u32 %v221, 4294901760
        %2694 = vmatpush1.msra.mxu0 %v2693
        %2695 = vmatprep.subr.mxu0 0.0
        %v2696 = vand.u32 %v222, 4294901760
        %2697 = vmatpush1.msra.mxu0 %v2696
        %2698 = vmatprep.subr.mxu0 0.0
        %2699 = vmatpush1.msra.mxu0 0.0
        %2700 = vmatprep.subr.mxu0 0.0
        %2701 = vmatpush1.msra.mxu0 0.0
        %2702 = vmatprep.subr.mxu0 0.0
        %2703 = vmatpush1.msra.mxu0 0.0
        %2704 = vmatprep.subr.mxu0 0.0
        %2705 = vmatpush1.msra.mxu0 0.0
        %2706 = vmatprep.subr.mxu0 0.0
        %2707 = vmatpush1.msra.mxu0 0.0
        %2708 = vmatprep.subr.mxu0 0.0
        %2709 = vmatpush1.msra.mxu0 0.0
        %2710 = vmatprep.subr.mxu0 0.0
        %2711 = vmatpush1.msra.mxu0 0.0
        %2712 = vmatprep.subr.mxu0 0.0
        %2713 = vmatpush1.msra.mxu0 0.0
        %2714 = vmatprep.subr.mxu0 0.0
        %2715 = vmatpush1.msra.mxu0 0.0
        %2716 = vmatprep.subr.mxu0 0.0
        %2717 = vmatpush1.msra.mxu0 0.0
        %2718 = vmatprep.subr.mxu0 0.0
        %2719 = vmatpush1.msra.mxu0 0.0
        %2720 = vmatprep.subr.mxu0 0.0
        %2721 = vmatpush1.msra.mxu0 0.0
        %2722 = vmatprep.subr.mxu0 0.0
        %2723 = vmatpush1.msra.mxu0 0.0
        %2724 = vmatprep.subr.mxu0 0.0
        %2725 = vmatpush1.msra.mxu0 0.0
        %2726 = vmatprep.subr.mxu0 0.0
        %2727 = vmatpush1.msra.mxu0 0.0
        %2728 = vmatprep.subr.mxu0 0.0
        %2729 = vmatpush1.msra.mxu0 0.0
        %2730 = vmatprep.subr.mxu0 0.0
        %2731 = vmatpush1.msra.mxu0 0.0
        %2732 = vmatprep.subr.mxu0 0.0
        %2733 = vmatpush1.msra.mxu0 0.0
        %2734 = vmatprep.subr.mxu0 0.0
        %2735 = vmatpush1.msra.mxu0 0.0
        %2736 = vmatprep.subr.mxu0 0.0
        %2737 = vmatpush1.msra.mxu0 0.0
        %2738 = vmatprep.subr.mxu0 0.0
        %2739 = vmatpush1.msra.mxu0 0.0
        %2740 = vmatprep.subr.mxu0 0.0
        %2741 = vmatpush1.msra.mxu0 0.0
        %2742 = vmatprep.subr.mxu0 0.0
        %2743 = vmatpush1.msra.mxu0 0.0
        %2744 = vmatprep.subr.mxu0 0.0
        %2745 = vmatpush1.msra.mxu0 0.0
        %2746 = vmatprep.subr.mxu0 0.0
        %2747 = vmatpush1.msra.mxu0 0.0
        %2748 = vmatprep.subr.mxu0 0.0
        %2749 = vmatpush1.msra.mxu0 0.0
        %2750 = vmatprep.subr.mxu0 0.0
        %2751 = vmatpush1.msra.mxu0 0.0
        %2752 = vmatprep.subr.mxu0 0.0
        %2753 = vmatpush1.msra.mxu0 0.0
        %2754 = vmatprep.subr.mxu0 0.0
        %2755 = vmatpush1.msra.mxu0 0.0
        %2756 = vmatprep.subr.mxu0 0.0
        %2757 = vmatpush1.msra.mxu0 0.0
        %2758 = vmatprep.mubr.f32.mxu0 0.0
        %v2759 = vand.u32 %v2264, 4294901760
        %2760 = vmatmul.mubr.f32.gmra.mrb[0].mxu0 %v2759
        %v2761 = vpop.f32.mrb[0].mxu0
        %v2762 = vadd.f32 %v2683, %v2761
        %v2763 = vpop.f32.mrb[0].mxu0
        %2764 = vmatprep.mubr.f32.mxu0 0.0
        %v2765 = vand.u32 %v2267, 4294901760
        %2766 = vmatmul.mubr.f32.gmra.mrb[0].mxu0 %v2765
        %v2767 = vpop.f32.mrb[0].mxu0
        %v2768 = vadd.f32 %v2689, %v2767
        %v2769 = vpop.f32.mrb[0].mxu0
        %2770 = vdwg.mxu0
        %2771 = vmatprep.subr.mxu0 0.0
        %v2772 = vand.u32 %v2762, 4294901760
        %2773 = vmatpush1.msra.mxu0 %v2772
        %2774 = vmatprep.subr.mxu0 0.0
        %v2775 = vand.u32 %v2768, 4294901760
        %2776 = vmatpush1.msra.mxu0 %v2775
        %2777 = vmatprep.subr.mxu0 0.0
        %2778 = vmatpush1.msra.mxu0 0.0
        %2779 = vmatprep.subr.mxu0 0.0
        %2780 = vmatpush1.msra.mxu0 0.0
        %2781 = vmatprep.subr.mxu0 0.0
        %2782 = vmatpush1.msra.mxu0 0.0
        %2783 = vmatprep.subr.mxu0 0.0
        %2784 = vmatpush1.msra.mxu0 0.0
        %2785 = vmatprep.subr.mxu0 0.0
        %2786 = vmatpush1.msra.mxu0 0.0
        %2787 = vmatprep.subr.mxu0 0.0
        %2788 = vmatpush1.msra.mxu0 0.0
        %2789 = vmatprep.subr.mxu0 0.0
        %2790 = vmatpush1.msra.mxu0 0.0
        %2791 = vmatprep.subr.mxu0 0.0
        %2792 = vmatpush1.msra.mxu0 0.0
        %2793 = vmatprep.subr.mxu0 0.0
        %2794 = vmatpush1.msra.mxu0 0.0
        %2795 = vmatprep.subr.mxu0 0.0
        %2796 = vmatpush1.msra.mxu0 0.0
        %2797 = vmatprep.subr.mxu0 0.0
        %2798 = vmatpush1.msra.mxu0 0.0
        %2799 = vmatprep.subr.mxu0 0.0
        %2800 = vmatpush1.msra.mxu0 0.0
        %2801 = vmatprep.subr.mxu0 0.0
        %2802 = vmatpush1.msra.mxu0 0.0
        %2803 = vmatprep.subr.mxu0 0.0
        %2804 = vmatpush1.msra.mxu0 0.0
        %2805 = vmatprep.subr.mxu0 0.0
        %2806 = vmatpush1.msra.mxu0 0.0
        %2807 = vmatprep.subr.mxu0 0.0
        %2808 = vmatpush1.msra.mxu0 0.0
        %2809 = vmatprep.subr.mxu0 0.0
        %2810 = vmatpush1.msra.mxu0 0.0
        %2811 = vmatprep.subr.mxu0 0.0
        %2812 = vmatpush1.msra.mxu0 0.0
        %2813 = vmatprep.subr.mxu0 0.0
        %2814 = vmatpush1.msra.mxu0 0.0
        %2815 = vmatprep.subr.mxu0 0.0
        %2816 = vmatpush1.msra.mxu0 0.0
        %2817 = vmatprep.subr.mxu0 0.0
        %2818 = vmatpush1.msra.mxu0 0.0
        %2819 = vmatprep.subr.mxu0 0.0
        %2820 = vmatpush1.msra.mxu0 0.0
        %2821 = vmatprep.subr.mxu0 0.0
        %2822 = vmatpush1.msra.mxu0 0.0
        %2823 = vmatprep.subr.mxu0 0.0
        %2824 = vmatpush1.msra.mxu0 0.0
        %2825 = vmatprep.subr.mxu0 0.0
        %2826 = vmatpush1.msra.mxu0 0.0
        %2827 = vmatprep.subr.mxu0 0.0
        %2828 = vmatpush1.msra.mxu0 0.0
        %2829 = vmatprep.subr.mxu0 0.0
        %2830 = vmatpush1.msra.mxu0 0.0
        %2831 = vmatprep.subr.mxu0 0.0
        %2832 = vmatpush1.msra.mxu0 0.0
        %2833 = vmatprep.subr.mxu0 0.0
        %2834 = vmatpush1.msra.mxu0 0.0
        %2835 = vmatprep.subr.mxu0 0.0
        %2836 = vmatpush1.msra.mxu0 0.0
        %2837 = vmatprep.mubr.f32.mxu0 0.0
        %v2838 = vand.u32 %v735, 4294901760
        %v2839 = vsub.f32 %v735, %v2838
        %v2840 = vand.u32 %v2839, 4294901760
        %v2841 = vsub.f32 %v2839, %v2840
        %v2842 = vand.u32 %v2841, 4294901760
        %2843 = vmatmul.mubr.f32.gmra.mrb[0].mxu0 %v2842
        %v2844 = vpop.f32.mrb[0].mxu0
        %v2845 = vadd.f32 0.0, %v2844
        %v2846 = vpop.f32.mrb[0].mxu0
        %2847 = vmatprep.mubr.f32.mxu0 0.0
        %v2848 = vand.u32 %v738, 4294901760
        %v2849 = vsub.f32 %v738, %v2848
        %v2850 = vand.u32 %v2849, 4294901760
        %v2851 = vsub.f32 %v2849, %v2850
        %v2852 = vand.u32 %v2851, 4294901760
        %2853 = vmatmul.mubr.f32.gmra.mrb[0].mxu0 %v2852
        %v2854 = vpop.f32.mrb[0].mxu0
        %v2855 = vadd.f32 0.0, %v2854
        %v2856 = vpop.f32.mrb[0].mxu0
        %2857 = vdwg.mxu0
        %2858 = vmatprep.subr.mxu0 0.0
        %v2859 = vand.u32 %v2762, 4294901760
        %v2860 = vsub.f32 %v2762, %v2859
        %v2861 = vand.u32 %v2860, 4294901760
        %v2862 = vsub.f32 %v2860, %v2861
        %v2863 = vand.u32 %v2862, 4294901760
        %2864 = vmatpush1.msra.mxu0 %v2863
        %2865 = vmatprep.subr.mxu0 0.0
        %v2866 = vand.u32 %v2768, 4294901760
        %v2867 = vsub.f32 %v2768, %v2866
        %v2868 = vand.u32 %v2867, 4294901760
        %v2869 = vsub.f32 %v2867, %v2868
        %v2870 = vand.u32 %v2869, 4294901760
        %2871 = vmatpush1.msra.mxu0 %v2870
        %2872 = vmatprep.subr.mxu0 0.0
        %2873 = vmatpush1.msra.mxu0 0.0
        %2874 = vmatprep.subr.mxu0 0.0
        %2875 = vmatpush1.msra.mxu0 0.0
        %2876 = vmatprep.subr.mxu0 0.0
        %2877 = vmatpush1.msra.mxu0 0.0
        %2878 = vmatprep.subr.mxu0 0.0
        %2879 = vmatpush1.msra.mxu0 0.0
        %2880 = vmatprep.subr.mxu0 0.0
        %2881 = vmatpush1.msra.mxu0 0.0
        %2882 = vmatprep.subr.mxu0 0.0
        %2883 = vmatpush1.msra.mxu0 0.0
        %2884 = vmatprep.subr.mxu0 0.0
        %2885 = vmatpush1.msra.mxu0 0.0
        %2886 = vmatprep.subr.mxu0 0.0
        %2887 = vmatpush1.msra.mxu0 0.0
        %2888 = vmatprep.subr.mxu0 0.0
        %2889 = vmatpush1.msra.mxu0 0.0
        %2890 = vmatprep.subr.mxu0 0.0
        %2891 = vmatpush1.msra.mxu0 0.0
        %2892 = vmatprep.subr.mxu0 0.0
        %2893 = vmatpush1.msra.mxu0 0.0
        %2894 = vmatprep.subr.mxu0 0.0
        %2895 = vmatpush1.msra.mxu0 0.0
        %2896 = vmatprep.subr.mxu0 0.0
        %2897 = vmatpush1.msra.mxu0 0.0
        %2898 = vmatprep.subr.mxu0 0.0
        %2899 = vmatpush1.msra.mxu0 0.0
        %2900 = vmatprep.subr.mxu0 0.0
        %2901 = vmatpush1.msra.mxu0 0.0
        %2902 = vmatprep.subr.mxu0 0.0
        %2903 = vmatpush1.msra.mxu0 0.0
        %2904 = vmatprep.subr.mxu0 0.0
        %2905 = vmatpush1.msra.mxu0 0.0
        %2906 = vmatprep.subr.mxu0 0.0
        %2907 = vmatpush1.msra.mxu0 0.0
        %2908 = vmatprep.subr.mxu0 0.0
        %2909 = vmatpush1.msra.mxu0 0.0
        %2910 = vmatprep.subr.mxu0 0.0
        %2911 = vmatpush1.msra.mxu0 0.0
        %2912 = vmatprep.subr.mxu0 0.0
        %2913 = vmatpush1.msra.mxu0 0.0
        %2914 = vmatprep.subr.mxu0 0.0
        %2915 = vmatpush1.msra.mxu0 0.0
        %2916 = vmatprep.subr.mxu0 0.0
        %2917 = vmatpush1.msra.mxu0 0.0
        %2918 = vmatprep.subr.mxu0 0.0
        %2919 = vmatpush1.msra.mxu0 0.0
        %2920 = vmatprep.subr.mxu0 0.0
        %2921 = vmatpush1.msra.mxu0 0.0
        %2922 = vmatprep.subr.mxu0 0.0
        %2923 = vmatpush1.msra.mxu0 0.0
        %2924 = vmatprep.subr.mxu0 0.0
        %2925 = vmatpush1.msra.mxu0 0.0
        %2926 = vmatprep.subr.mxu0 0.0
        %2927 = vmatpush1.msra.mxu0 0.0
        %2928 = vmatprep.subr.mxu0 0.0
        %2929 = vmatpush1.msra.mxu0 0.0
        %2930 = vmatprep.subr.mxu0 0.0
        %2931 = vmatpush1.msra.mxu0 0.0
        %2932 = vmatprep.mubr.f32.mxu0 0.0
        %v2933 = vand.u32 %v735, 4294901760
        %2934 = vmatmul.mubr.f32.gmra.mrb[0].mxu0 %v2933
        %v2935 = vpop.f32.mrb[0].mxu0
        %v2936 = vadd.f32 %v2845, %v2935
        %v2937 = vpop.f32.mrb[0].mxu0
        %2938 = vmatprep.mubr.f32.mxu0 0.0
        %v2939 = vand.u32 %v738, 4294901760
        %2940 = vmatmul.mubr.f32.gmra.mrb[0].mxu0 %v2939
        %v2941 = vpop.f32.mrb[0].mxu0
        %v2942 = vadd.f32 %v2855, %v2941
        %v2943 = vpop.f32.mrb[0].mxu0
        %2944 = vdwg.mxu0
        %2945 = vmatprep.subr.mxu0 0.0
        %v2946 = vand.u32 %v2762, 4294901760
        %v2947 = vsub.f32 %v2762, %v2946
        %2948 = vmatpush1.msra.mxu0 %v2947
        %2949 = vmatprep.subr.mxu0 0.0
        %v2950 = vand.u32 %v2768, 4294901760
        %v2951 = vsub.f32 %v2768, %v2950
        %2952 = vmatpush1.msra.mxu0 %v2951
        %2953 = vmatprep.subr.mxu0 0.0
        %2954 = vmatpush1.msra.mxu0 0.0
        %2955 = vmatprep.subr.mxu0 0.0
        %2956 = vmatpush1.msra.mxu0 0.0
        %2957 = vmatprep.subr.mxu0 0.0
        %2958 = vmatpush1.msra.mxu0 0.0
        %2959 = vmatprep.subr.mxu0 0.0
        %2960 = vmatpush1.msra.mxu0 0.0
        %2961 = vmatprep.subr.mxu0 0.0
        %2962 = vmatpush1.msra.mxu0 0.0
        %2963 = vmatprep.subr.mxu0 0.0
        %2964 = vmatpush1.msra.mxu0 0.0
        %2965 = vmatprep.subr.mxu0 0.0
        %2966 = vmatpush1.msra.mxu0 0.0
        %2967 = vmatprep.subr.mxu0 0.0
        %2968 = vmatpush1.msra.mxu0 0.0
        %2969 = vmatprep.subr.mxu0 0.0
        %2970 = vmatpush1.msra.mxu0 0.0
        %2971 = vmatprep.subr.mxu0 0.0
        %2972 = vmatpush1.msra.mxu0 0.0
        %2973 = vmatprep.subr.mxu0 0.0
        %2974 = vmatpush1.msra.mxu0 0.0
        %2975 = vmatprep.subr.mxu0 0.0
        %2976 = vmatpush1.msra.mxu0 0.0
        %2977 = vmatprep.subr.mxu0 0.0
        %2978 = vmatpush1.msra.mxu0 0.0
        %2979 = vmatprep.subr.mxu0 0.0
        %2980 = vmatpush1.msra.mxu0 0.0
        %2981 = vmatprep.subr.mxu0 0.0
        %2982 = vmatpush1.msra.mxu0 0.0
        %2983 = vmatprep.subr.mxu0 0.0
        %2984 = vmatpush1.msra.mxu0 0.0
        %2985 = vmatprep.subr.mxu0 0.0
        %2986 = vmatpush1.msra.mxu0 0.0
        %2987 = vmatprep.subr.mxu0 0.0
        %2988 = vmatpush1.msra.mxu0 0.0
        %2989 = vmatprep.subr.mxu0 0.0
        %2990 = vmatpush1.msra.mxu0 0.0
        %2991 = vmatprep.subr.mxu0 0.0
        %2992 = vmatpush1.msra.mxu0 0.0
        %2993 = vmatprep.subr.mxu0 0.0
        %2994 = vmatpush1.msra.mxu0 0.0
        %2995 = vmatprep.subr.mxu0 0.0
        %2996 = vmatpush1.msra.mxu0 0.0
        %2997 = vmatprep.subr.mxu0 0.0
        %2998 = vmatpush1.msra.mxu0 0.0
        %2999 = vmatprep.subr.mxu0 0.0
        %3000 = vmatpush1.msra.mxu0 0.0
        %3001 = vmatprep.subr.mxu0 0.0
        %3002 = vmatpush1.msra.mxu0 0.0
        %3003 = vmatprep.subr.mxu0 0.0
        %3004 = vmatpush1.msra.mxu0 0.0
        %3005 = vmatprep.subr.mxu0 0.0
        %3006 = vmatpush1.msra.mxu0 0.0
        %3007 = vmatprep.subr.mxu0 0.0
        %3008 = vmatpush1.msra.mxu0 0.0
        %3009 = vmatprep.subr.mxu0 0.0
        %3010 = vmatpush1.msra.mxu0 0.0
        %3011 = vmatprep.subr.mxu0 0.0
        %3012 = vmatpush1.msra.mxu0 0.0
        %3013 = vmatprep.mubr.f32.mxu0 0.0
        %v3014 = vand.u32 %v735, 4294901760
        %v3015 = vsub.f32 %v735, %v3014
        %3016 = vmatmul.mubr.f32.gmra.mrb[0].mxu0 %v3015
        %v3017 = vpop.f32.mrb[0].mxu0
        %v3018 = vadd.f32 %v2936, %v3017
        %v3019 = vpop.f32.mrb[0].mxu0
        %3020 = vmatprep.mubr.f32.mxu0 0.0
        %v3021 = vand.u32 %v738, 4294901760
        %v3022 = vsub.f32 %v738, %v3021
        %3023 = vmatmul.mubr.f32.gmra.mrb[0].mxu0 %v3022
        %v3024 = vpop.f32.mrb[0].mxu0
        %v3025 = vadd.f32 %v2942, %v3024
        %v3026 = vpop.f32.mrb[0].mxu0
        %3027 = vdwg.mxu0
        %3028 = vmatprep.subr.mxu0 0.0
        %v3029 = vand.u32 %v2762, 4294901760
        %3030 = vmatpush1.msra.mxu0 %v3029
        %3031 = vmatprep.subr.mxu0 0.0
        %v3032 = vand.u32 %v2768, 4294901760
        %3033 = vmatpush1.msra.mxu0 %v3032
        %3034 = vmatprep.subr.mxu0 0.0
        %3035 = vmatpush1.msra.mxu0 0.0
        %3036 = vmatprep.subr.mxu0 0.0
        %3037 = vmatpush1.msra.mxu0 0.0
        %3038 = vmatprep.subr.mxu0 0.0
        %3039 = vmatpush1.msra.mxu0 0.0
        %3040 = vmatprep.subr.mxu0 0.0
        %3041 = vmatpush1.msra.mxu0 0.0
        %3042 = vmatprep.subr.mxu0 0.0
        %3043 = vmatpush1.msra.mxu0 0.0
        %3044 = vmatprep.subr.mxu0 0.0
        %3045 = vmatpush1.msra.mxu0 0.0
        %3046 = vmatprep.subr.mxu0 0.0
        %3047 = vmatpush1.msra.mxu0 0.0
        %3048 = vmatprep.subr.mxu0 0.0
        %3049 = vmatpush1.msra.mxu0 0.0
        %3050 = vmatprep.subr.mxu0 0.0
        %3051 = vmatpush1.msra.mxu0 0.0
        %3052 = vmatprep.subr.mxu0 0.0
        %3053 = vmatpush1.msra.mxu0 0.0
        %3054 = vmatprep.subr.mxu0 0.0
        %3055 = vmatpush1.msra.mxu0 0.0
        %3056 = vmatprep.subr.mxu0 0.0
        %3057 = vmatpush1.msra.mxu0 0.0
        %3058 = vmatprep.subr.mxu0 0.0
        %3059 = vmatpush1.msra.mxu0 0.0
        %3060 = vmatprep.subr.mxu0 0.0
        %3061 = vmatpush1.msra.mxu0 0.0
        %3062 = vmatprep.subr.mxu0 0.0
        %3063 = vmatpush1.msra.mxu0 0.0
        %3064 = vmatprep.subr.mxu0 0.0
        %3065 = vmatpush1.msra.mxu0 0.0
        %3066 = vmatprep.subr.mxu0 0.0
        %3067 = vmatpush1.msra.mxu0 0.0
        %3068 = vmatprep.subr.mxu0 0.0
        %3069 = vmatpush1.msra.mxu0 0.0
        %3070 = vmatprep.subr.mxu0 0.0
        %3071 = vmatpush1.msra.mxu0 0.0
        %3072 = vmatprep.subr.mxu0 0.0
        %3073 = vmatpush1.msra.mxu0 0.0
        %3074 = vmatprep.subr.mxu0 0.0
        %3075 = vmatpush1.msra.mxu0 0.0
        %3076 = vmatprep.subr.mxu0 0.0
        %3077 = vmatpush1.msra.mxu0 0.0
        %3078 = vmatprep.subr.mxu0 0.0
        %3079 = vmatpush1.msra.mxu0 0.0
        %3080 = vmatprep.subr.mxu0 0.0
        %3081 = vmatpush1.msra.mxu0 0.0
        %3082 = vmatprep.subr.mxu0 0.0
        %3083 = vmatpush1.msra.mxu0 0.0
        %3084 = vmatprep.subr.mxu0 0.0
        %3085 = vmatpush1.msra.mxu0 0.0
        %3086 = vmatprep.subr.mxu0 0.0
        %3087 = vmatpush1.msra.mxu0 0.0
        %3088 = vmatprep.subr.mxu0 0.0
        %3089 = vmatpush1.msra.mxu0 0.0
        %3090 = vmatprep.subr.mxu0 0.0
        %3091 = vmatpush1.msra.mxu0 0.0
        %3092 = vmatprep.subr.mxu0 0.0
        %3093 = vmatpush1.msra.mxu0 0.0
        %3094 = vmatprep.mubr.f32.mxu0 0.0
        %v3095 = vand.u32 %v735, 4294901760
        %v3096 = vsub.f32 %v735, %v3095
        %v3097 = vand.u32 %v3096, 4294901760
        %3098 = vmatmul.mubr.f32.gmra.mrb[0].mxu0 %v3097
        %v3099 = vpop.f32.mrb[0].mxu0
        %v3100 = vadd.f32 %v3018, %v3099
        %v3101 = vpop.f32.mrb[0].mxu0
        %3102 = vmatprep.mubr.f32.mxu0 0.0
        %v3103 = vand.u32 %v738, 4294901760
        %v3104 = vsub.f32 %v738, %v3103
        %v3105 = vand.u32 %v3104, 4294901760
        %3106 = vmatmul.mubr.f32.gmra.mrb[0].mxu0 %v3105
        %v3107 = vpop.f32.mrb[0].mxu0
        %v3108 = vadd.f32 %v3025, %v3107
        %v3109 = vpop.f32.mrb[0].mxu0
        %3110 = vdwg.mxu0
        %3111 = vmatprep.subr.mxu0 0.0
        %v3112 = vand.u32 %v2762, 4294901760
        %v3113 = vsub.f32 %v2762, %v3112
        %v3114 = vand.u32 %v3113, 4294901760
        %3115 = vmatpush1.msra.mxu0 %v3114
        %3116 = vmatprep.subr.mxu0 0.0
        %v3117 = vand.u32 %v2768, 4294901760
        %v3118 = vsub.f32 %v2768, %v3117
        %v3119 = vand.u32 %v3118, 4294901760
        %3120 = vmatpush1.msra.mxu0 %v3119
        %3121 = vmatprep.subr.mxu0 0.0
        %3122 = vmatpush1.msra.mxu0 0.0
        %3123 = vmatprep.subr.mxu0 0.0
        %3124 = vmatpush1.msra.mxu0 0.0
        %3125 = vmatprep.subr.mxu0 0.0
        %3126 = vmatpush1.msra.mxu0 0.0
        %3127 = vmatprep.subr.mxu0 0.0
        %3128 = vmatpush1.msra.mxu0 0.0
        %3129 = vmatprep.subr.mxu0 0.0
        %3130 = vmatpush1.msra.mxu0 0.0
        %3131 = vmatprep.subr.mxu0 0.0
        %3132 = vmatpush1.msra.mxu0 0.0
        %3133 = vmatprep.subr.mxu0 0.0
        %3134 = vmatpush1.msra.mxu0 0.0
        %3135 = vmatprep.subr.mxu0 0.0
        %3136 = vmatpush1.msra.mxu0 0.0
        %3137 = vmatprep.subr.mxu0 0.0
        %3138 = vmatpush1.msra.mxu0 0.0
        %3139 = vmatprep.subr.mxu0 0.0
        %3140 = vmatpush1.msra.mxu0 0.0
        %3141 = vmatprep.subr.mxu0 0.0
        %3142 = vmatpush1.msra.mxu0 0.0
        %3143 = vmatprep.subr.mxu0 0.0
        %3144 = vmatpush1.msra.mxu0 0.0
        %3145 = vmatprep.subr.mxu0 0.0
        %3146 = vmatpush1.msra.mxu0 0.0
        %3147 = vmatprep.subr.mxu0 0.0
        %3148 = vmatpush1.msra.mxu0 0.0
        %3149 = vmatprep.subr.mxu0 0.0
        %3150 = vmatpush1.msra.mxu0 0.0
        %3151 = vmatprep.subr.mxu0 0.0
        %3152 = vmatpush1.msra.mxu0 0.0
        %3153 = vmatprep.subr.mxu0 0.0
        %3154 = vmatpush1.msra.mxu0 0.0
        %3155 = vmatprep.subr.mxu0 0.0
        %3156 = vmatpush1.msra.mxu0 0.0
        %3157 = vmatprep.subr.mxu0 0.0
        %3158 = vmatpush1.msra.mxu0 0.0
        %3159 = vmatprep.subr.mxu0 0.0
        %3160 = vmatpush1.msra.mxu0 0.0
        %3161 = vmatprep.subr.mxu0 0.0
        %3162 = vmatpush1.msra.mxu0 0.0
        %3163 = vmatprep.subr.mxu0 0.0
        %3164 = vmatpush1.msra.mxu0 0.0
        %3165 = vmatprep.subr.mxu0 0.0
        %3166 = vmatpush1.msra.mxu0 0.0
        %3167 = vmatprep.subr.mxu0 0.0
        %3168 = vmatpush1.msra.mxu0 0.0
        %3169 = vmatprep.subr.mxu0 0.0
        %3170 = vmatpush1.msra.mxu0 0.0
        %3171 = vmatprep.subr.mxu0 0.0
        %3172 = vmatpush1.msra.mxu0 0.0
        %3173 = vmatprep.subr.mxu0 0.0
        %3174 = vmatpush1.msra.mxu0 0.0
        %3175 = vmatprep.subr.mxu0 0.0
        %3176 = vmatpush1.msra.mxu0 0.0
        %3177 = vmatprep.subr.mxu0 0.0
        %3178 = vmatpush1.msra.mxu0 0.0
        %3179 = vmatprep.subr.mxu0 0.0
        %3180 = vmatpush1.msra.mxu0 0.0
        %3181 = vmatprep.mubr.f32.mxu0 0.0
        %v3182 = vand.u32 %v735, 4294901760
        %3183 = vmatmul.mubr.f32.gmra.mrb[0].mxu0 %v3182
        %v3184 = vpop.f32.mrb[0].mxu0
        %v3185 = vadd.f32 %v3100, %v3184
        %v3186 = vpop.f32.mrb[0].mxu0
        %3187 = vmatprep.mubr.f32.mxu0 0.0
        %v3188 = vand.u32 %v738, 4294901760
        %3189 = vmatmul.mubr.f32.gmra.mrb[0].mxu0 %v3188
        %v3190 = vpop.f32.mrb[0].mxu0
        %v3191 = vadd.f32 %v3108, %v3190
        %v3192 = vpop.f32.mrb[0].mxu0
        %3193 = vdwg.mxu0
        %3194 = vmatprep.subr.mxu0 0.0
        %v3195 = vand.u32 %v2762, 4294901760
        %3196 = vmatpush1.msra.mxu0 %v3195
        %3197 = vmatprep.subr.mxu0 0.0
        %v3198 = vand.u32 %v2768, 4294901760
        %3199 = vmatpush1.msra.mxu0 %v3198
        %3200 = vmatprep.subr.mxu0 0.0
        %3201 = vmatpush1.msra.mxu0 0.0
        %3202 = vmatprep.subr.mxu0 0.0
        %3203 = vmatpush1.msra.mxu0 0.0
        %3204 = vmatprep.subr.mxu0 0.0
        %3205 = vmatpush1.msra.mxu0 0.0
        %3206 = vmatprep.subr.mxu0 0.0
        %3207 = vmatpush1.msra.mxu0 0.0
        %3208 = vmatprep.subr.mxu0 0.0
        %3209 = vmatpush1.msra.mxu0 0.0
        %3210 = vmatprep.subr.mxu0 0.0
        %3211 = vmatpush1.msra.mxu0 0.0
        %3212 = vmatprep.subr.mxu0 0.0
        %3213 = vmatpush1.msra.mxu0 0.0
        %3214 = vmatprep.subr.mxu0 0.0
        %3215 = vmatpush1.msra.mxu0 0.0
        %3216 = vmatprep.subr.mxu0 0.0
        %3217 = vmatpush1.msra.mxu0 0.0
        %3218 = vmatprep.subr.mxu0 0.0
        %3219 = vmatpush1.msra.mxu0 0.0
        %3220 = vmatprep.subr.mxu0 0.0
        %3221 = vmatpush1.msra.mxu0 0.0
        %3222 = vmatprep.subr.mxu0 0.0
        %3223 = vmatpush1.msra.mxu0 0.0
        %3224 = vmatprep.subr.mxu0 0.0
        %3225 = vmatpush1.msra.mxu0 0.0
        %3226 = vmatprep.subr.mxu0 0.0
        %3227 = vmatpush1.msra.mxu0 0.0
        %3228 = vmatprep.subr.mxu0 0.0
        %3229 = vmatpush1.msra.mxu0 0.0
        %3230 = vmatprep.subr.mxu0 0.0
        %3231 = vmatpush1.msra.mxu0 0.0
        %3232 = vmatprep.subr.mxu0 0.0
        %3233 = vmatpush1.msra.mxu0 0.0
        %3234 = vmatprep.subr.mxu0 0.0
        %3235 = vmatpush1.msra.mxu0 0.0
        %3236 = vmatprep.subr.mxu0 0.0
        %3237 = vmatpush1.msra.mxu0 0.0
        %3238 = vmatprep.subr.mxu0 0.0
        %3239 = vmatpush1.msra.mxu0 0.0
        %3240 = vmatprep.subr.mxu0 0.0
        %3241 = vmatpush1.msra.mxu0 0.0
        %3242 = vmatprep.subr.mxu0 0.0
        %3243 = vmatpush1.msra.mxu0 0.0
        %3244 = vmatprep.subr.mxu0 0.0
        %3245 = vmatpush1.msra.mxu0 0.0
        %3246 = vmatprep.subr.mxu0 0.0
        %3247 = vmatpush1.msra.mxu0 0.0
        %3248 = vmatprep.subr.mxu0 0.0
        %3249 = vmatpush1.msra.mxu0 0.0
        %3250 = vmatprep.subr.mxu0 0.0
        %3251 = vmatpush1.msra.mxu0 0.0
        %3252 = vmatprep.subr.mxu0 0.0
        %3253 = vmatpush1.msra.mxu0 0.0
        %3254 = vmatprep.subr.mxu0 0.0
        %3255 = vmatpush1.msra.mxu0 0.0
        %3256 = vmatprep.subr.mxu0 0.0
        %3257 = vmatpush1.msra.mxu0 0.0
        %3258 = vmatprep.subr.mxu0 0.0
        %3259 = vmatpush1.msra.mxu0 0.0
        %3260 = vmatprep.mubr.f32.mxu0 0.0
        %v3261 = vand.u32 %v735, 4294901760
        %3262 = vmatmul.mubr.f32.gmra.mrb[0].mxu0 %v3261
        %v3263 = vpop.f32.mrb[0].mxu0
        %v3264 = vadd.f32 %v3185, %v3263
        %v3265 = vpop.f32.mrb[0].mxu0
        %3266 = vmatprep.mubr.f32.mxu0 0.0
        %v3267 = vand.u32 %v738, 4294901760
        %3268 = vmatmul.mubr.f32.gmra.mrb[0].mxu0 %v3267
        %v3269 = vpop.f32.mrb[0].mxu0
        %v3270 = vadd.f32 %v3191, %v3269
        %v3271 = vpop.f32.mrb[0].mxu0
        %3272 = vdwg.mxu0
        %s3273 = scalar_lea.vmem %s216, 32 [#allocation8]
        %3274 = vst.msk [vmem:[%s3273] sm:$0xff] %vm225, %v3264
        %3275 = vst.msk [vmem:[%s3273 + $0x8] sm:$0xff] %vm225, %v3270
        %s3276 = scalar_lea.vmem %s194, 48 [#allocation7]
        %v3277 = vld [vmem:[%s3276] sm:$0xff]
        %v3278 = vld [vmem:[%s3276 + $0x8] sm:$0xff]
        %v3280 = vsel %vm225, %v3277, 0
        %v3283 = vsel %vm225, %v3278, 0
        %3285 = vmatprep.subr.mxu0 0.0
        %v3286 = vand.u32 %v221, 4294901760
        %3287 = vmatpush1.msra.mxu0 %v3286
        %3288 = vmatprep.subr.mxu0 0.0
        %v3289 = vand.u32 %v222, 4294901760
        %3290 = vmatpush1.msra.mxu0 %v3289
        %3291 = vmatprep.subr.mxu0 0.0
        %3292 = vmatpush1.msra.mxu0 0.0
        %3293 = vmatprep.subr.mxu0 0.0
        %3294 = vmatpush1.msra.mxu0 0.0
        %3295 = vmatprep.subr.mxu0 0.0
        %3296 = vmatpush1.msra.mxu0 0.0
        %3297 = vmatprep.subr.mxu0 0.0
        %3298 = vmatpush1.msra.mxu0 0.0
        %3299 = vmatprep.subr.mxu0 0.0
        %3300 = vmatpush1.msra.mxu0 0.0
        %3301 = vmatprep.subr.mxu0 0.0
        %3302 = vmatpush1.msra.mxu0 0.0
        %3303 = vmatprep.subr.mxu0 0.0
        %3304 = vmatpush1.msra.mxu0 0.0
        %3305 = vmatprep.subr.mxu0 0.0
        %3306 = vmatpush1.msra.mxu0 0.0
        %3307 = vmatprep.subr.mxu0 0.0
        %3308 = vmatpush1.msra.mxu0 0.0
        %3309 = vmatprep.subr.mxu0 0.0
        %3310 = vmatpush1.msra.mxu0 0.0
        %3311 = vmatprep.subr.mxu0 0.0
        %3312 = vmatpush1.msra.mxu0 0.0
        %3313 = vmatprep.subr.mxu0 0.0
        %3314 = vmatpush1.msra.mxu0 0.0
        %3315 = vmatprep.subr.mxu0 0.0
        %3316 = vmatpush1.msra.mxu0 0.0
        %3317 = vmatprep.subr.mxu0 0.0
        %3318 = vmatpush1.msra.mxu0 0.0
        %3319 = vmatprep.subr.mxu0 0.0
        %3320 = vmatpush1.msra.mxu0 0.0
        %3321 = vmatprep.subr.mxu0 0.0
        %3322 = vmatpush1.msra.mxu0 0.0
        %3323 = vmatprep.subr.mxu0 0.0
        %3324 = vmatpush1.msra.mxu0 0.0
        %3325 = vmatprep.subr.mxu0 0.0
        %3326 = vmatpush1.msra.mxu0 0.0
        %3327 = vmatprep.subr.mxu0 0.0
        %3328 = vmatpush1.msra.mxu0 0.0
        %3329 = vmatprep.subr.mxu0 0.0
        %3330 = vmatpush1.msra.mxu0 0.0
        %3331 = vmatprep.subr.mxu0 0.0
        %3332 = vmatpush1.msra.mxu0 0.0
        %3333 = vmatprep.subr.mxu0 0.0
        %3334 = vmatpush1.msra.mxu0 0.0
        %3335 = vmatprep.subr.mxu0 0.0
        %3336 = vmatpush1.msra.mxu0 0.0
        %3337 = vmatprep.subr.mxu0 0.0
        %3338 = vmatpush1.msra.mxu0 0.0
        %3339 = vmatprep.subr.mxu0 0.0
        %3340 = vmatpush1.msra.mxu0 0.0
        %3341 = vmatprep.subr.mxu0 0.0
        %3342 = vmatpush1.msra.mxu0 0.0
        %3343 = vmatprep.subr.mxu0 0.0
        %3344 = vmatpush1.msra.mxu0 0.0
        %3345 = vmatprep.subr.mxu0 0.0
        %3346 = vmatpush1.msra.mxu0 0.0
        %3347 = vmatprep.subr.mxu0 0.0
        %3348 = vmatpush1.msra.mxu0 0.0
        %3349 = vmatprep.subr.mxu0 0.0
        %3350 = vmatpush1.msra.mxu0 0.0
        %3351 = vmatprep.mubr.f32.mxu0 0.0
        %v3352 = vand.u32 %v3280, 4294901760
        %v3353 = vsub.f32 %v3280, %v3352
        %v3354 = vand.u32 %v3353, 4294901760
        %v3355 = vsub.f32 %v3353, %v3354
        %v3356 = vand.u32 %v3355, 4294901760
        %3357 = vmatmul.mubr.f32.gmra.mrb[0].mxu0 %v3356
        %v3358 = vpop.f32.mrb[0].mxu0
        %v3359 = vadd.f32 0.0, %v3358
        %v3360 = vpop.f32.mrb[0].mxu0
        %3361 = vmatprep.mubr.f32.mxu0 0.0
        %v3362 = vand.u32 %v3283, 4294901760
        %v3363 = vsub.f32 %v3283, %v3362
        %v3364 = vand.u32 %v3363, 4294901760
        %v3365 = vsub.f32 %v3363, %v3364
        %v3366 = vand.u32 %v3365, 4294901760
        %3367 = vmatmul.mubr.f32.gmra.mrb[0].mxu0 %v3366
        %v3368 = vpop.f32.mrb[0].mxu0
        %v3369 = vadd.f32 0.0, %v3368
        %v3370 = vpop.f32.mrb[0].mxu0
        %3371 = vdwg.mxu0
        %3372 = vmatprep.subr.mxu0 0.0
        %v3373 = vand.u32 %v221, 4294901760
        %v3374 = vsub.f32 %v221, %v3373
        %v3375 = vand.u32 %v3374, 4294901760
        %v3376 = vsub.f32 %v3374, %v3375
        %v3377 = vand.u32 %v3376, 4294901760
        %3378 = vmatpush1.msra.mxu0 %v3377
        %3379 = vmatprep.subr.mxu0 0.0
        %v3380 = vand.u32 %v222, 4294901760
        %v3381 = vsub.f32 %v222, %v3380
        %v3382 = vand.u32 %v3381, 4294901760
        %v3383 = vsub.f32 %v3381, %v3382
        %v3384 = vand.u32 %v3383, 4294901760
        %3385 = vmatpush1.msra.mxu0 %v3384
        %3386 = vmatprep.subr.mxu0 0.0
        %3387 = vmatpush1.msra.mxu0 0.0
        %3388 = vmatprep.subr.mxu0 0.0
        %3389 = vmatpush1.msra.mxu0 0.0
        %3390 = vmatprep.subr.mxu0 0.0
        %3391 = vmatpush1.msra.mxu0 0.0
        %3392 = vmatprep.subr.mxu0 0.0
        %3393 = vmatpush1.msra.mxu0 0.0
        %3394 = vmatprep.subr.mxu0 0.0
        %3395 = vmatpush1.msra.mxu0 0.0
        %3396 = vmatprep.subr.mxu0 0.0
        %3397 = vmatpush1.msra.mxu0 0.0
        %3398 = vmatprep.subr.mxu0 0.0
        %3399 = vmatpush1.msra.mxu0 0.0
        %3400 = vmatprep.subr.mxu0 0.0
        %3401 = vmatpush1.msra.mxu0 0.0
        %3402 = vmatprep.subr.mxu0 0.0
        %3403 = vmatpush1.msra.mxu0 0.0
        %3404 = vmatprep.subr.mxu0 0.0
        %3405 = vmatpush1.msra.mxu0 0.0
        %3406 = vmatprep.subr.mxu0 0.0
        %3407 = vmatpush1.msra.mxu0 0.0
        %3408 = vmatprep.subr.mxu0 0.0
        %3409 = vmatpush1.msra.mxu0 0.0
        %3410 = vmatprep.subr.mxu0 0.0
        %3411 = vmatpush1.msra.mxu0 0.0
        %3412 = vmatprep.subr.mxu0 0.0
        %3413 = vmatpush1.msra.mxu0 0.0
        %3414 = vmatprep.subr.mxu0 0.0
        %3415 = vmatpush1.msra.mxu0 0.0
        %3416 = vmatprep.subr.mxu0 0.0
        %3417 = vmatpush1.msra.mxu0 0.0
        %3418 = vmatprep.subr.mxu0 0.0
        %3419 = vmatpush1.msra.mxu0 0.0
        %3420 = vmatprep.subr.mxu0 0.0
        %3421 = vmatpush1.msra.mxu0 0.0
        %3422 = vmatprep.subr.mxu0 0.0
        %3423 = vmatpush1.msra.mxu0 0.0
        %3424 = vmatprep.subr.mxu0 0.0
        %3425 = vmatpush1.msra.mxu0 0.0
        %3426 = vmatprep.subr.mxu0 0.0
        %3427 = vmatpush1.msra.mxu0 0.0
        %3428 = vmatprep.subr.mxu0 0.0
        %3429 = vmatpush1.msra.mxu0 0.0
        %3430 = vmatprep.subr.mxu0 0.0
        %3431 = vmatpush1.msra.mxu0 0.0
        %3432 = vmatprep.subr.mxu0 0.0
        %3433 = vmatpush1.msra.mxu0 0.0
        %3434 = vmatprep.subr.mxu0 0.0
        %3435 = vmatpush1.msra.mxu0 0.0
        %3436 = vmatprep.subr.mxu0 0.0
        %3437 = vmatpush1.msra.mxu0 0.0
        %3438 = vmatprep.subr.mxu0 0.0
        %3439 = vmatpush1.msra.mxu0 0.0
        %3440 = vmatprep.subr.mxu0 0.0
        %3441 = vmatpush1.msra.mxu0 0.0
        %3442 = vmatprep.subr.mxu0 0.0
        %3443 = vmatpush1.msra.mxu0 0.0
        %3444 = vmatprep.subr.mxu0 0.0
        %3445 = vmatpush1.msra.mxu0 0.0
        %3446 = vmatprep.mubr.f32.mxu0 0.0
        %v3447 = vand.u32 %v3280, 4294901760
        %3448 = vmatmul.mubr.f32.gmra.mrb[0].mxu0 %v3447
        %v3449 = vpop.f32.mrb[0].mxu0
        %v3450 = vadd.f32 %v3359, %v3449
        %v3451 = vpop.f32.mrb[0].mxu0
        %3452 = vmatprep.mubr.f32.mxu0 0.0
        %v3453 = vand.u32 %v3283, 4294901760
        %3454 = vmatmul.mubr.f32.gmra.mrb[0].mxu0 %v3453
        %v3455 = vpop.f32.mrb[0].mxu0
        %v3456 = vadd.f32 %v3369, %v3455
        %v3457 = vpop.f32.mrb[0].mxu0
        %3458 = vdwg.mxu0
        %3459 = vmatprep.subr.mxu0 0.0
        %v3460 = vand.u32 %v221, 4294901760
        %v3461 = vsub.f32 %v221, %v3460
        %3462 = vmatpush1.msra.mxu0 %v3461
        %3463 = vmatprep.subr.mxu0 0.0
        %v3464 = vand.u32 %v222, 4294901760
        %v3465 = vsub.f32 %v222, %v3464
        %3466 = vmatpush1.msra.mxu0 %v3465
        %3467 = vmatprep.subr.mxu0 0.0
        %3468 = vmatpush1.msra.mxu0 0.0
        %3469 = vmatprep.subr.mxu0 0.0
        %3470 = vmatpush1.msra.mxu0 0.0
        %3471 = vmatprep.subr.mxu0 0.0
        %3472 = vmatpush1.msra.mxu0 0.0
        %3473 = vmatprep.subr.mxu0 0.0
        %3474 = vmatpush1.msra.mxu0 0.0
        %3475 = vmatprep.subr.mxu0 0.0
        %3476 = vmatpush1.msra.mxu0 0.0
        %3477 = vmatprep.subr.mxu0 0.0
        %3478 = vmatpush1.msra.mxu0 0.0
        %3479 = vmatprep.subr.mxu0 0.0
        %3480 = vmatpush1.msra.mxu0 0.0
        %3481 = vmatprep.subr.mxu0 0.0
        %3482 = vmatpush1.msra.mxu0 0.0
        %3483 = vmatprep.subr.mxu0 0.0
        %3484 = vmatpush1.msra.mxu0 0.0
        %3485 = vmatprep.subr.mxu0 0.0
        %3486 = vmatpush1.msra.mxu0 0.0
        %3487 = vmatprep.subr.mxu0 0.0
        %3488 = vmatpush1.msra.mxu0 0.0
        %3489 = vmatprep.subr.mxu0 0.0
        %3490 = vmatpush1.msra.mxu0 0.0
        %3491 = vmatprep.subr.mxu0 0.0
        %3492 = vmatpush1.msra.mxu0 0.0
        %3493 = vmatprep.subr.mxu0 0.0
        %3494 = vmatpush1.msra.mxu0 0.0
        %3495 = vmatprep.subr.mxu0 0.0
        %3496 = vmatpush1.msra.mxu0 0.0
        %3497 = vmatprep.subr.mxu0 0.0
        %3498 = vmatpush1.msra.mxu0 0.0
        %3499 = vmatprep.subr.mxu0 0.0
        %3500 = vmatpush1.msra.mxu0 0.0
        %3501 = vmatprep.subr.mxu0 0.0
        %3502 = vmatpush1.msra.mxu0 0.0
        %3503 = vmatprep.subr.mxu0 0.0
        %3504 = vmatpush1.msra.mxu0 0.0
        %3505 = vmatprep.subr.mxu0 0.0
        %3506 = vmatpush1.msra.mxu0 0.0
        %3507 = vmatprep.subr.mxu0 0.0
        %3508 = vmatpush1.msra.mxu0 0.0
        %3509 = vmatprep.subr.mxu0 0.0
        %3510 = vmatpush1.msra.mxu0 0.0
        %3511 = vmatprep.subr.mxu0 0.0
        %3512 = vmatpush1.msra.mxu0 0.0
        %3513 = vmatprep.subr.mxu0 0.0
        %3514 = vmatpush1.msra.mxu0 0.0
        %3515 = vmatprep.subr.mxu0 0.0
        %3516 = vmatpush1.msra.mxu0 0.0
        %3517 = vmatprep.subr.mxu0 0.0
        %3518 = vmatpush1.msra.mxu0 0.0
        %3519 = vmatprep.subr.mxu0 0.0
        %3520 = vmatpush1.msra.mxu0 0.0
        %3521 = vmatprep.subr.mxu0 0.0
        %3522 = vmatpush1.msra.mxu0 0.0
        %3523 = vmatprep.subr.mxu0 0.0
        %3524 = vmatpush1.msra.mxu0 0.0
        %3525 = vmatprep.subr.mxu0 0.0
        %3526 = vmatpush1.msra.mxu0 0.0
        %3527 = vmatprep.mubr.f32.mxu0 0.0
        %v3528 = vand.u32 %v3280, 4294901760
        %v3529 = vsub.f32 %v3280, %v3528
        %3530 = vmatmul.mubr.f32.gmra.mrb[0].mxu0 %v3529
        %v3531 = vpop.f32.mrb[0].mxu0
        %v3532 = vadd.f32 %v3450, %v3531
        %v3533 = vpop.f32.mrb[0].mxu0
        %3534 = vmatprep.mubr.f32.mxu0 0.0
        %v3535 = vand.u32 %v3283, 4294901760
        %v3536 = vsub.f32 %v3283, %v3535
        %3537 = vmatmul.mubr.f32.gmra.mrb[0].mxu0 %v3536
        %v3538 = vpop.f32.mrb[0].mxu0
        %v3539 = vadd.f32 %v3456, %v3538
        %v3540 = vpop.f32.mrb[0].mxu0
        %3541 = vdwg.mxu0
        %3542 = vmatprep.subr.mxu0 0.0
        %v3543 = vand.u32 %v221, 4294901760
        %3544 = vmatpush1.msra.mxu0 %v3543
        %3545 = vmatprep.subr.mxu0 0.0
        %v3546 = vand.u32 %v222, 4294901760
        %3547 = vmatpush1.msra.mxu0 %v3546
        %3548 = vmatprep.subr.mxu0 0.0
        %3549 = vmatpush1.msra.mxu0 0.0
        %3550 = vmatprep.subr.mxu0 0.0
        %3551 = vmatpush1.msra.mxu0 0.0
        %3552 = vmatprep.subr.mxu0 0.0
        %3553 = vmatpush1.msra.mxu0 0.0
        %3554 = vmatprep.subr.mxu0 0.0
        %3555 = vmatpush1.msra.mxu0 0.0
        %3556 = vmatprep.subr.mxu0 0.0
        %3557 = vmatpush1.msra.mxu0 0.0
        %3558 = vmatprep.subr.mxu0 0.0
        %3559 = vmatpush1.msra.mxu0 0.0
        %3560 = vmatprep.subr.mxu0 0.0
        %3561 = vmatpush1.msra.mxu0 0.0
        %3562 = vmatprep.subr.mxu0 0.0
        %3563 = vmatpush1.msra.mxu0 0.0
        %3564 = vmatprep.subr.mxu0 0.0
        %3565 = vmatpush1.msra.mxu0 0.0
        %3566 = vmatprep.subr.mxu0 0.0
        %3567 = vmatpush1.msra.mxu0 0.0
        %3568 = vmatprep.subr.mxu0 0.0
        %3569 = vmatpush1.msra.mxu0 0.0
        %3570 = vmatprep.subr.mxu0 0.0
        %3571 = vmatpush1.msra.mxu0 0.0
        %3572 = vmatprep.subr.mxu0 0.0
        %3573 = vmatpush1.msra.mxu0 0.0
        %3574 = vmatprep.subr.mxu0 0.0
        %3575 = vmatpush1.msra.mxu0 0.0
        %3576 = vmatprep.subr.mxu0 0.0
        %3577 = vmatpush1.msra.mxu0 0.0
        %3578 = vmatprep.subr.mxu0 0.0
        %3579 = vmatpush1.msra.mxu0 0.0
        %3580 = vmatprep.subr.mxu0 0.0
        %3581 = vmatpush1.msra.mxu0 0.0
        %3582 = vmatprep.subr.mxu0 0.0
        %3583 = vmatpush1.msra.mxu0 0.0
        %3584 = vmatprep.subr.mxu0 0.0
        %3585 = vmatpush1.msra.mxu0 0.0
        %3586 = vmatprep.subr.mxu0 0.0
        %3587 = vmatpush1.msra.mxu0 0.0
        %3588 = vmatprep.subr.mxu0 0.0
        %3589 = vmatpush1.msra.mxu0 0.0
        %3590 = vmatprep.subr.mxu0 0.0
        %3591 = vmatpush1.msra.mxu0 0.0
        %3592 = vmatprep.subr.mxu0 0.0
        %3593 = vmatpush1.msra.mxu0 0.0
        %3594 = vmatprep.subr.mxu0 0.0
        %3595 = vmatpush1.msra.mxu0 0.0
        %3596 = vmatprep.subr.mxu0 0.0
        %3597 = vmatpush1.msra.mxu0 0.0
        %3598 = vmatprep.subr.mxu0 0.0
        %3599 = vmatpush1.msra.mxu0 0.0
        %3600 = vmatprep.subr.mxu0 0.0
        %3601 = vmatpush1.msra.mxu0 0.0
        %3602 = vmatprep.subr.mxu0 0.0
        %3603 = vmatpush1.msra.mxu0 0.0
        %3604 = vmatprep.subr.mxu0 0.0
        %3605 = vmatpush1.msra.mxu0 0.0
        %3606 = vmatprep.subr.mxu0 0.0
        %3607 = vmatpush1.msra.mxu0 0.0
        %3608 = vmatprep.mubr.f32.mxu0 0.0
        %v3609 = vand.u32 %v3280, 4294901760
        %v3610 = vsub.f32 %v3280, %v3609
        %v3611 = vand.u32 %v3610, 4294901760
        %3612 = vmatmul.mubr.f32.gmra.mrb[0].mxu0 %v3611
        %v3613 = vpop.f32.mrb[0].mxu0
        %v3614 = vadd.f32 %v3532, %v3613
        %v3615 = vpop.f32.mrb[0].mxu0
        %3616 = vmatprep.mubr.f32.mxu0 0.0
        %v3617 = vand.u32 %v3283, 4294901760
        %v3618 = vsub.f32 %v3283, %v3617
        %v3619 = vand.u32 %v3618, 4294901760
        %3620 = vmatmul.mubr.f32.gmra.mrb[0].mxu0 %v3619
        %v3621 = vpop.f32.mrb[0].mxu0
        %v3622 = vadd.f32 %v3539, %v3621
        %v3623 = vpop.f32.mrb[0].mxu0
        %3624 = vdwg.mxu0
        %3625 = vmatprep.subr.mxu0 0.0
        %v3626 = vand.u32 %v221, 4294901760
        %v3627 = vsub.f32 %v221, %v3626
        %v3628 = vand.u32 %v3627, 4294901760
        %3629 = vmatpush1.msra.mxu0 %v3628
        %3630 = vmatprep.subr.mxu0 0.0
        %v3631 = vand.u32 %v222, 4294901760
        %v3632 = vsub.f32 %v222, %v3631
        %v3633 = vand.u32 %v3632, 4294901760
        %3634 = vmatpush1.msra.mxu0 %v3633
        %3635 = vmatprep.subr.mxu0 0.0
        %3636 = vmatpush1.msra.mxu0 0.0
        %3637 = vmatprep.subr.mxu0 0.0
        %3638 = vmatpush1.msra.mxu0 0.0
        %3639 = vmatprep.subr.mxu0 0.0
        %3640 = vmatpush1.msra.mxu0 0.0
        %3641 = vmatprep.subr.mxu0 0.0
        %3642 = vmatpush1.msra.mxu0 0.0
        %3643 = vmatprep.subr.mxu0 0.0
        %3644 = vmatpush1.msra.mxu0 0.0
        %3645 = vmatprep.subr.mxu0 0.0
        %3646 = vmatpush1.msra.mxu0 0.0
        %3647 = vmatprep.subr.mxu0 0.0
        %3648 = vmatpush1.msra.mxu0 0.0
        %3649 = vmatprep.subr.mxu0 0.0
        %3650 = vmatpush1.msra.mxu0 0.0
        %3651 = vmatprep.subr.mxu0 0.0
        %3652 = vmatpush1.msra.mxu0 0.0
        %3653 = vmatprep.subr.mxu0 0.0
        %3654 = vmatpush1.msra.mxu0 0.0
        %3655 = vmatprep.subr.mxu0 0.0
        %3656 = vmatpush1.msra.mxu0 0.0
        %3657 = vmatprep.subr.mxu0 0.0
        %3658 = vmatpush1.msra.mxu0 0.0
        %3659 = vmatprep.subr.mxu0 0.0
        %3660 = vmatpush1.msra.mxu0 0.0
        %3661 = vmatprep.subr.mxu0 0.0
        %3662 = vmatpush1.msra.mxu0 0.0
        %3663 = vmatprep.subr.mxu0 0.0
        %3664 = vmatpush1.msra.mxu0 0.0
        %3665 = vmatprep.subr.mxu0 0.0
        %3666 = vmatpush1.msra.mxu0 0.0
        %3667 = vmatprep.subr.mxu0 0.0
        %3668 = vmatpush1.msra.mxu0 0.0
        %3669 = vmatprep.subr.mxu0 0.0
        %3670 = vmatpush1.msra.mxu0 0.0
        %3671 = vmatprep.subr.mxu0 0.0
        %3672 = vmatpush1.msra.mxu0 0.0
        %3673 = vmatprep.subr.mxu0 0.0
        %3674 = vmatpush1.msra.mxu0 0.0
        %3675 = vmatprep.subr.mxu0 0.0
        %3676 = vmatpush1.msra.mxu0 0.0
        %3677 = vmatprep.subr.mxu0 0.0
        %3678 = vmatpush1.msra.mxu0 0.0
        %3679 = vmatprep.subr.mxu0 0.0
        %3680 = vmatpush1.msra.mxu0 0.0
        %3681 = vmatprep.subr.mxu0 0.0
        %3682 = vmatpush1.msra.mxu0 0.0
        %3683 = vmatprep.subr.mxu0 0.0
        %3684 = vmatpush1.msra.mxu0 0.0
        %3685 = vmatprep.subr.mxu0 0.0
        %3686 = vmatpush1.msra.mxu0 0.0
        %3687 = vmatprep.subr.mxu0 0.0
        %3688 = vmatpush1.msra.mxu0 0.0
        %3689 = vmatprep.subr.mxu0 0.0
        %3690 = vmatpush1.msra.mxu0 0.0
        %3691 = vmatprep.subr.mxu0 0.0
        %3692 = vmatpush1.msra.mxu0 0.0
        %3693 = vmatprep.subr.mxu0 0.0
        %3694 = vmatpush1.msra.mxu0 0.0
        %3695 = vmatprep.mubr.f32.mxu0 0.0
        %v3696 = vand.u32 %v3280, 4294901760
        %3697 = vmatmul.mubr.f32.gmra.mrb[0].mxu0 %v3696
        %v3698 = vpop.f32.mrb[0].mxu0
        %v3699 = vadd.f32 %v3614, %v3698
        %v3700 = vpop.f32.mrb[0].mxu0
        %3701 = vmatprep.mubr.f32.mxu0 0.0
        %v3702 = vand.u32 %v3283, 4294901760
        %3703 = vmatmul.mubr.f32.gmra.mrb[0].mxu0 %v3702
        %v3704 = vpop.f32.mrb[0].mxu0
        %v3705 = vadd.f32 %v3622, %v3704
        %v3706 = vpop.f32.mrb[0].mxu0
        %3707 = vdwg.mxu0
        %3708 = vmatprep.subr.mxu0 0.0
        %v3709 = vand.u32 %v221, 4294901760
        %3710 = vmatpush1.msra.mxu0 %v3709
        %3711 = vmatprep.subr.mxu0 0.0
        %v3712 = vand.u32 %v222, 4294901760
        %3713 = vmatpush1.msra.mxu0 %v3712
        %3714 = vmatprep.subr.mxu0 0.0
        %3715 = vmatpush1.msra.mxu0 0.0
        %3716 = vmatprep.subr.mxu0 0.0
        %3717 = vmatpush1.msra.mxu0 0.0
        %3718 = vmatprep.subr.mxu0 0.0
        %3719 = vmatpush1.msra.mxu0 0.0
        %3720 = vmatprep.subr.mxu0 0.0
        %3721 = vmatpush1.msra.mxu0 0.0
        %3722 = vmatprep.subr.mxu0 0.0
        %3723 = vmatpush1.msra.mxu0 0.0
        %3724 = vmatprep.subr.mxu0 0.0
        %3725 = vmatpush1.msra.mxu0 0.0
        %3726 = vmatprep.subr.mxu0 0.0
        %3727 = vmatpush1.msra.mxu0 0.0
        %3728 = vmatprep.subr.mxu0 0.0
        %3729 = vmatpush1.msra.mxu0 0.0
        %3730 = vmatprep.subr.mxu0 0.0
        %3731 = vmatpush1.msra.mxu0 0.0
        %3732 = vmatprep.subr.mxu0 0.0
        %3733 = vmatpush1.msra.mxu0 0.0
        %3734 = vmatprep.subr.mxu0 0.0
        %3735 = vmatpush1.msra.mxu0 0.0
        %3736 = vmatprep.subr.mxu0 0.0
        %3737 = vmatpush1.msra.mxu0 0.0
        %3738 = vmatprep.subr.mxu0 0.0
        %3739 = vmatpush1.msra.mxu0 0.0
        %3740 = vmatprep.subr.mxu0 0.0
        %3741 = vmatpush1.msra.mxu0 0.0
        %3742 = vmatprep.subr.mxu0 0.0
        %3743 = vmatpush1.msra.mxu0 0.0
        %3744 = vmatprep.subr.mxu0 0.0
        %3745 = vmatpush1.msra.mxu0 0.0
        %3746 = vmatprep.subr.mxu0 0.0
        %3747 = vmatpush1.msra.mxu0 0.0
        %3748 = vmatprep.subr.mxu0 0.0
        %3749 = vmatpush1.msra.mxu0 0.0
        %3750 = vmatprep.subr.mxu0 0.0
        %3751 = vmatpush1.msra.mxu0 0.0
        %3752 = vmatprep.subr.mxu0 0.0
        %3753 = vmatpush1.msra.mxu0 0.0
        %3754 = vmatprep.subr.mxu0 0.0
        %3755 = vmatpush1.msra.mxu0 0.0
        %3756 = vmatprep.subr.mxu0 0.0
        %3757 = vmatpush1.msra.mxu0 0.0
        %3758 = vmatprep.subr.mxu0 0.0
        %3759 = vmatpush1.msra.mxu0 0.0
        %3760 = vmatprep.subr.mxu0 0.0
        %3761 = vmatpush1.msra.mxu0 0.0
        %3762 = vmatprep.subr.mxu0 0.0
        %3763 = vmatpush1.msra.mxu0 0.0
        %3764 = vmatprep.subr.mxu0 0.0
        %3765 = vmatpush1.msra.mxu0 0.0
        %3766 = vmatprep.subr.mxu0 0.0
        %3767 = vmatpush1.msra.mxu0 0.0
        %3768 = vmatprep.subr.mxu0 0.0
        %3769 = vmatpush1.msra.mxu0 0.0
        %3770 = vmatprep.subr.mxu0 0.0
        %3771 = vmatpush1.msra.mxu0 0.0
        %3772 = vmatprep.subr.mxu0 0.0
        %3773 = vmatpush1.msra.mxu0 0.0
        %3774 = vmatprep.mubr.f32.mxu0 0.0
        %v3775 = vand.u32 %v3280, 4294901760
        %3776 = vmatmul.mubr.f32.gmra.mrb[0].mxu0 %v3775
        %v3777 = vpop.f32.mrb[0].mxu0
        %v3778 = vadd.f32 %v3699, %v3777
        %v3779 = vpop.f32.mrb[0].mxu0
        %3780 = vmatprep.mubr.f32.mxu0 0.0
        %v3781 = vand.u32 %v3283, 4294901760
        %3782 = vmatmul.mubr.f32.gmra.mrb[0].mxu0 %v3781
        %v3783 = vpop.f32.mrb[0].mxu0
        %v3784 = vadd.f32 %v3705, %v3783
        %v3785 = vpop.f32.mrb[0].mxu0
        %3786 = vdwg.mxu0
        %3787 = vmatprep.subr.mxu0 0.0
        %v3788 = vand.u32 %v3778, 4294901760
        %3789 = vmatpush1.msra.mxu0 %v3788
        %3790 = vmatprep.subr.mxu0 0.0
        %v3791 = vand.u32 %v3784, 4294901760
        %3792 = vmatpush1.msra.mxu0 %v3791
        %3793 = vmatprep.subr.mxu0 0.0
        %3794 = vmatpush1.msra.mxu0 0.0
        %3795 = vmatprep.subr.mxu0 0.0
        %3796 = vmatpush1.msra.mxu0 0.0
        %3797 = vmatprep.subr.mxu0 0.0
        %3798 = vmatpush1.msra.mxu0 0.0
        %3799 = vmatprep.subr.mxu0 0.0
        %3800 = vmatpush1.msra.mxu0 0.0
        %3801 = vmatprep.subr.mxu0 0.0
        %3802 = vmatpush1.msra.mxu0 0.0
        %3803 = vmatprep.subr.mxu0 0.0
        %3804 = vmatpush1.msra.mxu0 0.0
        %3805 = vmatprep.subr.mxu0 0.0
        %3806 = vmatpush1.msra.mxu0 0.0
        %3807 = vmatprep.subr.mxu0 0.0
        %3808 = vmatpush1.msra.mxu0 0.0
        %3809 = vmatprep.subr.mxu0 0.0
        %3810 = vmatpush1.msra.mxu0 0.0
        %3811 = vmatprep.subr.mxu0 0.0
        %3812 = vmatpush1.msra.mxu0 0.0
        %3813 = vmatprep.subr.mxu0 0.0
        %3814 = vmatpush1.msra.mxu0 0.0
        %3815 = vmatprep.subr.mxu0 0.0
        %3816 = vmatpush1.msra.mxu0 0.0
        %3817 = vmatprep.subr.mxu0 0.0
        %3818 = vmatpush1.msra.mxu0 0.0
        %3819 = vmatprep.subr.mxu0 0.0
        %3820 = vmatpush1.msra.mxu0 0.0
        %3821 = vmatprep.subr.mxu0 0.0
        %3822 = vmatpush1.msra.mxu0 0.0
        %3823 = vmatprep.subr.mxu0 0.0
        %3824 = vmatpush1.msra.mxu0 0.0
        %3825 = vmatprep.subr.mxu0 0.0
        %3826 = vmatpush1.msra.mxu0 0.0
        %3827 = vmatprep.subr.mxu0 0.0
        %3828 = vmatpush1.msra.mxu0 0.0
        %3829 = vmatprep.subr.mxu0 0.0
        %3830 = vmatpush1.msra.mxu0 0.0
        %3831 = vmatprep.subr.mxu0 0.0
        %3832 = vmatpush1.msra.mxu0 0.0
        %3833 = vmatprep.subr.mxu0 0.0
        %3834 = vmatpush1.msra.mxu0 0.0
        %3835 = vmatprep.subr.mxu0 0.0
        %3836 = vmatpush1.msra.mxu0 0.0
        %3837 = vmatprep.subr.mxu0 0.0
        %3838 = vmatpush1.msra.mxu0 0.0
        %3839 = vmatprep.subr.mxu0 0.0
        %3840 = vmatpush1.msra.mxu0 0.0
        %3841 = vmatprep.subr.mxu0 0.0
        %3842 = vmatpush1.msra.mxu0 0.0
        %3843 = vmatprep.subr.mxu0 0.0
        %3844 = vmatpush1.msra.mxu0 0.0
        %3845 = vmatprep.subr.mxu0 0.0
        %3846 = vmatpush1.msra.mxu0 0.0
        %3847 = vmatprep.subr.mxu0 0.0
        %3848 = vmatpush1.msra.mxu0 0.0
        %3849 = vmatprep.subr.mxu0 0.0
        %3850 = vmatpush1.msra.mxu0 0.0
        %3851 = vmatprep.subr.mxu0 0.0
        %3852 = vmatpush1.msra.mxu0 0.0
        %3853 = vmatprep.mubr.f32.mxu0 0.0
        %v3854 = vand.u32 %v735, 4294901760
        %v3855 = vsub.f32 %v735, %v3854
        %v3856 = vand.u32 %v3855, 4294901760
        %v3857 = vsub.f32 %v3855, %v3856
        %v3858 = vand.u32 %v3857, 4294901760
        %3859 = vmatmul.mubr.f32.gmra.mrb[0].mxu0 %v3858
        %v3860 = vpop.f32.mrb[0].mxu0
        %v3861 = vadd.f32 0.0, %v3860
        %v3862 = vpop.f32.mrb[0].mxu0
        %3863 = vmatprep.mubr.f32.mxu0 0.0
        %v3864 = vand.u32 %v738, 4294901760
        %v3865 = vsub.f32 %v738, %v3864
        %v3866 = vand.u32 %v3865, 4294901760
        %v3867 = vsub.f32 %v3865, %v3866
        %v3868 = vand.u32 %v3867, 4294901760
        %3869 = vmatmul.mubr.f32.gmra.mrb[0].mxu0 %v3868
        %v3870 = vpop.f32.mrb[0].mxu0
        %v3871 = vadd.f32 0.0, %v3870
        %v3872 = vpop.f32.mrb[0].mxu0
        %3873 = vdwg.mxu0
        %3874 = vmatprep.subr.mxu0 0.0
        %v3875 = vand.u32 %v3778, 4294901760
        %v3876 = vsub.f32 %v3778, %v3875
        %v3877 = vand.u32 %v3876, 4294901760
        %v3878 = vsub.f32 %v3876, %v3877
        %v3879 = vand.u32 %v3878, 4294901760
        %3880 = vmatpush1.msra.mxu0 %v3879
        %3881 = vmatprep.subr.mxu0 0.0
        %v3882 = vand.u32 %v3784, 4294901760
        %v3883 = vsub.f32 %v3784, %v3882
        %v3884 = vand.u32 %v3883, 4294901760
        %v3885 = vsub.f32 %v3883, %v3884
        %v3886 = vand.u32 %v3885, 4294901760
        %3887 = vmatpush1.msra.mxu0 %v3886
        %3888 = vmatprep.subr.mxu0 0.0
        %3889 = vmatpush1.msra.mxu0 0.0
        %3890 = vmatprep.subr.mxu0 0.0
        %3891 = vmatpush1.msra.mxu0 0.0
        %3892 = vmatprep.subr.mxu0 0.0
        %3893 = vmatpush1.msra.mxu0 0.0
        %3894 = vmatprep.subr.mxu0 0.0
        %3895 = vmatpush1.msra.mxu0 0.0
        %3896 = vmatprep.subr.mxu0 0.0
        %3897 = vmatpush1.msra.mxu0 0.0
        %3898 = vmatprep.subr.mxu0 0.0
        %3899 = vmatpush1.msra.mxu0 0.0
        %3900 = vmatprep.subr.mxu0 0.0
        %3901 = vmatpush1.msra.mxu0 0.0
        %3902 = vmatprep.subr.mxu0 0.0
        %3903 = vmatpush1.msra.mxu0 0.0
        %3904 = vmatprep.subr.mxu0 0.0
        %3905 = vmatpush1.msra.mxu0 0.0
        %3906 = vmatprep.subr.mxu0 0.0
        %3907 = vmatpush1.msra.mxu0 0.0
        %3908 = vmatprep.subr.mxu0 0.0
        %3909 = vmatpush1.msra.mxu0 0.0
        %3910 = vmatprep.subr.mxu0 0.0
        %3911 = vmatpush1.msra.mxu0 0.0
        %3912 = vmatprep.subr.mxu0 0.0
        %3913 = vmatpush1.msra.mxu0 0.0
        %3914 = vmatprep.subr.mxu0 0.0
        %3915 = vmatpush1.msra.mxu0 0.0
        %3916 = vmatprep.subr.mxu0 0.0
        %3917 = vmatpush1.msra.mxu0 0.0
        %3918 = vmatprep.subr.mxu0 0.0
        %3919 = vmatpush1.msra.mxu0 0.0
        %3920 = vmatprep.subr.mxu0 0.0
        %3921 = vmatpush1.msra.mxu0 0.0
        %3922 = vmatprep.subr.mxu0 0.0
        %3923 = vmatpush1.msra.mxu0 0.0
        %3924 = vmatprep.subr.mxu0 0.0
        %3925 = vmatpush1.msra.mxu0 0.0
        %3926 = vmatprep.subr.mxu0 0.0
        %3927 = vmatpush1.msra.mxu0 0.0
        %3928 = vmatprep.subr.mxu0 0.0
        %3929 = vmatpush1.msra.mxu0 0.0
        %3930 = vmatprep.subr.mxu0 0.0
        %3931 = vmatpush1.msra.mxu0 0.0
        %3932 = vmatprep.subr.mxu0 0.0
        %3933 = vmatpush1.msra.mxu0 0.0
        %3934 = vmatprep.subr.mxu0 0.0
        %3935 = vmatpush1.msra.mxu0 0.0
        %3936 = vmatprep.subr.mxu0 0.0
        %3937 = vmatpush1.msra.mxu0 0.0
        %3938 = vmatprep.subr.mxu0 0.0
        %3939 = vmatpush1.msra.mxu0 0.0
        %3940 = vmatprep.subr.mxu0 0.0
        %3941 = vmatpush1.msra.mxu0 0.0
        %3942 = vmatprep.subr.mxu0 0.0
        %3943 = vmatpush1.msra.mxu0 0.0
        %3944 = vmatprep.subr.mxu0 0.0
        %3945 = vmatpush1.msra.mxu0 0.0
        %3946 = vmatprep.subr.mxu0 0.0
        %3947 = vmatpush1.msra.mxu0 0.0
        %3948 = vmatprep.mubr.f32.mxu0 0.0
        %v3949 = vand.u32 %v735, 4294901760
        %3950 = vmatmul.mubr.f32.gmra.mrb[0].mxu0 %v3949
        %v3951 = vpop.f32.mrb[0].mxu0
        %v3952 = vadd.f32 %v3861, %v3951
        %v3953 = vpop.f32.mrb[0].mxu0
        %3954 = vmatprep.mubr.f32.mxu0 0.0
        %v3955 = vand.u32 %v738, 4294901760
        %3956 = vmatmul.mubr.f32.gmra.mrb[0].mxu0 %v3955
        %v3957 = vpop.f32.mrb[0].mxu0
        %v3958 = vadd.f32 %v3871, %v3957
        %v3959 = vpop.f32.mrb[0].mxu0
        %3960 = vdwg.mxu0
        %3961 = vmatprep.subr.mxu0 0.0
        %v3962 = vand.u32 %v3778, 4294901760
        %v3963 = vsub.f32 %v3778, %v3962
        %3964 = vmatpush1.msra.mxu0 %v3963
        %3965 = vmatprep.subr.mxu0 0.0
        %v3966 = vand.u32 %v3784, 4294901760
        %v3967 = vsub.f32 %v3784, %v3966
        %3968 = vmatpush1.msra.mxu0 %v3967
        %3969 = vmatprep.subr.mxu0 0.0
        %3970 = vmatpush1.msra.mxu0 0.0
        %3971 = vmatprep.subr.mxu0 0.0
        %3972 = vmatpush1.msra.mxu0 0.0
        %3973 = vmatprep.subr.mxu0 0.0
        %3974 = vmatpush1.msra.mxu0 0.0
        %3975 = vmatprep.subr.mxu0 0.0
        %3976 = vmatpush1.msra.mxu0 0.0
        %3977 = vmatprep.subr.mxu0 0.0
        %3978 = vmatpush1.msra.mxu0 0.0
        %3979 = vmatprep.subr.mxu0 0.0
        %3980 = vmatpush1.msra.mxu0 0.0
        %3981 = vmatprep.subr.mxu0 0.0
        %3982 = vmatpush1.msra.mxu0 0.0
        %3983 = vmatprep.subr.mxu0 0.0
        %3984 = vmatpush1.msra.mxu0 0.0
        %3985 = vmatprep.subr.mxu0 0.0
        %3986 = vmatpush1.msra.mxu0 0.0
        %3987 = vmatprep.subr.mxu0 0.0
        %3988 = vmatpush1.msra.mxu0 0.0
        %3989 = vmatprep.subr.mxu0 0.0
        %3990 = vmatpush1.msra.mxu0 0.0
        %3991 = vmatprep.subr.mxu0 0.0
        %3992 = vmatpush1.msra.mxu0 0.0
        %3993 = vmatprep.subr.mxu0 0.0
        %3994 = vmatpush1.msra.mxu0 0.0
        %3995 = vmatprep.subr.mxu0 0.0
        %3996 = vmatpush1.msra.mxu0 0.0
        %3997 = vmatprep.subr.mxu0 0.0
        %3998 = vmatpush1.msra.mxu0 0.0
        %3999 = vmatprep.subr.mxu0 0.0
        %4000 = vmatpush1.msra.mxu0 0.0
        %4001 = vmatprep.subr.mxu0 0.0
        %4002 = vmatpush1.msra.mxu0 0.0
        %4003 = vmatprep.subr.mxu0 0.0
        %4004 = vmatpush1.msra.mxu0 0.0
        %4005 = vmatprep.subr.mxu0 0.0
        %4006 = vmatpush1.msra.mxu0 0.0
        %4007 = vmatprep.subr.mxu0 0.0
        %4008 = vmatpush1.msra.mxu0 0.0
        %4009 = vmatprep.subr.mxu0 0.0
        %4010 = vmatpush1.msra.mxu0 0.0
        %4011 = vmatprep.subr.mxu0 0.0
        %4012 = vmatpush1.msra.mxu0 0.0
        %4013 = vmatprep.subr.mxu0 0.0
        %4014 = vmatpush1.msra.mxu0 0.0
        %4015 = vmatprep.subr.mxu0 0.0
        %4016 = vmatpush1.msra.mxu0 0.0
        %4017 = vmatprep.subr.mxu0 0.0
        %4018 = vmatpush1.msra.mxu0 0.0
        %4019 = vmatprep.subr.mxu0 0.0
        %4020 = vmatpush1.msra.mxu0 0.0
        %4021 = vmatprep.subr.mxu0 0.0
        %4022 = vmatpush1.msra.mxu0 0.0
        %4023 = vmatprep.subr.mxu0 0.0
        %4024 = vmatpush1.msra.mxu0 0.0
        %4025 = vmatprep.subr.mxu0 0.0
        %4026 = vmatpush1.msra.mxu0 0.0
        %4027 = vmatprep.subr.mxu0 0.0
        %4028 = vmatpush1.msra.mxu0 0.0
        %4029 = vmatprep.mubr.f32.mxu0 0.0
        %v4030 = vand.u32 %v735, 4294901760
        %v4031 = vsub.f32 %v735, %v4030
        %4032 = vmatmul.mubr.f32.gmra.mrb[0].mxu0 %v4031
        %v4033 = vpop.f32.mrb[0].mxu0
        %v4034 = vadd.f32 %v3952, %v4033
        %v4035 = vpop.f32.mrb[0].mxu0
        %4036 = vmatprep.mubr.f32.mxu0 0.0
        %v4037 = vand.u32 %v738, 4294901760
        %v4038 = vsub.f32 %v738, %v4037
        %4039 = vmatmul.mubr.f32.gmra.mrb[0].mxu0 %v4038
        %v4040 = vpop.f32.mrb[0].mxu0
        %v4041 = vadd.f32 %v3958, %v4040
        %v4042 = vpop.f32.mrb[0].mxu0
        %4043 = vdwg.mxu0
        %4044 = vmatprep.subr.mxu0 0.0
        %v4045 = vand.u32 %v3778, 4294901760
        %4046 = vmatpush1.msra.mxu0 %v4045
        %4047 = vmatprep.subr.mxu0 0.0
        %v4048 = vand.u32 %v3784, 4294901760
        %4049 = vmatpush1.msra.mxu0 %v4048
        %4050 = vmatprep.subr.mxu0 0.0
        %4051 = vmatpush1.msra.mxu0 0.0
        %4052 = vmatprep.subr.mxu0 0.0
        %4053 = vmatpush1.msra.mxu0 0.0
        %4054 = vmatprep.subr.mxu0 0.0
        %4055 = vmatpush1.msra.mxu0 0.0
        %4056 = vmatprep.subr.mxu0 0.0
        %4057 = vmatpush1.msra.mxu0 0.0
        %4058 = vmatprep.subr.mxu0 0.0
        %4059 = vmatpush1.msra.mxu0 0.0
        %4060 = vmatprep.subr.mxu0 0.0
        %4061 = vmatpush1.msra.mxu0 0.0
        %4062 = vmatprep.subr.mxu0 0.0
        %4063 = vmatpush1.msra.mxu0 0.0
        %4064 = vmatprep.subr.mxu0 0.0
        %4065 = vmatpush1.msra.mxu0 0.0
        %4066 = vmatprep.subr.mxu0 0.0
        %4067 = vmatpush1.msra.mxu0 0.0
        %4068 = vmatprep.subr.mxu0 0.0
        %4069 = vmatpush1.msra.mxu0 0.0
        %4070 = vmatprep.subr.mxu0 0.0
        %4071 = vmatpush1.msra.mxu0 0.0
        %4072 = vmatprep.subr.mxu0 0.0
        %4073 = vmatpush1.msra.mxu0 0.0
        %4074 = vmatprep.subr.mxu0 0.0
        %4075 = vmatpush1.msra.mxu0 0.0
        %4076 = vmatprep.subr.mxu0 0.0
        %4077 = vmatpush1.msra.mxu0 0.0
        %4078 = vmatprep.subr.mxu0 0.0
        %4079 = vmatpush1.msra.mxu0 0.0
        %4080 = vmatprep.subr.mxu0 0.0
        %4081 = vmatpush1.msra.mxu0 0.0
        %4082 = vmatprep.subr.mxu0 0.0
        %4083 = vmatpush1.msra.mxu0 0.0
        %4084 = vmatprep.subr.mxu0 0.0
        %4085 = vmatpush1.msra.mxu0 0.0
        %4086 = vmatprep.subr.mxu0 0.0
        %4087 = vmatpush1.msra.mxu0 0.0
        %4088 = vmatprep.subr.mxu0 0.0
        %4089 = vmatpush1.msra.mxu0 0.0
        %4090 = vmatprep.subr.mxu0 0.0
        %4091 = vmatpush1.msra.mxu0 0.0
        %4092 = vmatprep.subr.mxu0 0.0
        %4093 = vmatpush1.msra.mxu0 0.0
        %4094 = vmatprep.subr.mxu0 0.0
        %4095 = vmatpush1.msra.mxu0 0.0
        %4096 = vmatprep.subr.mxu0 0.0
        %4097 = vmatpush1.msra.mxu0 0.0
        %4098 = vmatprep.subr.mxu0 0.0
        %4099 = vmatpush1.msra.mxu0 0.0
        %4100 = vmatprep.subr.mxu0 0.0
        %4101 = vmatpush1.msra.mxu0 0.0
        %4102 = vmatprep.subr.mxu0 0.0
        %4103 = vmatpush1.msra.mxu0 0.0
        %4104 = vmatprep.subr.mxu0 0.0
        %4105 = vmatpush1.msra.mxu0 0.0
        %4106 = vmatprep.subr.mxu0 0.0
        %4107 = vmatpush1.msra.mxu0 0.0
        %4108 = vmatprep.subr.mxu0 0.0
        %4109 = vmatpush1.msra.mxu0 0.0
        %4110 = vmatprep.mubr.f32.mxu0 0.0
        %v4111 = vand.u32 %v735, 4294901760
        %v4112 = vsub.f32 %v735, %v4111
        %v4113 = vand.u32 %v4112, 4294901760
        %4114 = vmatmul.mubr.f32.gmra.mrb[0].mxu0 %v4113
        %v4115 = vpop.f32.mrb[0].mxu0
        %v4116 = vadd.f32 %v4034, %v4115
        %v4117 = vpop.f32.mrb[0].mxu0
        %4118 = vmatprep.mubr.f32.mxu0 0.0
        %v4119 = vand.u32 %v738, 4294901760
        %v4120 = vsub.f32 %v738, %v4119
        %v4121 = vand.u32 %v4120, 4294901760
        %4122 = vmatmul.mubr.f32.gmra.mrb[0].mxu0 %v4121
        %v4123 = vpop.f32.mrb[0].mxu0
        %v4124 = vadd.f32 %v4041, %v4123
        %v4125 = vpop.f32.mrb[0].mxu0
        %4126 = vdwg.mxu0
        %4127 = vmatprep.subr.mxu0 0.0
        %v4128 = vand.u32 %v3778, 4294901760
        %v4129 = vsub.f32 %v3778, %v4128
        %v4130 = vand.u32 %v4129, 4294901760
        %4131 = vmatpush1.msra.mxu0 %v4130
        %4132 = vmatprep.subr.mxu0 0.0
        %v4133 = vand.u32 %v3784, 4294901760
        %v4134 = vsub.f32 %v3784, %v4133
        %v4135 = vand.u32 %v4134, 4294901760
        %4136 = vmatpush1.msra.mxu0 %v4135
        %4137 = vmatprep.subr.mxu0 0.0
        %4138 = vmatpush1.msra.mxu0 0.0
        %4139 = vmatprep.subr.mxu0 0.0
        %4140 = vmatpush1.msra.mxu0 0.0
        %4141 = vmatprep.subr.mxu0 0.0
        %4142 = vmatpush1.msra.mxu0 0.0
        %4143 = vmatprep.subr.mxu0 0.0
        %4144 = vmatpush1.msra.mxu0 0.0
        %4145 = vmatprep.subr.mxu0 0.0
        %4146 = vmatpush1.msra.mxu0 0.0
        %4147 = vmatprep.subr.mxu0 0.0
        %4148 = vmatpush1.msra.mxu0 0.0
        %4149 = vmatprep.subr.mxu0 0.0
        %4150 = vmatpush1.msra.mxu0 0.0
        %4151 = vmatprep.subr.mxu0 0.0
        %4152 = vmatpush1.msra.mxu0 0.0
        %4153 = vmatprep.subr.mxu0 0.0
        %4154 = vmatpush1.msra.mxu0 0.0
        %4155 = vmatprep.subr.mxu0 0.0
        %4156 = vmatpush1.msra.mxu0 0.0
        %4157 = vmatprep.subr.mxu0 0.0
        %4158 = vmatpush1.msra.mxu0 0.0
        %4159 = vmatprep.subr.mxu0 0.0
        %4160 = vmatpush1.msra.mxu0 0.0
        %4161 = vmatprep.subr.mxu0 0.0
        %4162 = vmatpush1.msra.mxu0 0.0
        %4163 = vmatprep.subr.mxu0 0.0
        %4164 = vmatpush1.msra.mxu0 0.0
        %4165 = vmatprep.subr.mxu0 0.0
        %4166 = vmatpush1.msra.mxu0 0.0
        %4167 = vmatprep.subr.mxu0 0.0
        %4168 = vmatpush1.msra.mxu0 0.0
        %4169 = vmatprep.subr.mxu0 0.0
        %4170 = vmatpush1.msra.mxu0 0.0
        %4171 = vmatprep.subr.mxu0 0.0
        %4172 = vmatpush1.msra.mxu0 0.0
        %4173 = vmatprep.subr.mxu0 0.0
        %4174 = vmatpush1.msra.mxu0 0.0
        %4175 = vmatprep.subr.mxu0 0.0
        %4176 = vmatpush1.msra.mxu0 0.0
        %4177 = vmatprep.subr.mxu0 0.0
        %4178 = vmatpush1.msra.mxu0 0.0
        %4179 = vmatprep.subr.mxu0 0.0
        %4180 = vmatpush1.msra.mxu0 0.0
        %4181 = vmatprep.subr.mxu0 0.0
        %4182 = vmatpush1.msra.mxu0 0.0
        %4183 = vmatprep.subr.mxu0 0.0
        %4184 = vmatpush1.msra.mxu0 0.0
        %4185 = vmatprep.subr.mxu0 0.0
        %4186 = vmatpush1.msra.mxu0 0.0
        %4187 = vmatprep.subr.mxu0 0.0
        %4188 = vmatpush1.msra.mxu0 0.0
        %4189 = vmatprep.subr.mxu0 0.0
        %4190 = vmatpush1.msra.mxu0 0.0
        %4191 = vmatprep.subr.mxu0 0.0
        %4192 = vmatpush1.msra.mxu0 0.0
        %4193 = vmatprep.subr.mxu0 0.0
        %4194 = vmatpush1.msra.mxu0 0.0
        %4195 = vmatprep.subr.mxu0 0.0
        %4196 = vmatpush1.msra.mxu0 0.0
        %4197 = vmatprep.mubr.f32.mxu0 0.0
        %v4198 = vand.u32 %v735, 4294901760
        %4199 = vmatmul.mubr.f32.gmra.mrb[0].mxu0 %v4198
        %v4200 = vpop.f32.mrb[0].mxu0
        %v4201 = vadd.f32 %v4116, %v4200
        %v4202 = vpop.f32.mrb[0].mxu0
        %4203 = vmatprep.mubr.f32.mxu0 0.0
        %v4204 = vand.u32 %v738, 4294901760
        %4205 = vmatmul.mubr.f32.gmra.mrb[0].mxu0 %v4204
        %v4206 = vpop.f32.mrb[0].mxu0
        %v4207 = vadd.f32 %v4124, %v4206
        %v4208 = vpop.f32.mrb[0].mxu0
        %4209 = vdwg.mxu0
        %4210 = vmatprep.subr.mxu0 0.0
        %v4211 = vand.u32 %v3778, 4294901760
        %4212 = vmatpush1.msra.mxu0 %v4211
        %4213 = vmatprep.subr.mxu0 0.0
        %v4214 = vand.u32 %v3784, 4294901760
        %4215 = vmatpush1.msra.mxu0 %v4214
        %4216 = vmatprep.subr.mxu0 0.0
        %4217 = vmatpush1.msra.mxu0 0.0
        %4218 = vmatprep.subr.mxu0 0.0
        %4219 = vmatpush1.msra.mxu0 0.0
        %4220 = vmatprep.subr.mxu0 0.0
        %4221 = vmatpush1.msra.mxu0 0.0
        %4222 = vmatprep.subr.mxu0 0.0
        %4223 = vmatpush1.msra.mxu0 0.0
        %4224 = vmatprep.subr.mxu0 0.0
        %4225 = vmatpush1.msra.mxu0 0.0
        %4226 = vmatprep.subr.mxu0 0.0
        %4227 = vmatpush1.msra.mxu0 0.0
        %4228 = vmatprep.subr.mxu0 0.0
        %4229 = vmatpush1.msra.mxu0 0.0
        %4230 = vmatprep.subr.mxu0 0.0
        %4231 = vmatpush1.msra.mxu0 0.0
        %4232 = vmatprep.subr.mxu0 0.0
        %4233 = vmatpush1.msra.mxu0 0.0
        %4234 = vmatprep.subr.mxu0 0.0
        %4235 = vmatpush1.msra.mxu0 0.0
        %4236 = vmatprep.subr.mxu0 0.0
        %4237 = vmatpush1.msra.mxu0 0.0
        %4238 = vmatprep.subr.mxu0 0.0
        %4239 = vmatpush1.msra.mxu0 0.0
        %4240 = vmatprep.subr.mxu0 0.0
        %4241 = vmatpush1.msra.mxu0 0.0
        %4242 = vmatprep.subr.mxu0 0.0
        %4243 = vmatpush1.msra.mxu0 0.0
        %4244 = vmatprep.subr.mxu0 0.0
        %4245 = vmatpush1.msra.mxu0 0.0
        %4246 = vmatprep.subr.mxu0 0.0
        %4247 = vmatpush1.msra.mxu0 0.0
        %4248 = vmatprep.subr.mxu0 0.0
        %4249 = vmatpush1.msra.mxu0 0.0
        %4250 = vmatprep.subr.mxu0 0.0
        %4251 = vmatpush1.msra.mxu0 0.0
        %4252 = vmatprep.subr.mxu0 0.0
        %4253 = vmatpush1.msra.mxu0 0.0
        %4254 = vmatprep.subr.mxu0 0.0
        %4255 = vmatpush1.msra.mxu0 0.0
        %4256 = vmatprep.subr.mxu0 0.0
        %4257 = vmatpush1.msra.mxu0 0.0
        %4258 = vmatprep.subr.mxu0 0.0
        %4259 = vmatpush1.msra.mxu0 0.0
        %4260 = vmatprep.subr.mxu0 0.0
        %4261 = vmatpush1.msra.mxu0 0.0
        %4262 = vmatprep.subr.mxu0 0.0
        %4263 = vmatpush1.msra.mxu0 0.0
        %4264 = vmatprep.subr.mxu0 0.0
        %4265 = vmatpush1.msra.mxu0 0.0
        %4266 = vmatprep.subr.mxu0 0.0
        %4267 = vmatpush1.msra.mxu0 0.0
        %4268 = vmatprep.subr.mxu0 0.0
        %4269 = vmatpush1.msra.mxu0 0.0
        %4270 = vmatprep.subr.mxu0 0.0
        %4271 = vmatpush1.msra.mxu0 0.0
        %4272 = vmatprep.subr.mxu0 0.0
        %4273 = vmatpush1.msra.mxu0 0.0
        %4274 = vmatprep.subr.mxu0 0.0
        %4275 = vmatpush1.msra.mxu0 0.0
        %4276 = vmatprep.mubr.f32.mxu0 0.0
        %v4277 = vand.u32 %v735, 4294901760
        %4278 = vmatmul.mubr.f32.gmra.mrb[0].mxu0 %v4277
        %v4279 = vpop.f32.mrb[0].mxu0
        %v4280 = vadd.f32 %v4201, %v4279
        %v4281 = vpop.f32.mrb[0].mxu0
        %4282 = vmatprep.mubr.f32.mxu0 0.0
        %v4283 = vand.u32 %v738, 4294901760
        %4284 = vmatmul.mubr.f32.gmra.mrb[0].mxu0 %v4283
        %v4285 = vpop.f32.mrb[0].mxu0
        %v4286 = vadd.f32 %v4207, %v4285
        %v4287 = vpop.f32.mrb[0].mxu0
        %4288 = vdwg.mxu0
        %s4289 = scalar_lea.vmem %s216, 48 [#allocation8]
        %4290 = vst.msk [vmem:[%s4289] sm:$0xff] %vm225, %v4280
        %4291 = vst.msk [vmem:[%s4289 + $0x8] sm:$0xff] %vm225, %v4286
        %s4292 = sand.u32 %s95, 1
        %s4293 = scalar_lea.sflag [#allocation4], %s4292
        %s4294 = sand.u32 %s95, 1
        %s4295 = smul.addr %s4294, 64
        %s4296 = scalar_lea.vmem [#allocation8], %s4295
        // Predicated region
        $region45: #{tpu_custom_call.1} parent=31 // pred_check
          %p4297 = pneg %p105
        $region46: #{tpu_custom_call.1} parent=31 // pred_check_branch
          %4299 = sbr.rel (%p4297) target = $region48
        $region47: #{tpu_custom_call.1} parent=31 // pred_region
          %s4300 = smul.u32 4, %s19
          %s4302 = ssub.s32 1024, 1024
          %4303 = vsyncadd %s4293, %s4302
          %s4304 = smul.addr %s4300, 2
          %s4305 = smul.addr %s4304, 128
          %s4306 = scalar_lea.hbm %s3, %s4305
          %s4307 = sshll.u32 %s4296, 4
          %s4308 = int_to_ptr.vmem [resolvable:$true] %s4307
          %4313 = dma.vmem_to_hbm [thread:$0]  %s4308, 1024, %s4306, %s4293, 128, 128, 8
        $region48: #{tpu_custom_call.1} parent=31 // pred_fallthru
          _
      $region32: #{tpu_custom_call.1} parent=5 // pred_fallthru
        _
      %p4314 = scmp.le.s32.totalorder 2, %s14
      // Predicated region
      $region49: #{tpu_custom_call.1} parent=5 // pred_check
        %p4315 = pneg %p4314
      $region50: #{tpu_custom_call.1} parent=5 // pred_check_branch
        %4317 = sbr.rel (%p4315) target = $region52
      $region51: #{tpu_custom_call.1} parent=5 // pred_region
        %s4318 = ssub.s32 %s14, 2
        // Predicated region
        $region53: #{tpu_custom_call.1} parent=51 // pred_check
          %p4319 = pneg %p111
        $region54: #{tpu_custom_call.1} parent=51 // pred_check_branch
          %4321 = sbr.rel (%p4319) target = $region56
        $region55: #{tpu_custom_call.1} parent=51 // pred_region
          %s4322 = sand.u32 %s96, 1
          %s4323 = scalar_lea.sflag [#allocation4], %s4322
          %s4324 = sand.u32 %s96, 1
          %s4325 = smul.addr %s4324, 64
          %s4326 = scalar_lea.vmem [#allocation8], %s4325
          %4327 = dma.done %s4323, 1024
        $region56: #{tpu_custom_call.1} parent=51 // pred_fallthru
          _
      $region52: #{tpu_custom_call.1} parent=5 // pred_fallthru
        _
    $region6: #{tpu_custom_call.1} parent=1 // loop_footer
      %s18 = sadd.s32 1, %s14
    $region7: #{tpu_custom_call.1} parent=1 // loop_footer_branch
      %13 = sbr.rel target = $region3
    $region8: #{tpu_custom_call.1} parent=1 // loop_exit
      _
    %4328 = vsyncpa [#allocation3], 1
    %s4329 = scalar_lea.sflag [#allocation3], 1
    %4330 = vsyncpa %s4329, 1
    %4331 = vsyncpa [#allocation6], 1
    %4332 = vsyncpa [#allocation4], 1
    %s4333 = scalar_lea.sflag [#allocation4], 1
    %4334 = vsyncpa %s4333, 1

</llo_original>
